<compile_context>
chip_gen: v7x
topology: tpu7x:2x2x1
jax: 0.10.0
libtpu: 0.0.40
codegen_flags: <defaults>
</compile_context>

<pallas_src>
import jax
import jax.numpy as jnp
from jax.experimental import pallas as pl
from jax.experimental.pallas import tpu as pltpu

IN_FEATURES = 28 * 28 * 32   # 25088 = 196 * 128, fixed by the module definition
HIDDEN = 128
NUM_SPLITS = 2               # hidden-column groups; maps to v7x's 2 TensorCores
BLOCK_K = 12544              # 98 * 128; 2 K-steps per core


def encoder_kernel(x_ref, w1_ref, b1_ref, w2_ref, o_ref, acc_ref):
    """Per (core-split c, K-step k): accumulate x @ W1[:, cols_c] over K, then
    fuse fc1 bias + tanh + this core's slice of fc2 on the last K step."""
    k = pl.program_id(1)

    @pl.when(k == 0)
    def _():
        acc_ref[...] = jnp.zeros_like(acc_ref)

    # Hot path: (B, block_k) @ (block_k, HIDDEN/num_splits) on the MXU,
    # accumulated in an f32 VMEM scratch (inputs may be bf16).
    acc_ref[...] += jnp.dot(x_ref[...], w1_ref[...],
                            preferred_element_type=jnp.float32)

    @pl.when(k == pl.num_programs(1) - 1)
    def _():
        # fc1 bias + (dropout == identity) + tanh for this core's hidden cols.
        h = jnp.tanh(acc_ref[...] + b1_ref[...])
        # Partial fc2: h_c @ W2[rows_c, :]  (bias b2 + final tanh in wrapper,
        # after summing the per-core partials -- the only cross-core term).
        o_ref[...] = jnp.dot(h.astype(w2_ref.dtype), w2_ref[...],
                             preferred_element_type=jnp.float32
                             ).astype(o_ref.dtype)


def prepare_params(w1, b1, w2, b2, *, num_splits=NUM_SPLITS,
                   compute_dtype=jnp.bfloat16):
    """Re-layout params once for the kernel.

    w1: (K, H)   -> (num_splits, K, H/num_splits)   [column groups]
    b1: (1, H)   -> (num_splits, 1, H/num_splits)
    w2: (H, L)   -> (num_splits, H/num_splits, L)   [row groups]
    b2: (1, L)   -> (1, L)                          (applied in the wrapper)
    Streamed tensors (w1, w2) are cast to `compute_dtype` (bf16 halves the
    HBM bytes of the memory-bound W1 stream); biases stay f32.
    """
    K, H = w1.shape
    L = w2.shape[-1]
    assert H % num_splits == 0
    Hc = H // num_splits
    w1p = jnp.transpose(w1.reshape(K, num_splits, Hc), (1, 0, 2)).astype(compute_dtype)
    b1p = b1.reshape(num_splits, 1, Hc).astype(jnp.float32)
    w2p = w2.reshape(num_splits, Hc, L).astype(compute_dtype)
    b2p = b2.reshape(1, L).astype(jnp.float32)
    return w1p, b1p, w2p, b2p


def encoder_forward(x, params, *, block_k=BLOCK_K):
    w1, b1, w2, b2 = params              # pre-laid-out (see prepare_params)
    nc, K, Hc = w1.shape
    L = w2.shape[-1]
    B = x.shape[0]
    assert x.shape[1] == K == IN_FEATURES
    assert K % block_k == 0 and block_k % 128 == 0

    # Pad batch to a multiple of 8 sublanes (full-dim block => clean layout).
    B_pad = max(8, ((B + 7) // 8) * 8)
    if B_pad != B:
        x = jnp.pad(x, ((0, B_pad - B), (0, 0)))
    x = x.astype(w1.dtype)

    grid = (nc, K // block_k)            # ("parallel" core split, K reduction)

    H = nc * Hc
    itemsize = jnp.dtype(w1.dtype).itemsize
    cost = pl.CostEstimate(
        flops=2 * B_pad * K * H + 2 * B_pad * H * L,
        transcendentals=B_pad * (H + L),
        bytes_accessed=int(K * H * itemsize            # W1 stream (dominant)
                           + nc * B_pad * K * itemsize  # x (read once per core)
                           + H * L * itemsize + H * 4 + L * 4
                           + nc * B_pad * L * 4),
    )

    partial = pl.pallas_call(
        encoder_kernel,
        out_shape=jax.ShapeDtypeStruct((nc, B_pad, L), jnp.float32),
        grid_spec=pltpu.PrefetchScalarGridSpec(
            num_scalar_prefetch=0,
            grid=grid,
            in_specs=[
                pl.BlockSpec((B_pad, block_k), lambda c, k: (0, k)),     # x tile
                pl.BlockSpec((None, block_k, Hc), lambda c, k: (c, k, 0)),  # W1
                pl.BlockSpec((None, 1, Hc), lambda c, k: (c, 0, 0)),        # b1
                pl.BlockSpec((None, Hc, L), lambda c, k: (c, 0, 0)),        # W2
            ],
            out_specs=pl.BlockSpec((None, B_pad, L), lambda c, k: (c, 0, 0)),
            scratch_shapes=[pltpu.VMEM((B_pad, Hc), jnp.float32)],
        ),
        compiler_params=pltpu.CompilerParams(
            dimension_semantics=("parallel", "arbitrary"),
            vmem_limit_bytes=32 * 1024 * 1024,
        ),
        cost_estimate=cost,
    )(x, w1, b1, w2)

    # Tiny cross-core combine: sum of (nc, B, L) partials + b2 + tanh.
    out = jnp.tanh(jnp.sum(partial, axis=0) + b2)
    return out[:B]


def init_params(key, latent_size):
    """Deterministic init mimicking nn.Linear's uniform(-1/sqrt(fan_in), +)."""
    k1, k2, k3, k4 = jax.random.split(key, 4)
    bound1 = 1.0 / jnp.sqrt(IN_FEATURES)
    bound2 = 1.0 / jnp.sqrt(HIDDEN)
    w1 = jax.random.uniform(k1, (IN_FEATURES, HIDDEN), jnp.float32, -bound1, bound1)
    b1 = jax.random.uniform(k2, (1, HIDDEN), jnp.float32, -bound1, bound1)
    w2 = jax.random.uniform(k3, (HIDDEN, latent_size), jnp.float32, -bound2, bound2)
    b2 = jax.random.uniform(k4, (1, latent_size), jnp.float32, -bound2, bound2)
    return w1, b1, w2, b2


def reference_forward(x, w1, b1, w2, b2, compute_dtype=jnp.float32):
    """Pure-JAX reference (eval-mode dropout = identity), modelling the same
    compute dtype as the kernel path (f32 accumulation either way)."""
    f32 = jnp.float32
    xc = x.astype(compute_dtype).astype(f32)
    w1c = w1.astype(compute_dtype).astype(f32)
    w2c = w2.astype(compute_dtype).astype(f32)
    h = jnp.tanh(jnp.dot(xc, w1c) + b1.reshape(1, -1))
    h = h.astype(compute_dtype).astype(f32)
    return jnp.tanh(jnp.dot(h, w2c) + b2.reshape(1, -1))


if __name__ == "__main__":
    latent_size = 16
    batch = 2

    key = jax.random.PRNGKey(0)
    kx, kp = jax.random.split(key)
    x = jax.random.normal(kx, (batch, IN_FEATURES), jnp.float32)
    w1, b1, w2, b2 = init_params(kp, latent_size)

    # --- f32 validation path (matches the torch/f32 module numerics) ---
    params_f32 = prepare_params(w1, b1, w2, b2, compute_dtype=jnp.float32)
    out_f32 = jax.block_until_ready(encoder_forward(x, params_f32))
    ref_f32 = reference_forward(x, w1, b1, w2, b2, jnp.float32)
    assert out_f32.shape == (batch, latent_size)
    assert jnp.allclose(out_f32, ref_f32, atol=2e-5, rtol=2e-5), (
        float(jnp.max(jnp.abs(out_f32 - ref_f32))))

    # --- bf16 performance path (halved HBM bytes, f32 MXU accumulation) ---
    params_bf16 = prepare_params(w1, b1, w2, b2, compute_dtype=jnp.bfloat16)
    out_bf16 = jax.block_until_ready(encoder_forward(x, params_bf16))
    ref_bf16 = reference_forward(x, w1, b1, w2, b2, jnp.bfloat16)
    assert out_bf16.shape == (batch, latent_size)
    assert jnp.allclose(out_bf16, ref_bf16, atol=2e-3, rtol=2e-3), (
        float(jnp.max(jnp.abs(out_bf16 - ref_bf16))))

    print("KERNEL_OK")
</pallas_src>

<mosaic_0001>
module attributes {stable_mosaic.version = 11 : i64} {
  func.func @encoder_kernel(%arg0: i32, %arg1: i32, %arg2: memref<8x12544xf32, #tpu.memory_space<vmem>>, %arg3: memref<1x12544x64xf32, #tpu.memory_space<vmem>>, %arg4: memref<1x1x64xf32, #tpu.memory_space<vmem>>, %arg5: memref<1x64x16xf32, #tpu.memory_space<vmem>>, %arg6: memref<1x8x16xf32, #tpu.memory_space<vmem>>, %arg7: memref<8x64xf32, #tpu.memory_space<vmem>>) attributes {dimension_semantics = [#tpu.dimension_semantics<parallel>, #tpu.dimension_semantics<arbitrary>], iteration_bounds = array<i64: 2, 2>, scalar_prefetch = 0 : i64, scratch_operands = 1 : i64, tpu.core_type = #tpu.core_type<tc>, window_params = [{transform_indices = @transform_0, window_bounds = array<i64: 8, 12544>}, {transform_indices = @transform_1, window_bounds = array<i64: 1, 12544, 64>}, {transform_indices = @transform_2, window_bounds = array<i64: 1, 1, 64>}, {transform_indices = @transform_3, window_bounds = array<i64: 1, 64, 16>}, {transform_indices = @transform_4, window_bounds = array<i64: 1, 8, 16>}]} {
    %c0_i32 = arith.constant 0 : i32
    %0 = arith.cmpi eq, %arg1, %c0_i32 : i32
    %1 = arith.extui %0 : i1 to i32
    %c0_i32_0 = arith.constant 0 : i32
    %2 = arith.cmpi ne, %1, %c0_i32_0 : i32
    scf.if %2 {
      %cst_10 = arith.constant 0.000000e+00 : f32
      %13 = vector.broadcast %cst_10 : f32 to vector<8x64xf32>
      %c0_11 = arith.constant 0 : index
      %c0_12 = arith.constant 0 : index
      %14 = vector.load %arg7[%c0_11, %c0_12] : memref<8x64xf32, #tpu.memory_space<vmem>>, vector<8x64xf32>
      tpu.vector_store %arg7[%c0_11, %c0_12], %13 {strides = array<i32>} : memref<8x64xf32, #tpu.memory_space<vmem>>, vector<8x64xf32>,
    } else {
    }
    %c0 = arith.constant 0 : index
    %c0_1 = arith.constant 0 : index
    %3 = vector.load %arg7[%c0, %c0_1] : memref<8x64xf32, #tpu.memory_space<vmem>>, vector<8x64xf32>
    %c0_2 = arith.constant 0 : index
    %c0_3 = arith.constant 0 : index
    %4 = vector.load %arg2[%c0_2, %c0_3] : memref<8x12544xf32, #tpu.memory_space<vmem>>, vector<8x12544xf32>
    %c0_4 = arith.constant 0 : index
    %c0_5 = arith.constant 0 : index
    %c0_6 = arith.constant 0 : index
    %5 = vector.load %arg3[%c0_4, %c0_5, %c0_6] : memref<1x12544x64xf32, #tpu.memory_space<vmem>>, vector<1x12544x64xf32>
    %6 = vector.shape_cast %5 : vector<1x12544x64xf32> to vector<12544x64xf32>
    %cst = arith.constant dense<0.000000e+00> : vector<8x64xf32>
    %7 = tpu.matmul %4, %6, %cst {dimension_numbers = #tpu.dot_dimension_numbers<[1], [0], [0], [1], [0, 0, 1, 1], [], []>} : vector<8x12544xf32>, vector<12544x64xf32>, vector<8x64xf32> -> vector<8x64xf32>
    %8 = arith.addf %3, %7 : vector<8x64xf32>
    %c0_7 = arith.constant 0 : index
    %c0_8 = arith.constant 0 : index
    %9 = vector.load %arg7[%c0_7, %c0_8] : memref<8x64xf32, #tpu.memory_space<vmem>>, vector<8x64xf32>
    tpu.vector_store %arg7[%c0_7, %c0_8], %8 {strides = array<i32>} : memref<8x64xf32, #tpu.memory_space<vmem>>, vector<8x64xf32>,
    %c1_i32 = arith.constant 1 : i32
    %10 = arith.cmpi eq, %arg1, %c1_i32 : i32
    %11 = arith.extui %10 : i1 to i32
    %c0_i32_9 = arith.constant 0 : i32
    %12 = arith.cmpi ne, %11, %c0_i32_9 : i32
    scf.if %12 {
      %c0_10 = arith.constant 0 : index
      %c0_11 = arith.constant 0 : index
      %13 = vector.load %arg7[%c0_10, %c0_11] : memref<8x64xf32, #tpu.memory_space<vmem>>, vector<8x64xf32>
      %c0_12 = arith.constant 0 : index
      %c0_13 = arith.constant 0 : index
      %c0_14 = arith.constant 0 : index
      %14 = vector.load %arg4[%c0_12, %c0_13, %c0_14] : memref<1x1x64xf32, #tpu.memory_space<vmem>>, vector<1x1x64xf32>
      %15 = vector.shape_cast %14 : vector<1x1x64xf32> to vector<1x64xf32>
      %16 = vector.broadcast %15 : vector<1x64xf32> to vector<8x64xf32>
      %17 = arith.addf %13, %16 : vector<8x64xf32>
      %18 = math.tanh %17 : vector<8x64xf32>
      %c0_15 = arith.constant 0 : index
      %c0_16 = arith.constant 0 : index
      %c0_17 = arith.constant 0 : index
      %19 = vector.load %arg5[%c0_15, %c0_16, %c0_17] : memref<1x64x16xf32, #tpu.memory_space<vmem>>, vector<1x64x16xf32>
      %20 = vector.shape_cast %19 : vector<1x64x16xf32> to vector<64x16xf32>
      %cst_18 = arith.constant dense<0.000000e+00> : vector<8x16xf32>
      %21 = tpu.matmul %18, %20, %cst_18 {dimension_numbers = #tpu.dot_dimension_numbers<[1], [0], [0], [1], [0, 0, 1, 1], [], []>} : vector<8x64xf32>, vector<64x16xf32>, vector<8x16xf32> -> vector<8x16xf32>
      %c0_19 = arith.constant 0 : index
      %c0_20 = arith.constant 0 : index
      %c0_21 = arith.constant 0 : index
      %22 = vector.load %arg6[%c0_19, %c0_20, %c0_21] : memref<1x8x16xf32, #tpu.memory_space<vmem>>, vector<1x8x16xf32>
      %23 = vector.shape_cast %22 : vector<1x8x16xf32> to vector<8x16xf32>
      %24 = vector.shape_cast %21 : vector<8x16xf32> to vector<1x8x16xf32>
      tpu.vector_store %arg6[%c0_19, %c0_20, %c0_21], %24 {strides = array<i32>} : memref<1x8x16xf32, #tpu.memory_space<vmem>>, vector<1x8x16xf32>,
    } else {
    }
    return
  }
  func.func @transform_0(%arg0: i32, %arg1: i32) -> (i32, i32) {
    %c0_i32 = arith.constant 0 : i32
    %c0_i32_0 = arith.constant 0 : i32
    return %c0_i32, %arg1 : i32, i32
  }
  func.func @transform_1(%arg0: i32, %arg1: i32) -> (i32, i32, i32) {
    %c0_i32 = arith.constant 0 : i32
    %c0_i32_0 = arith.constant 0 : i32
    return %arg0, %arg1, %c0_i32 : i32, i32, i32
  }
  func.func @transform_2(%arg0: i32, %arg1: i32) -> (i32, i32, i32) {
    %c0_i32 = arith.constant 0 : i32
    %c0_i32_0 = arith.constant 0 : i32
    %c0_i32_1 = arith.constant 0 : i32
    return %arg0, %c0_i32, %c0_i32_0 : i32, i32, i32
  }
  func.func @transform_3(%arg0: i32, %arg1: i32) -> (i32, i32, i32) {
    %c0_i32 = arith.constant 0 : i32
    %c0_i32_0 = arith.constant 0 : i32
    %c0_i32_1 = arith.constant 0 : i32
    return %arg0, %c0_i32, %c0_i32_0 : i32, i32, i32
  }
  func.func @transform_4(%arg0: i32, %arg1: i32) -> (i32, i32, i32) {
    %c0_i32 = arith.constant 0 : i32
    %c0_i32_0 = arith.constant 0 : i32
    %c0_i32_1 = arith.constant 0 : i32
    return %arg0, %c0_i32, %c0_i32_0 : i32, i32, i32
  }
}

</mosaic_0001>

<llo_original>
// kernel: tpu_custom_call.1
$region0: #{tpu_custom_call.1}
  #allocation0 [shape = 'u32[]', space=smem, size = 0x4, offset = 0x4, fixed_abs, tag = 'smem constant byte address 0x4 - core index']
  #allocation1 [shape = 'u32[144,128]{1,0:T(1,128)}', space=vmem, size = 0x12000, scoped, tag = 'internal scratch']
  #allocation2 [shape = 'f32[8,64]{1,0:T(8,128)}', space=vmem, size = 0x1000, scoped, tag = 'scratch operand']
  %s0 = inlined_call_operand.vmem [shape: f32[8,25088], index: 0, kind: input, shape index: {}]
  %s1 = inlined_call_operand.vmem [shape: f32[2,25088,64], index: 1, kind: input, shape index: {}]
  %s2 = inlined_call_operand.vmem [shape: f32[2,1,64], index: 2, kind: input, shape index: {}]
  %s3 = inlined_call_operand.vmem [shape: f32[2,64,16], index: 3, kind: input, shape index: {}]
  %s4 = inlined_call_operand.hbm [shape: f32[2,8,16], index: 4, kind: output, shape index: {}]
  %s5 = sld [smem:[#allocation0]]
  $region57: #{tpu_custom_call.1} parent=0
    _
  %s7 = ssub.s32 1, %s5
  %s8 = scalar_select 0, %s7, %s5
  $region1: #{tpu_custom_call.1} parent=0
    #allocation3 [shape = 'u8[8192]{0}', space=vmem, size = 0x2000, scoped, tag = 'output window, operand 0']
    #allocation4 [shape = 's32[2]{0}', space=sflag, size = 0x8, scoped, tag = 'scoped memory for tpu_custom_call.1']
    %9 = vsyncpa [#allocation4], 0
    %s10 = scalar_lea.sflag [#allocation4], 1
    %11 = vsyncpa %s10, 0
    loop: start=0, step=1, limit=6
    $region2: #{tpu_custom_call.1} parent=1 // loop_pre_header
      _
    $region3: #{tpu_custom_call.1} parent=1 // loop_header
      %s13 = sphi 0, %s17
      %p14 = scmp.ge.s32.totalorder %s13, 6
      %s20 = sphi 0, %s32
      %s21 = sphi 0, %s28
      %s22 = sphi 0, %s20
      %s23 = sphi 0, %s21
      %s24 = sphi 0, %s22
      %s25 = sphi 0, %s23
      %s35 = sphi 0, %s37
      %s38 = sphi 0, %s35
      %s39 = sphi 0, %s38
      %s55 = sphi 0, %s39
      %s63 = sphi 0, %s65
      %s66 = sphi 0, %s63
      %s67 = sphi 0, %s66
      %s83 = sphi 0, %s67
      %s89 = sphi 0, %s91
      %s92 = sphi 0, %s89
      %s93 = sphi 0, %s92
      %s109 = sphi 0, %s93
      %s115 = sphi 0, %s117
      %s118 = sphi 0, %s115
      %s119 = sphi 0, %s118
      %s135 = sphi 0, %s119
      %s141 = sphi 0, %s143
      %s144 = sphi 0, %s141
      %s145 = sphi 0, %s144
      %s161 = sphi 0, %s145
    $region4: #{tpu_custom_call.1} parent=1 // loop_header_branch
      %16 = sbr.rel (%p14) target = $region8
    $region5: #{tpu_custom_call.1} parent=1 // loop_body
      %s18 = ssub.s32 %s13, 1
      %s19 = ssub.s32 %s13, 2
      %s26 = sadd.s32 1, %s21
      %p27 = scmp.ge.s32.totalorder %s26, 2
      %s28 = scalar_select %p27, 0, %s26
      %s29 = sadd.s32 1, %s20
      %s30 = scalar_select %p27, %s29, %s20
      %p31 = scmp.ge.s32.totalorder %s30, 2
      %s32 = scalar_select %p31, 0, %s30
      %s33 = ssub.s32 %s21, %s28
      %p34 = scmp.eq.s32.totalorder %s33, 0
      %s36 = sadd.s32 %s35, 1
      %s37 = scalar_select %p34, %s35, %s36
      %p40 = pneg %p34
      %p41 = scmp.eq.s32.totalorder %s13, 3
      %p42 = por %p40, %p41
      %p43 = scmp.ne.s32.totalorder %s35, %s38
      %p44 = scmp.eq.s32.totalorder %s13, 0
      %p45 = por %p43, %p44
      %p46 = scmp.ne.s32.totalorder %s35, %s38
      %p47 = scmp.eq.s32.totalorder %s18, 3
      %p48 = por %p46, %p47
      %p49 = scmp.ne.s32.totalorder %s38, %s39
      %p50 = scmp.eq.s32.totalorder %s18, 0
      %p51 = por %p49, %p50
      %p52 = scmp.ne.s32.totalorder %s38, %s39
      %p53 = scmp.eq.s32.totalorder %s19, 3
      %p54 = por %p52, %p53
      %p56 = scmp.ne.s32.totalorder %s39, %s55
      %p57 = scmp.eq.s32.totalorder %s19, 0
      %p58 = por %p56, %p57
      %s59 = ssub.s32 %s20, %s32
      %s60 = ssub.s32 %s21, %s28
      %s61 = sor.u32 %s59, %s60
      %p62 = scmp.eq.s32.totalorder %s61, 0
      %s64 = sadd.s32 %s63, 1
      %s65 = scalar_select %p62, %s63, %s64
      %p68 = pneg %p62
      %p69 = scmp.eq.s32.totalorder %s13, 3
      %p70 = por %p68, %p69
      %p71 = scmp.ne.s32.totalorder %s63, %s66
      %p72 = scmp.eq.s32.totalorder %s13, 0
      %p73 = por %p71, %p72
      %p74 = scmp.ne.s32.totalorder %s63, %s66
      %p75 = scmp.eq.s32.totalorder %s18, 3
      %p76 = por %p74, %p75
      %p77 = scmp.ne.s32.totalorder %s66, %s67
      %p78 = scmp.eq.s32.totalorder %s18, 0
      %p79 = por %p77, %p78
      %p80 = scmp.ne.s32.totalorder %s66, %s67
      %p81 = scmp.eq.s32.totalorder %s19, 3
      %p82 = por %p80, %p81
      %p84 = scmp.ne.s32.totalorder %s67, %s83
      %p85 = scmp.eq.s32.totalorder %s19, 0
      %p86 = por %p84, %p85
      %s87 = ssub.s32 %s20, %s32
      %p88 = scmp.eq.s32.totalorder %s87, 0
      %s90 = sadd.s32 %s89, 1
      %s91 = scalar_select %p88, %s89, %s90
      %p94 = pneg %p88
      %p95 = scmp.eq.s32.totalorder %s13, 3
      %p96 = por %p94, %p95
      %p97 = scmp.ne.s32.totalorder %s89, %s92
      %p98 = scmp.eq.s32.totalorder %s13, 0
      %p99 = por %p97, %p98
      %p100 = scmp.ne.s32.totalorder %s89, %s92
      %p101 = scmp.eq.s32.totalorder %s18, 3
      %p102 = por %p100, %p101
      %p103 = scmp.ne.s32.totalorder %s92, %s93
      %p104 = scmp.eq.s32.totalorder %s18, 0
      %p105 = por %p103, %p104
      %p106 = scmp.ne.s32.totalorder %s92, %s93
      %p107 = scmp.eq.s32.totalorder %s19, 3
      %p108 = por %p106, %p107
      %p110 = scmp.ne.s32.totalorder %s93, %s109
      %p111 = scmp.eq.s32.totalorder %s19, 0
      %p112 = por %p110, %p111
      %s113 = ssub.s32 %s20, %s32
      %p114 = scmp.eq.s32.totalorder %s113, 0
      %s116 = sadd.s32 %s115, 1
      %s117 = scalar_select %p114, %s115, %s116
      %p120 = pneg %p114
      %p121 = scmp.eq.s32.totalorder %s13, 3
      %p122 = por %p120, %p121
      %p123 = scmp.ne.s32.totalorder %s115, %s118
      %p124 = scmp.eq.s32.totalorder %s13, 0
      %p125 = por %p123, %p124
      %p126 = scmp.ne.s32.totalorder %s115, %s118
      %p127 = scmp.eq.s32.totalorder %s18, 3
      %p128 = por %p126, %p127
      %p129 = scmp.ne.s32.totalorder %s118, %s119
      %p130 = scmp.eq.s32.totalorder %s18, 0
      %p131 = por %p129, %p130
      %p132 = scmp.ne.s32.totalorder %s118, %s119
      %p133 = scmp.eq.s32.totalorder %s19, 3
      %p134 = por %p132, %p133
      %p136 = scmp.ne.s32.totalorder %s119, %s135
      %p137 = scmp.eq.s32.totalorder %s19, 0
      %p138 = por %p136, %p137
      %s139 = ssub.s32 %s20, %s32
      %p140 = scmp.eq.s32.totalorder %s139, 0
      %s142 = sadd.s32 %s141, 1
      %s143 = scalar_select %p140, %s141, %s142
      %p146 = pneg %p140
      %p147 = scmp.eq.s32.totalorder %s13, 3
      %p148 = por %p146, %p147
      %p149 = scmp.ne.s32.totalorder %s141, %s144
      %p150 = scmp.eq.s32.totalorder %s13, 0
      %p151 = por %p149, %p150
      %p152 = scmp.ne.s32.totalorder %s141, %s144
      %p153 = scmp.eq.s32.totalorder %s18, 3
      %p154 = por %p152, %p153
      %p155 = scmp.ne.s32.totalorder %s144, %s145
      %p156 = scmp.eq.s32.totalorder %s18, 0
      %p157 = por %p155, %p156
      %p158 = scmp.ne.s32.totalorder %s144, %s145
      %p159 = scmp.eq.s32.totalorder %s19, 3
      %p160 = por %p158, %p159
      %p162 = scmp.ne.s32.totalorder %s145, %s161
      %p163 = scmp.eq.s32.totalorder %s19, 0
      %p164 = por %p162, %p163
      %p165 = scmp.le.s32.totalorder 1, %s13
      %p166 = scmp.lt.s32.totalorder %s13, 5
      %p167 = pnand %p165, %p166
      %p168 = pneg %p167
      // Predicated region
      $region9: #{tpu_custom_call.1} parent=5 // pred_check
        _
      $region10: #{tpu_custom_call.1} parent=5 // pred_check_branch
        %170 = sbr.rel (%p167) target = $region12
      $region11: #{tpu_custom_call.1} parent=5 // pred_region
        %s171 = ssub.s32 %s13, 1
      $region12: #{tpu_custom_call.1} parent=5 // pred_fallthru
        _
      %p172 = scmp.lt.s32.totalorder %s13, 4
      // Predicated region
      $region13: #{tpu_custom_call.1} parent=5 // pred_check
        %p173 = pneg %p172
      $region14: #{tpu_custom_call.1} parent=5 // pred_check_branch
        %175 = sbr.rel (%p173) target = $region16
      $region15: #{tpu_custom_call.1} parent=5 // pred_region
        // Predicated region
        $region17: #{tpu_custom_call.1} parent=15 // pred_check
          %p176 = pneg %p45
        $region18: #{tpu_custom_call.1} parent=15 // pred_check_branch
          %178 = sbr.rel (%p176) target = $region20
        $region19: #{tpu_custom_call.1} parent=15 // pred_region
          %s179 = smul.u32 98, %s21
          %p180 = scmp.lt.s32.totalorder %s179, 195
          %s181 = scalar_select %p180, %s179, 195
          %s182 = smul.addr %s181, 8
          %s183 = scalar_lea.vmem %s0, %s182
          %s184 = smul.u32 98, %s21
        $region20: #{tpu_custom_call.1} parent=15 // pred_fallthru
          _
        // Predicated region
        $region21: #{tpu_custom_call.1} parent=15 // pred_check
          %p185 = pneg %p73
        $region22: #{tpu_custom_call.1} parent=15 // pred_check_branch
          %187 = sbr.rel (%p185) target = $region24
        $region23: #{tpu_custom_call.1} parent=15 // pred_region
          %s188 = smul.u32 1568, %s21
          %p189 = scmp.lt.s32.totalorder %s20, 1
          %s190 = scalar_select %p189, %s20, 1
          %p191 = scmp.lt.s32.totalorder %s188, 3135
          %s192 = scalar_select %p191, %s188, 3135
          %s193 = smul.addr %s190, 3136
          %s194 = sadd.s32 %s192, %s193
          %s195 = smul.addr %s194, 8
          %s196 = scalar_lea.vmem %s1, %s195
          %s197 = smul.u32 1568, %s21
        $region24: #{tpu_custom_call.1} parent=15 // pred_fallthru
          _
        // Predicated region
        $region25: #{tpu_custom_call.1} parent=15 // pred_check
          %p198 = pneg %p99
        $region26: #{tpu_custom_call.1} parent=15 // pred_check_branch
          %200 = sbr.rel (%p198) target = $region28
        $region27: #{tpu_custom_call.1} parent=15 // pred_region
          %p201 = scmp.lt.s32.totalorder %s20, 1
          %s202 = scalar_select %p201, %s20, 1
          %s203 = scalar_lea.vmem %s2, %s202
        $region28: #{tpu_custom_call.1} parent=15 // pred_fallthru
          _
        // Predicated region
        $region29: #{tpu_custom_call.1} parent=15 // pred_check
          %p204 = pneg %p125
        $region30: #{tpu_custom_call.1} parent=15 // pred_check_branch
          %206 = sbr.rel (%p204) target = $region32
        $region31: #{tpu_custom_call.1} parent=15 // pred_region
          %p207 = scmp.lt.s32.totalorder %s20, 1
          %s208 = scalar_select %p207, %s20, 1
          %s209 = smul.addr %s208, 8
          %s210 = smul.addr %s209, 8
          %s211 = scalar_lea.vmem %s3, %s210
        $region32: #{tpu_custom_call.1} parent=15 // pred_fallthru
          _
      $region16: #{tpu_custom_call.1} parent=5 // pred_fallthru
        _
      %p212 = scmp.le.s32.totalorder 1, %s13
      %p213 = scmp.lt.s32.totalorder %s13, 5
      %p214 = pnand %p212, %p213
      %p215 = pneg %p214
      // Predicated region
      $region33: #{tpu_custom_call.1} parent=5 // pred_check
        _
      $region34: #{tpu_custom_call.1} parent=5 // pred_check_branch
        %217 = sbr.rel (%p214) target = $region36
      $region35: #{tpu_custom_call.1} parent=5 // pred_region
        %s218 = ssub.s32 %s13, 1
        %s219 = smul.u32 98, %s23
        %p220 = scmp.lt.s32.totalorder %s219, 195
        %s221 = scalar_select %p220, %s219, 195
        %s222 = smul.addr %s221, 8
        %s223 = scalar_lea.vmem %s0, %s222
        %p224 = pneg %p51
        %p225 = pneg %p48
        %s226 = smul.u32 1568, %s23
        %p227 = scmp.lt.s32.totalorder %s22, 1
        %s228 = scalar_select %p227, %s22, 1
        %p229 = scmp.lt.s32.totalorder %s226, 3135
        %s230 = scalar_select %p229, %s226, 3135
        %s231 = smul.addr %s228, 3136
        %s232 = sadd.s32 %s230, %s231
        %s233 = smul.addr %s232, 8
        %s234 = scalar_lea.vmem %s1, %s233
        %p235 = pneg %p79
        %p236 = pneg %p76
        %p237 = scmp.lt.s32.totalorder %s22, 1
        %s238 = scalar_select %p237, %s22, 1
        %s239 = scalar_lea.vmem %s2, %s238
        %p240 = pneg %p105
        %p241 = pneg %p102
        %p242 = scmp.lt.s32.totalorder %s22, 1
        %s243 = scalar_select %p242, %s22, 1
        %s244 = smul.addr %s243, 8
        %s245 = smul.addr %s244, 8
        %s246 = scalar_lea.vmem %s3, %s245
        %p247 = pneg %p131
        %p248 = pneg %p128
        %p249 = pneg %p157
        %p250 = pneg %p154
        %s251 = sand.u32 %s144, 1
        %s252 = scalar_lea.sflag [#allocation4], %s251
        %s253 = sand.u32 %s144, 1
        %s254 = smul.addr %s253, 8
        %s255 = scalar_lea.vmem [#allocation3], %s254
        %s256 = smul.u32 98, %s23
        %p257 = scmp.lt.s32.totalorder %s256, 195
        %s258 = scalar_select %p257, %s256, 195
        %s259 = smul.addr %s258, 8
        %s260 = scalar_lea.vmem %s0, %s259
        %s261 = smul.u32 98, %s23
        %s262 = smul.u32 1568, %s23
        %p263 = scmp.lt.s32.totalorder %s22, 1
        %s264 = scalar_select %p263, %s22, 1
        %p265 = scmp.lt.s32.totalorder %s262, 3135
        %s266 = scalar_select %p265, %s262, 3135
        %s267 = smul.addr %s264, 3136
        %s268 = sadd.s32 %s266, %s267
        %s269 = smul.addr %s268, 8
        %s270 = scalar_lea.vmem %s1, %s269
        %s271 = smul.u32 1568, %s23
        %p272 = scmp.lt.s32.totalorder %s22, 1
        %s273 = scalar_select %p272, %s22, 1
        %s274 = scalar_lea.vmem %s2, %s273
        %p275 = scmp.lt.s32.totalorder %s22, 1
        %s276 = scalar_select %p275, %s22, 1
        %s277 = smul.addr %s276, 8
        %s278 = smul.addr %s277, 8
        %s279 = scalar_lea.vmem %s3, %s278
        %p280 = scmp.eq.s32.totalorder %s23, 0
        // Predicated region
        $region37: #{tpu_custom_call.1} parent=35 // pred_check
          %p281 = pneg %p280
        $region38: #{tpu_custom_call.1} parent=35 // pred_check_branch
          %283 = sbr.rel (%p281) target = $region40
        $region39: #{tpu_custom_call.1} parent=35 // pred_region
          %vm284 = vcmask 523264
          %285 = vst.msk [vmem:[#allocation2] sm:$0xff] %vm284, 0.0
        $region40: #{tpu_custom_call.1} parent=35 // pred_fallthru
          _
        %v286 = vld [vmem:[#allocation2] sm:$0xff]
        %v287 = vld [vmem:[%s260] sm:$0xff]
        %v288 = vld [vmem:[%s260 + $0x8] sm:$0xff]
        %v289 = vld [vmem:[%s260 + $0x10] sm:$0xff]
        %v290 = vld [vmem:[%s260 + $0x18] sm:$0xff]
        %v291 = vld [vmem:[%s260 + $0x20] sm:$0xff]
        %v292 = vld [vmem:[%s260 + $0x28] sm:$0xff]
        %v293 = vld [vmem:[%s260 + $0x30] sm:$0xff]
        %v294 = vld [vmem:[%s260 + $0x38] sm:$0xff]
        %v295 = vld [vmem:[%s260 + $0x40] sm:$0xff]
        %v296 = vld [vmem:[%s260 + $0x48] sm:$0xff]
        %v297 = vld [vmem:[%s260 + $0x50] sm:$0xff]
        %v298 = vld [vmem:[%s260 + $0x58] sm:$0xff]
        %v299 = vld [vmem:[%s260 + $0x60] sm:$0xff]
        %v300 = vld [vmem:[%s260 + $0x68] sm:$0xff]
        %v301 = vld [vmem:[%s260 + $0x70] sm:$0xff]
        %v302 = vld [vmem:[%s260 + $0x78] sm:$0xff]
        %v303 = vld [vmem:[%s260 + $0x80] sm:$0xff]
        %v304 = vld [vmem:[%s260 + $0x88] sm:$0xff]
        %v305 = vld [vmem:[%s260 + $0x90] sm:$0xff]
        %v306 = vld [vmem:[%s260 + $0x98] sm:$0xff]
        %v307 = vld [vmem:[%s260 + $0xa0] sm:$0xff]
        %v308 = vld [vmem:[%s260 + $0xa8] sm:$0xff]
        %v309 = vld [vmem:[%s260 + $0xb0] sm:$0xff]
        %v310 = vld [vmem:[%s260 + $0xb8] sm:$0xff]
        %v311 = vld [vmem:[%s260 + $0xc0] sm:$0xff]
        %v312 = vld [vmem:[%s260 + $0xc8] sm:$0xff]
        %v313 = vld [vmem:[%s260 + $0xd0] sm:$0xff]
        %v314 = vld [vmem:[%s260 + $0xd8] sm:$0xff]
        %v315 = vld [vmem:[%s260 + $0xe0] sm:$0xff]
        %v316 = vld [vmem:[%s260 + $0xe8] sm:$0xff]
        %v317 = vld [vmem:[%s260 + $0xf0] sm:$0xff]
        %v318 = vld [vmem:[%s260 + $0xf8] sm:$0xff]
        %v319 = vld [vmem:[%s260 + $0x100] sm:$0xff]
        %v320 = vld [vmem:[%s260 + $0x108] sm:$0xff]
        %v321 = vld [vmem:[%s260 + $0x110] sm:$0xff]
        %v322 = vld [vmem:[%s260 + $0x118] sm:$0xff]
        %v323 = vld [vmem:[%s260 + $0x120] sm:$0xff]
        %v324 = vld [vmem:[%s260 + $0x128] sm:$0xff]
        %v325 = vld [vmem:[%s260 + $0x130] sm:$0xff]
        %v326 = vld [vmem:[%s260 + $0x138] sm:$0xff]
        %v327 = vld [vmem:[%s260 + $0x140] sm:$0xff]
        %v328 = vld [vmem:[%s260 + $0x148] sm:$0xff]
        %v329 = vld [vmem:[%s260 + $0x150] sm:$0xff]
        %v330 = vld [vmem:[%s260 + $0x158] sm:$0xff]
        %v331 = vld [vmem:[%s260 + $0x160] sm:$0xff]
        %v332 = vld [vmem:[%s260 + $0x168] sm:$0xff]
        %v333 = vld [vmem:[%s260 + $0x170] sm:$0xff]
        %v334 = vld [vmem:[%s260 + $0x178] sm:$0xff]
        %v335 = vld [vmem:[%s260 + $0x180] sm:$0xff]
        %v336 = vld [vmem:[%s260 + $0x188] sm:$0xff]
        %v337 = vld [vmem:[%s260 + $0x190] sm:$0xff]
        %v338 = vld [vmem:[%s260 + $0x198] sm:$0xff]
        %v339 = vld [vmem:[%s260 + $0x1a0] sm:$0xff]
        %v340 = vld [vmem:[%s260 + $0x1a8] sm:$0xff]
        %v341 = vld [vmem:[%s260 + $0x1b0] sm:$0xff]
        %v342 = vld [vmem:[%s260 + $0x1b8] sm:$0xff]
        %v343 = vld [vmem:[%s260 + $0x1c0] sm:$0xff]
        %v344 = vld [vmem:[%s260 + $0x1c8] sm:$0xff]
        %v345 = vld [vmem:[%s260 + $0x1d0] sm:$0xff]
        %v346 = vld [vmem:[%s260 + $0x1d8] sm:$0xff]
        %v347 = vld [vmem:[%s260 + $0x1e0] sm:$0xff]
        %v348 = vld [vmem:[%s260 + $0x1e8] sm:$0xff]
        %v349 = vld [vmem:[%s260 + $0x1f0] sm:$0xff]
        %v350 = vld [vmem:[%s260 + $0x1f8] sm:$0xff]
        %v351 = vld [vmem:[%s260 + $0x200] sm:$0xff]
        %v352 = vld [vmem:[%s260 + $0x208] sm:$0xff]
        %v353 = vld [vmem:[%s260 + $0x210] sm:$0xff]
        %v354 = vld [vmem:[%s260 + $0x218] sm:$0xff]
        %v355 = vld [vmem:[%s260 + $0x220] sm:$0xff]
        %v356 = vld [vmem:[%s260 + $0x228] sm:$0xff]
        %v357 = vld [vmem:[%s260 + $0x230] sm:$0xff]
        %v358 = vld [vmem:[%s260 + $0x238] sm:$0xff]
        %v359 = vld [vmem:[%s260 + $0x240] sm:$0xff]
        %v360 = vld [vmem:[%s260 + $0x248] sm:$0xff]
        %v361 = vld [vmem:[%s260 + $0x250] sm:$0xff]
        %v362 = vld [vmem:[%s260 + $0x258] sm:$0xff]
        %v363 = vld [vmem:[%s260 + $0x260] sm:$0xff]
        %v364 = vld [vmem:[%s260 + $0x268] sm:$0xff]
        %v365 = vld [vmem:[%s260 + $0x270] sm:$0xff]
        %v366 = vld [vmem:[%s260 + $0x278] sm:$0xff]
        %v367 = vld [vmem:[%s260 + $0x280] sm:$0xff]
        %v368 = vld [vmem:[%s260 + $0x288] sm:$0xff]
        %v369 = vld [vmem:[%s260 + $0x290] sm:$0xff]
        %v370 = vld [vmem:[%s260 + $0x298] sm:$0xff]
        %v371 = vld [vmem:[%s260 + $0x2a0] sm:$0xff]
        %v372 = vld [vmem:[%s260 + $0x2a8] sm:$0xff]
        %v373 = vld [vmem:[%s260 + $0x2b0] sm:$0xff]
        %v374 = vld [vmem:[%s260 + $0x2b8] sm:$0xff]
        %v375 = vld [vmem:[%s260 + $0x2c0] sm:$0xff]
        %v376 = vld [vmem:[%s260 + $0x2c8] sm:$0xff]
        %v377 = vld [vmem:[%s260 + $0x2d0] sm:$0xff]
        %v378 = vld [vmem:[%s260 + $0x2d8] sm:$0xff]
        %v379 = vld [vmem:[%s260 + $0x2e0] sm:$0xff]
        %v380 = vld [vmem:[%s260 + $0x2e8] sm:$0xff]
        %v381 = vld [vmem:[%s260 + $0x2f0] sm:$0xff]
        %v382 = vld [vmem:[%s260 + $0x2f8] sm:$0xff]
        %v383 = vld [vmem:[%s260 + $0x300] sm:$0xff]
        %v384 = vld [vmem:[%s260 + $0x308] sm:$0xff]
        %v385 = vld [vmem:[%s270] sm:$0xff]
        %v386 = vld [vmem:[%s270 + $0x8] sm:$0xff]
        %v387 = vld [vmem:[%s270 + $0x10] sm:$0xff]
        %v388 = vld [vmem:[%s270 + $0x18] sm:$0xff]
        %v389 = vld [vmem:[%s270 + $0x20] sm:$0xff]
        %v390 = vld [vmem:[%s270 + $0x28] sm:$0xff]
        %v391 = vld [vmem:[%s270 + $0x30] sm:$0xff]
        %v392 = vld [vmem:[%s270 + $0x38] sm:$0xff]
        %v393 = vld [vmem:[%s270 + $0x40] sm:$0xff]
        %v394 = vld [vmem:[%s270 + $0x48] sm:$0xff]
        %v395 = vld [vmem:[%s270 + $0x50] sm:$0xff]
        %v396 = vld [vmem:[%s270 + $0x58] sm:$0xff]
        %v397 = vld [vmem:[%s270 + $0x60] sm:$0xff]
        %v398 = vld [vmem:[%s270 + $0x68] sm:$0xff]
        %v399 = vld [vmem:[%s270 + $0x70] sm:$0xff]
        %v400 = vld [vmem:[%s270 + $0x78] sm:$0xff]
        %v401 = vld [vmem:[%s270 + $0x80] sm:$0xff]
        %v402 = vld [vmem:[%s270 + $0x88] sm:$0xff]
        %v403 = vld [vmem:[%s270 + $0x90] sm:$0xff]
        %v404 = vld [vmem:[%s270 + $0x98] sm:$0xff]
        %v405 = vld [vmem:[%s270 + $0xa0] sm:$0xff]
        %v406 = vld [vmem:[%s270 + $0xa8] sm:$0xff]
        %v407 = vld [vmem:[%s270 + $0xb0] sm:$0xff]
        %v408 = vld [vmem:[%s270 + $0xb8] sm:$0xff]
        %v409 = vld [vmem:[%s270 + $0xc0] sm:$0xff]
        %v410 = vld [vmem:[%s270 + $0xc8] sm:$0xff]
        %v411 = vld [vmem:[%s270 + $0xd0] sm:$0xff]
        %v412 = vld [vmem:[%s270 + $0xd8] sm:$0xff]
        %v413 = vld [vmem:[%s270 + $0xe0] sm:$0xff]
        %v414 = vld [vmem:[%s270 + $0xe8] sm:$0xff]
        %v415 = vld [vmem:[%s270 + $0xf0] sm:$0xff]
        %v416 = vld [vmem:[%s270 + $0xf8] sm:$0xff]
        %v417 = vld [vmem:[%s270 + $0x100] sm:$0xff]
        %v418 = vld [vmem:[%s270 + $0x108] sm:$0xff]
        %v419 = vld [vmem:[%s270 + $0x110] sm:$0xff]
        %v420 = vld [vmem:[%s270 + $0x118] sm:$0xff]
        %v421 = vld [vmem:[%s270 + $0x120] sm:$0xff]
        %v422 = vld [vmem:[%s270 + $0x128] sm:$0xff]
        %v423 = vld [vmem:[%s270 + $0x130] sm:$0xff]
        %v424 = vld [vmem:[%s270 + $0x138] sm:$0xff]
        %v425 = vld [vmem:[%s270 + $0x140] sm:$0xff]
        %v426 = vld [vmem:[%s270 + $0x148] sm:$0xff]
        %v427 = vld [vmem:[%s270 + $0x150] sm:$0xff]
        %v428 = vld [vmem:[%s270 + $0x158] sm:$0xff]
        %v429 = vld [vmem:[%s270 + $0x160] sm:$0xff]
        %v430 = vld [vmem:[%s270 + $0x168] sm:$0xff]
        %v431 = vld [vmem:[%s270 + $0x170] sm:$0xff]
        %v432 = vld [vmem:[%s270 + $0x178] sm:$0xff]
        %v433 = vld [vmem:[%s270 + $0x180] sm:$0xff]
        %v434 = vld [vmem:[%s270 + $0x188] sm:$0xff]
        %v435 = vld [vmem:[%s270 + $0x190] sm:$0xff]
        %v436 = vld [vmem:[%s270 + $0x198] sm:$0xff]
        %v437 = vld [vmem:[%s270 + $0x1a0] sm:$0xff]
        %v438 = vld [vmem:[%s270 + $0x1a8] sm:$0xff]
        %v439 = vld [vmem:[%s270 + $0x1b0] sm:$0xff]
        %v440 = vld [vmem:[%s270 + $0x1b8] sm:$0xff]
        %v441 = vld [vmem:[%s270 + $0x1c0] sm:$0xff]
        %v442 = vld [vmem:[%s270 + $0x1c8] sm:$0xff]
        %v443 = vld [vmem:[%s270 + $0x1d0] sm:$0xff]
        %v444 = vld [vmem:[%s270 + $0x1d8] sm:$0xff]
        %v445 = vld [vmem:[%s270 + $0x1e0] sm:$0xff]
        %v446 = vld [vmem:[%s270 + $0x1e8] sm:$0xff]
        %v447 = vld [vmem:[%s270 + $0x1f0] sm:$0xff]
        %v448 = vld [vmem:[%s270 + $0x1f8] sm:$0xff]
        %v449 = vld [vmem:[%s270 + $0x200] sm:$0xff]
        %v450 = vld [vmem:[%s270 + $0x208] sm:$0xff]
        %v451 = vld [vmem:[%s270 + $0x210] sm:$0xff]
        %v452 = vld [vmem:[%s270 + $0x218] sm:$0xff]
        %v453 = vld [vmem:[%s270 + $0x220] sm:$0xff]
        %v454 = vld [vmem:[%s270 + $0x228] sm:$0xff]
        %v455 = vld [vmem:[%s270 + $0x230] sm:$0xff]
        %v456 = vld [vmem:[%s270 + $0x238] sm:$0xff]
        %v457 = vld [vmem:[%s270 + $0x240] sm:$0xff]
        %v458 = vld [vmem:[%s270 + $0x248] sm:$0xff]
        %v459 = vld [vmem:[%s270 + $0x250] sm:$0xff]
        %v460 = vld [vmem:[%s270 + $0x258] sm:$0xff]
        %v461 = vld [vmem:[%s270 + $0x260] sm:$0xff]
        %v462 = vld [vmem:[%s270 + $0x268] sm:$0xff]
        %v463 = vld [vmem:[%s270 + $0x270] sm:$0xff]
        %v464 = vld [vmem:[%s270 + $0x278] sm:$0xff]
        %v465 = vld [vmem:[%s270 + $0x280] sm:$0xff]
        %v466 = vld [vmem:[%s270 + $0x288] sm:$0xff]
        %v467 = vld [vmem:[%s270 + $0x290] sm:$0xff]
        %v468 = vld [vmem:[%s270 + $0x298] sm:$0xff]
        %v469 = vld [vmem:[%s270 + $0x2a0] sm:$0xff]
        %v470 = vld [vmem:[%s270 + $0x2a8] sm:$0xff]
        %v471 = vld [vmem:[%s270 + $0x2b0] sm:$0xff]
        %v472 = vld [vmem:[%s270 + $0x2b8] sm:$0xff]
        %v473 = vld [vmem:[%s270 + $0x2c0] sm:$0xff]
        %v474 = vld [vmem:[%s270 + $0x2c8] sm:$0xff]
        %v475 = vld [vmem:[%s270 + $0x2d0] sm:$0xff]
        %v476 = vld [vmem:[%s270 + $0x2d8] sm:$0xff]
        %v477 = vld [vmem:[%s270 + $0x2e0] sm:$0xff]
        %v478 = vld [vmem:[%s270 + $0x2e8] sm:$0xff]
        %v479 = vld [vmem:[%s270 + $0x2f0] sm:$0xff]
        %v480 = vld [vmem:[%s270 + $0x2f8] sm:$0xff]
        %v481 = vld [vmem:[%s270 + $0x300] sm:$0xff]
        %v482 = vld [vmem:[%s270 + $0x308] sm:$0xff]
        %v483 = vld [vmem:[%s270 + $0x310] sm:$0xff]
        %v484 = vld [vmem:[%s270 + $0x318] sm:$0xff]
        %v485 = vld [vmem:[%s270 + $0x320] sm:$0xff]
        %v486 = vld [vmem:[%s270 + $0x328] sm:$0xff]
        %v487 = vld [vmem:[%s270 + $0x330] sm:$0xff]
        %v488 = vld [vmem:[%s270 + $0x338] sm:$0xff]
        %v489 = vld [vmem:[%s270 + $0x340] sm:$0xff]
        %v490 = vld [vmem:[%s270 + $0x348] sm:$0xff]
        %v491 = vld [vmem:[%s270 + $0x350] sm:$0xff]
        %v492 = vld [vmem:[%s270 + $0x358] sm:$0xff]
        %v493 = vld [vmem:[%s270 + $0x360] sm:$0xff]
        %v494 = vld [vmem:[%s270 + $0x368] sm:$0xff]
        %v495 = vld [vmem:[%s270 + $0x370] sm:$0xff]
        %v496 = vld [vmem:[%s270 + $0x378] sm:$0xff]
        %v497 = vld [vmem:[%s270 + $0x380] sm:$0xff]
        %v498 = vld [vmem:[%s270 + $0x388] sm:$0xff]
        %v499 = vld [vmem:[%s270 + $0x390] sm:$0xff]
        %v500 = vld [vmem:[%s270 + $0x398] sm:$0xff]
        %v501 = vld [vmem:[%s270 + $0x3a0] sm:$0xff]
        %v502 = vld [vmem:[%s270 + $0x3a8] sm:$0xff]
        %v503 = vld [vmem:[%s270 + $0x3b0] sm:$0xff]
        %v504 = vld [vmem:[%s270 + $0x3b8] sm:$0xff]
        %v505 = vld [vmem:[%s270 + $0x3c0] sm:$0xff]
        %v506 = vld [vmem:[%s270 + $0x3c8] sm:$0xff]
        %v507 = vld [vmem:[%s270 + $0x3d0] sm:$0xff]
        %v508 = vld [vmem:[%s270 + $0x3d8] sm:$0xff]
        %v509 = vld [vmem:[%s270 + $0x3e0] sm:$0xff]
        %v510 = vld [vmem:[%s270 + $0x3e8] sm:$0xff]
        %v511 = vld [vmem:[%s270 + $0x3f0] sm:$0xff]
        %v512 = vld [vmem:[%s270 + $0x3f8] sm:$0xff]
        %v513 = vld [vmem:[%s270 + $0x400] sm:$0xff]
        %v514 = vld [vmem:[%s270 + $0x408] sm:$0xff]
        %v515 = vld [vmem:[%s270 + $0x410] sm:$0xff]
        %v516 = vld [vmem:[%s270 + $0x418] sm:$0xff]
        %v517 = vld [vmem:[%s270 + $0x420] sm:$0xff]
        %v518 = vld [vmem:[%s270 + $0x428] sm:$0xff]
        %v519 = vld [vmem:[%s270 + $0x430] sm:$0xff]
        %v520 = vld [vmem:[%s270 + $0x438] sm:$0xff]
        %v521 = vld [vmem:[%s270 + $0x440] sm:$0xff]
        %v522 = vld [vmem:[%s270 + $0x448] sm:$0xff]
        %v523 = vld [vmem:[%s270 + $0x450] sm:$0xff]
        %v524 = vld [vmem:[%s270 + $0x458] sm:$0xff]
        %v525 = vld [vmem:[%s270 + $0x460] sm:$0xff]
        %v526 = vld [vmem:[%s270 + $0x468] sm:$0xff]
        %v527 = vld [vmem:[%s270 + $0x470] sm:$0xff]
        %v528 = vld [vmem:[%s270 + $0x478] sm:$0xff]
        %v529 = vld [vmem:[%s270 + $0x480] sm:$0xff]
        %v530 = vld [vmem:[%s270 + $0x488] sm:$0xff]
        %v531 = vld [vmem:[%s270 + $0x490] sm:$0xff]
        %v532 = vld [vmem:[%s270 + $0x498] sm:$0xff]
        %v533 = vld [vmem:[%s270 + $0x4a0] sm:$0xff]
        %v534 = vld [vmem:[%s270 + $0x4a8] sm:$0xff]
        %v535 = vld [vmem:[%s270 + $0x4b0] sm:$0xff]
        %v536 = vld [vmem:[%s270 + $0x4b8] sm:$0xff]
        %v537 = vld [vmem:[%s270 + $0x4c0] sm:$0xff]
        %v538 = vld [vmem:[%s270 + $0x4c8] sm:$0xff]
        %v539 = vld [vmem:[%s270 + $0x4d0] sm:$0xff]
        %v540 = vld [vmem:[%s270 + $0x4d8] sm:$0xff]
        %v541 = vld [vmem:[%s270 + $0x4e0] sm:$0xff]
        %v542 = vld [vmem:[%s270 + $0x4e8] sm:$0xff]
        %v543 = vld [vmem:[%s270 + $0x4f0] sm:$0xff]
        %v544 = vld [vmem:[%s270 + $0x4f8] sm:$0xff]
        %v545 = vld [vmem:[%s270 + $0x500] sm:$0xff]
        %v546 = vld [vmem:[%s270 + $0x508] sm:$0xff]
        %v547 = vld [vmem:[%s270 + $0x510] sm:$0xff]
        %v548 = vld [vmem:[%s270 + $0x518] sm:$0xff]
        %v549 = vld [vmem:[%s270 + $0x520] sm:$0xff]
        %v550 = vld [vmem:[%s270 + $0x528] sm:$0xff]
        %v551 = vld [vmem:[%s270 + $0x530] sm:$0xff]
        %v552 = vld [vmem:[%s270 + $0x538] sm:$0xff]
        %v553 = vld [vmem:[%s270 + $0x540] sm:$0xff]
        %v554 = vld [vmem:[%s270 + $0x548] sm:$0xff]
        %v555 = vld [vmem:[%s270 + $0x550] sm:$0xff]
        %v556 = vld [vmem:[%s270 + $0x558] sm:$0xff]
        %v557 = vld [vmem:[%s270 + $0x560] sm:$0xff]
        %v558 = vld [vmem:[%s270 + $0x568] sm:$0xff]
        %v559 = vld [vmem:[%s270 + $0x570] sm:$0xff]
        %v560 = vld [vmem:[%s270 + $0x578] sm:$0xff]
        %v561 = vld [vmem:[%s270 + $0x580] sm:$0xff]
        %v562 = vld [vmem:[%s270 + $0x588] sm:$0xff]
        %v563 = vld [vmem:[%s270 + $0x590] sm:$0xff]
        %v564 = vld [vmem:[%s270 + $0x598] sm:$0xff]
        %v565 = vld [vmem:[%s270 + $0x5a0] sm:$0xff]
        %v566 = vld [vmem:[%s270 + $0x5a8] sm:$0xff]
        %v567 = vld [vmem:[%s270 + $0x5b0] sm:$0xff]
        %v568 = vld [vmem:[%s270 + $0x5b8] sm:$0xff]
        %v569 = vld [vmem:[%s270 + $0x5c0] sm:$0xff]
        %v570 = vld [vmem:[%s270 + $0x5c8] sm:$0xff]
        %v571 = vld [vmem:[%s270 + $0x5d0] sm:$0xff]
        %v572 = vld [vmem:[%s270 + $0x5d8] sm:$0xff]
        %v573 = vld [vmem:[%s270 + $0x5e0] sm:$0xff]
        %v574 = vld [vmem:[%s270 + $0x5e8] sm:$0xff]
        %v575 = vld [vmem:[%s270 + $0x5f0] sm:$0xff]
        %v576 = vld [vmem:[%s270 + $0x5f8] sm:$0xff]
        %v577 = vld [vmem:[%s270 + $0x600] sm:$0xff]
        %v578 = vld [vmem:[%s270 + $0x608] sm:$0xff]
        %v579 = vld [vmem:[%s270 + $0x610] sm:$0xff]
        %v580 = vld [vmem:[%s270 + $0x618] sm:$0xff]
        %v581 = vld [vmem:[%s270 + $0x620] sm:$0xff]
        %v582 = vld [vmem:[%s270 + $0x628] sm:$0xff]
        %v583 = vld [vmem:[%s270 + $0x630] sm:$0xff]
        %v584 = vld [vmem:[%s270 + $0x638] sm:$0xff]
        %v585 = vld [vmem:[%s270 + $0x640] sm:$0xff]
        %v586 = vld [vmem:[%s270 + $0x648] sm:$0xff]
        %v587 = vld [vmem:[%s270 + $0x650] sm:$0xff]
        %v588 = vld [vmem:[%s270 + $0x658] sm:$0xff]
        %v589 = vld [vmem:[%s270 + $0x660] sm:$0xff]
        %v590 = vld [vmem:[%s270 + $0x668] sm:$0xff]
        %v591 = vld [vmem:[%s270 + $0x670] sm:$0xff]
        %v592 = vld [vmem:[%s270 + $0x678] sm:$0xff]
        %v593 = vld [vmem:[%s270 + $0x680] sm:$0xff]
        %v594 = vld [vmem:[%s270 + $0x688] sm:$0xff]
        %v595 = vld [vmem:[%s270 + $0x690] sm:$0xff]
        %v596 = vld [vmem:[%s270 + $0x698] sm:$0xff]
        %v597 = vld [vmem:[%s270 + $0x6a0] sm:$0xff]
        %v598 = vld [vmem:[%s270 + $0x6a8] sm:$0xff]
        %v599 = vld [vmem:[%s270 + $0x6b0] sm:$0xff]
        %v600 = vld [vmem:[%s270 + $0x6b8] sm:$0xff]
        %v601 = vld [vmem:[%s270 + $0x6c0] sm:$0xff]
        %v602 = vld [vmem:[%s270 + $0x6c8] sm:$0xff]
        %v603 = vld [vmem:[%s270 + $0x6d0] sm:$0xff]
        %v604 = vld [vmem:[%s270 + $0x6d8] sm:$0xff]
        %v605 = vld [vmem:[%s270 + $0x6e0] sm:$0xff]
        %v606 = vld [vmem:[%s270 + $0x6e8] sm:$0xff]
        %v607 = vld [vmem:[%s270 + $0x6f0] sm:$0xff]
        %v608 = vld [vmem:[%s270 + $0x6f8] sm:$0xff]
        %v609 = vld [vmem:[%s270 + $0x700] sm:$0xff]
        %v610 = vld [vmem:[%s270 + $0x708] sm:$0xff]
        %v611 = vld [vmem:[%s270 + $0x710] sm:$0xff]
        %v612 = vld [vmem:[%s270 + $0x718] sm:$0xff]
        %v613 = vld [vmem:[%s270 + $0x720] sm:$0xff]
        %v614 = vld [vmem:[%s270 + $0x728] sm:$0xff]
        %v615 = vld [vmem:[%s270 + $0x730] sm:$0xff]
        %v616 = vld [vmem:[%s270 + $0x738] sm:$0xff]
        %v617 = vld [vmem:[%s270 + $0x740] sm:$0xff]
        %v618 = vld [vmem:[%s270 + $0x748] sm:$0xff]
        %v619 = vld [vmem:[%s270 + $0x750] sm:$0xff]
        %v620 = vld [vmem:[%s270 + $0x758] sm:$0xff]
        %v621 = vld [vmem:[%s270 + $0x760] sm:$0xff]
        %v622 = vld [vmem:[%s270 + $0x768] sm:$0xff]
        %v623 = vld [vmem:[%s270 + $0x770] sm:$0xff]
        %v624 = vld [vmem:[%s270 + $0x778] sm:$0xff]
        %v625 = vld [vmem:[%s270 + $0x780] sm:$0xff]
        %v626 = vld [vmem:[%s270 + $0x788] sm:$0xff]
        %v627 = vld [vmem:[%s270 + $0x790] sm:$0xff]
        %v628 = vld [vmem:[%s270 + $0x798] sm:$0xff]
        %v629 = vld [vmem:[%s270 + $0x7a0] sm:$0xff]
        %v630 = vld [vmem:[%s270 + $0x7a8] sm:$0xff]
        %v631 = vld [vmem:[%s270 + $0x7b0] sm:$0xff]
        %v632 = vld [vmem:[%s270 + $0x7b8] sm:$0xff]
        %v633 = vld [vmem:[%s270 + $0x7c0] sm:$0xff]
        %v634 = vld [vmem:[%s270 + $0x7c8] sm:$0xff]
        %v635 = vld [vmem:[%s270 + $0x7d0] sm:$0xff]
        %v636 = vld [vmem:[%s270 + $0x7d8] sm:$0xff]
        %v637 = vld [vmem:[%s270 + $0x7e0] sm:$0xff]
        %v638 = vld [vmem:[%s270 + $0x7e8] sm:$0xff]
        %v639 = vld [vmem:[%s270 + $0x7f0] sm:$0xff]
        %v640 = vld [vmem:[%s270 + $0x7f8] sm:$0xff]
        %v641 = vld [vmem:[%s270 + $0x800] sm:$0xff]
        %v642 = vld [vmem:[%s270 + $0x808] sm:$0xff]
        %v643 = vld [vmem:[%s270 + $0x810] sm:$0xff]
        %v644 = vld [vmem:[%s270 + $0x818] sm:$0xff]
        %v645 = vld [vmem:[%s270 + $0x820] sm:$0xff]
        %v646 = vld [vmem:[%s270 + $0x828] sm:$0xff]
        %v647 = vld [vmem:[%s270 + $0x830] sm:$0xff]
        %v648 = vld [vmem:[%s270 + $0x838] sm:$0xff]
        %v649 = vld [vmem:[%s270 + $0x840] sm:$0xff]
        %v650 = vld [vmem:[%s270 + $0x848] sm:$0xff]
        %v651 = vld [vmem:[%s270 + $0x850] sm:$0xff]
        %v652 = vld [vmem:[%s270 + $0x858] sm:$0xff]
        %v653 = vld [vmem:[%s270 + $0x860] sm:$0xff]
        %v654 = vld [vmem:[%s270 + $0x868] sm:$0xff]
        %v655 = vld [vmem:[%s270 + $0x870] sm:$0xff]
        %v656 = vld [vmem:[%s270 + $0x878] sm:$0xff]
        %v657 = vld [vmem:[%s270 + $0x880] sm:$0xff]
        %v658 = vld [vmem:[%s270 + $0x888] sm:$0xff]
        %v659 = vld [vmem:[%s270 + $0x890] sm:$0xff]
        %v660 = vld [vmem:[%s270 + $0x898] sm:$0xff]
        %v661 = vld [vmem:[%s270 + $0x8a0] sm:$0xff]
        %v662 = vld [vmem:[%s270 + $0x8a8] sm:$0xff]
        %v663 = vld [vmem:[%s270 + $0x8b0] sm:$0xff]
        %v664 = vld [vmem:[%s270 + $0x8b8] sm:$0xff]
        %v665 = vld [vmem:[%s270 + $0x8c0] sm:$0xff]
        %v666 = vld [vmem:[%s270 + $0x8c8] sm:$0xff]
        %v667 = vld [vmem:[%s270 + $0x8d0] sm:$0xff]
        %v668 = vld [vmem:[%s270 + $0x8d8] sm:$0xff]
        %v669 = vld [vmem:[%s270 + $0x8e0] sm:$0xff]
        %v670 = vld [vmem:[%s270 + $0x8e8] sm:$0xff]
        %v671 = vld [vmem:[%s270 + $0x8f0] sm:$0xff]
        %v672 = vld [vmem:[%s270 + $0x8f8] sm:$0xff]
        %v673 = vld [vmem:[%s270 + $0x900] sm:$0xff]
        %v674 = vld [vmem:[%s270 + $0x908] sm:$0xff]
        %v675 = vld [vmem:[%s270 + $0x910] sm:$0xff]
        %v676 = vld [vmem:[%s270 + $0x918] sm:$0xff]
        %v677 = vld [vmem:[%s270 + $0x920] sm:$0xff]
        %v678 = vld [vmem:[%s270 + $0x928] sm:$0xff]
        %v679 = vld [vmem:[%s270 + $0x930] sm:$0xff]
        %v680 = vld [vmem:[%s270 + $0x938] sm:$0xff]
        %v681 = vld [vmem:[%s270 + $0x940] sm:$0xff]
        %v682 = vld [vmem:[%s270 + $0x948] sm:$0xff]
        %v683 = vld [vmem:[%s270 + $0x950] sm:$0xff]
        %v684 = vld [vmem:[%s270 + $0x958] sm:$0xff]
        %v685 = vld [vmem:[%s270 + $0x960] sm:$0xff]
        %v686 = vld [vmem:[%s270 + $0x968] sm:$0xff]
        %v687 = vld [vmem:[%s270 + $0x970] sm:$0xff]
        %v688 = vld [vmem:[%s270 + $0x978] sm:$0xff]
        %v689 = vld [vmem:[%s270 + $0x980] sm:$0xff]
        %v690 = vld [vmem:[%s270 + $0x988] sm:$0xff]
        %v691 = vld [vmem:[%s270 + $0x990] sm:$0xff]
        %v692 = vld [vmem:[%s270 + $0x998] sm:$0xff]
        %v693 = vld [vmem:[%s270 + $0x9a0] sm:$0xff]
        %v694 = vld [vmem:[%s270 + $0x9a8] sm:$0xff]
        %v695 = vld [vmem:[%s270 + $0x9b0] sm:$0xff]
        %v696 = vld [vmem:[%s270 + $0x9b8] sm:$0xff]
        %v697 = vld [vmem:[%s270 + $0x9c0] sm:$0xff]
        %v698 = vld [vmem:[%s270 + $0x9c8] sm:$0xff]
        %v699 = vld [vmem:[%s270 + $0x9d0] sm:$0xff]
        %v700 = vld [vmem:[%s270 + $0x9d8] sm:$0xff]
        %v701 = vld [vmem:[%s270 + $0x9e0] sm:$0xff]
        %v702 = vld [vmem:[%s270 + $0x9e8] sm:$0xff]
        %v703 = vld [vmem:[%s270 + $0x9f0] sm:$0xff]
        %v704 = vld [vmem:[%s270 + $0x9f8] sm:$0xff]
        %v705 = vld [vmem:[%s270 + $0xa00] sm:$0xff]
        %v706 = vld [vmem:[%s270 + $0xa08] sm:$0xff]
        %v707 = vld [vmem:[%s270 + $0xa10] sm:$0xff]
        %v708 = vld [vmem:[%s270 + $0xa18] sm:$0xff]
        %v709 = vld [vmem:[%s270 + $0xa20] sm:$0xff]
        %v710 = vld [vmem:[%s270 + $0xa28] sm:$0xff]
        %v711 = vld [vmem:[%s270 + $0xa30] sm:$0xff]
        %v712 = vld [vmem:[%s270 + $0xa38] sm:$0xff]
        %v713 = vld [vmem:[%s270 + $0xa40] sm:$0xff]
        %v714 = vld [vmem:[%s270 + $0xa48] sm:$0xff]
        %v715 = vld [vmem:[%s270 + $0xa50] sm:$0xff]
        %v716 = vld [vmem:[%s270 + $0xa58] sm:$0xff]
        %v717 = vld [vmem:[%s270 + $0xa60] sm:$0xff]
        %v718 = vld [vmem:[%s270 + $0xa68] sm:$0xff]
        %v719 = vld [vmem:[%s270 + $0xa70] sm:$0xff]
        %v720 = vld [vmem:[%s270 + $0xa78] sm:$0xff]
        %v721 = vld [vmem:[%s270 + $0xa80] sm:$0xff]
        %v722 = vld [vmem:[%s270 + $0xa88] sm:$0xff]
        %v723 = vld [vmem:[%s270 + $0xa90] sm:$0xff]
        %v724 = vld [vmem:[%s270 + $0xa98] sm:$0xff]
        %v725 = vld [vmem:[%s270 + $0xaa0] sm:$0xff]
        %v726 = vld [vmem:[%s270 + $0xaa8] sm:$0xff]
        %v727 = vld [vmem:[%s270 + $0xab0] sm:$0xff]
        %v728 = vld [vmem:[%s270 + $0xab8] sm:$0xff]
        %v729 = vld [vmem:[%s270 + $0xac0] sm:$0xff]
        %v730 = vld [vmem:[%s270 + $0xac8] sm:$0xff]
        %v731 = vld [vmem:[%s270 + $0xad0] sm:$0xff]
        %v732 = vld [vmem:[%s270 + $0xad8] sm:$0xff]
        %v733 = vld [vmem:[%s270 + $0xae0] sm:$0xff]
        %v734 = vld [vmem:[%s270 + $0xae8] sm:$0xff]
        %v735 = vld [vmem:[%s270 + $0xaf0] sm:$0xff]
        %v736 = vld [vmem:[%s270 + $0xaf8] sm:$0xff]
        %v737 = vld [vmem:[%s270 + $0xb00] sm:$0xff]
        %v738 = vld [vmem:[%s270 + $0xb08] sm:$0xff]
        %v739 = vld [vmem:[%s270 + $0xb10] sm:$0xff]
        %v740 = vld [vmem:[%s270 + $0xb18] sm:$0xff]
        %v741 = vld [vmem:[%s270 + $0xb20] sm:$0xff]
        %v742 = vld [vmem:[%s270 + $0xb28] sm:$0xff]
        %v743 = vld [vmem:[%s270 + $0xb30] sm:$0xff]
        %v744 = vld [vmem:[%s270 + $0xb38] sm:$0xff]
        %v745 = vld [vmem:[%s270 + $0xb40] sm:$0xff]
        %v746 = vld [vmem:[%s270 + $0xb48] sm:$0xff]
        %v747 = vld [vmem:[%s270 + $0xb50] sm:$0xff]
        %v748 = vld [vmem:[%s270 + $0xb58] sm:$0xff]
        %v749 = vld [vmem:[%s270 + $0xb60] sm:$0xff]
        %v750 = vld [vmem:[%s270 + $0xb68] sm:$0xff]
        %v751 = vld [vmem:[%s270 + $0xb70] sm:$0xff]
        %v752 = vld [vmem:[%s270 + $0xb78] sm:$0xff]
        %v753 = vld [vmem:[%s270 + $0xb80] sm:$0xff]
        %v754 = vld [vmem:[%s270 + $0xb88] sm:$0xff]
        %v755 = vld [vmem:[%s270 + $0xb90] sm:$0xff]
        %v756 = vld [vmem:[%s270 + $0xb98] sm:$0xff]
        %v757 = vld [vmem:[%s270 + $0xba0] sm:$0xff]
        %v758 = vld [vmem:[%s270 + $0xba8] sm:$0xff]
        %v759 = vld [vmem:[%s270 + $0xbb0] sm:$0xff]
        %v760 = vld [vmem:[%s270 + $0xbb8] sm:$0xff]
        %v761 = vld [vmem:[%s270 + $0xbc0] sm:$0xff]
        %v762 = vld [vmem:[%s270 + $0xbc8] sm:$0xff]
        %v763 = vld [vmem:[%s270 + $0xbd0] sm:$0xff]
        %v764 = vld [vmem:[%s270 + $0xbd8] sm:$0xff]
        %v765 = vld [vmem:[%s270 + $0xbe0] sm:$0xff]
        %v766 = vld [vmem:[%s270 + $0xbe8] sm:$0xff]
        %v767 = vld [vmem:[%s270 + $0xbf0] sm:$0xff]
        %v768 = vld [vmem:[%s270 + $0xbf8] sm:$0xff]
        %v769 = vld [vmem:[%s270 + $0xc00] sm:$0xff]
        %v770 = vld [vmem:[%s270 + $0xc08] sm:$0xff]
        %v771 = vld [vmem:[%s270 + $0xc10] sm:$0xff]
        %v772 = vld [vmem:[%s270 + $0xc18] sm:$0xff]
        %v773 = vld [vmem:[%s270 + $0xc20] sm:$0xff]
        %v774 = vld [vmem:[%s270 + $0xc28] sm:$0xff]
        %v775 = vld [vmem:[%s270 + $0xc30] sm:$0xff]
        %v776 = vld [vmem:[%s270 + $0xc38] sm:$0xff]
        %v777 = vld [vmem:[%s270 + $0xc40] sm:$0xff]
        %v778 = vld [vmem:[%s270 + $0xc48] sm:$0xff]
        %v779 = vld [vmem:[%s270 + $0xc50] sm:$0xff]
        %v780 = vld [vmem:[%s270 + $0xc58] sm:$0xff]
        %v781 = vld [vmem:[%s270 + $0xc60] sm:$0xff]
        %v782 = vld [vmem:[%s270 + $0xc68] sm:$0xff]
        %v783 = vld [vmem:[%s270 + $0xc70] sm:$0xff]
        %v784 = vld [vmem:[%s270 + $0xc78] sm:$0xff]
        %v785 = vld [vmem:[%s270 + $0xc80] sm:$0xff]
        %v786 = vld [vmem:[%s270 + $0xc88] sm:$0xff]
        %v787 = vld [vmem:[%s270 + $0xc90] sm:$0xff]
        %v788 = vld [vmem:[%s270 + $0xc98] sm:$0xff]
        %v789 = vld [vmem:[%s270 + $0xca0] sm:$0xff]
        %v790 = vld [vmem:[%s270 + $0xca8] sm:$0xff]
        %v791 = vld [vmem:[%s270 + $0xcb0] sm:$0xff]
        %v792 = vld [vmem:[%s270 + $0xcb8] sm:$0xff]
        %v793 = vld [vmem:[%s270 + $0xcc0] sm:$0xff]
        %v794 = vld [vmem:[%s270 + $0xcc8] sm:$0xff]
        %v795 = vld [vmem:[%s270 + $0xcd0] sm:$0xff]
        %v796 = vld [vmem:[%s270 + $0xcd8] sm:$0xff]
        %v797 = vld [vmem:[%s270 + $0xce0] sm:$0xff]
        %v798 = vld [vmem:[%s270 + $0xce8] sm:$0xff]
        %v799 = vld [vmem:[%s270 + $0xcf0] sm:$0xff]
        %v800 = vld [vmem:[%s270 + $0xcf8] sm:$0xff]
        %v801 = vld [vmem:[%s270 + $0xd00] sm:$0xff]
        %v802 = vld [vmem:[%s270 + $0xd08] sm:$0xff]
        %v803 = vld [vmem:[%s270 + $0xd10] sm:$0xff]
        %v804 = vld [vmem:[%s270 + $0xd18] sm:$0xff]
        %v805 = vld [vmem:[%s270 + $0xd20] sm:$0xff]
        %v806 = vld [vmem:[%s270 + $0xd28] sm:$0xff]
        %v807 = vld [vmem:[%s270 + $0xd30] sm:$0xff]
        %v808 = vld [vmem:[%s270 + $0xd38] sm:$0xff]
        %v809 = vld [vmem:[%s270 + $0xd40] sm:$0xff]
        %v810 = vld [vmem:[%s270 + $0xd48] sm:$0xff]
        %v811 = vld [vmem:[%s270 + $0xd50] sm:$0xff]
        %v812 = vld [vmem:[%s270 + $0xd58] sm:$0xff]
        %v813 = vld [vmem:[%s270 + $0xd60] sm:$0xff]
        %v814 = vld [vmem:[%s270 + $0xd68] sm:$0xff]
        %v815 = vld [vmem:[%s270 + $0xd70] sm:$0xff]
        %v816 = vld [vmem:[%s270 + $0xd78] sm:$0xff]
        %v817 = vld [vmem:[%s270 + $0xd80] sm:$0xff]
        %v818 = vld [vmem:[%s270 + $0xd88] sm:$0xff]
        %v819 = vld [vmem:[%s270 + $0xd90] sm:$0xff]
        %v820 = vld [vmem:[%s270 + $0xd98] sm:$0xff]
        %v821 = vld [vmem:[%s270 + $0xda0] sm:$0xff]
        %v822 = vld [vmem:[%s270 + $0xda8] sm:$0xff]
        %v823 = vld [vmem:[%s270 + $0xdb0] sm:$0xff]
        %v824 = vld [vmem:[%s270 + $0xdb8] sm:$0xff]
        %v825 = vld [vmem:[%s270 + $0xdc0] sm:$0xff]
        %v826 = vld [vmem:[%s270 + $0xdc8] sm:$0xff]
        %v827 = vld [vmem:[%s270 + $0xdd0] sm:$0xff]
        %v828 = vld [vmem:[%s270 + $0xdd8] sm:$0xff]
        %v829 = vld [vmem:[%s270 + $0xde0] sm:$0xff]
        %v830 = vld [vmem:[%s270 + $0xde8] sm:$0xff]
        %v831 = vld [vmem:[%s270 + $0xdf0] sm:$0xff]
        %v832 = vld [vmem:[%s270 + $0xdf8] sm:$0xff]
        %v833 = vld [vmem:[%s270 + $0xe00] sm:$0xff]
        %v834 = vld [vmem:[%s270 + $0xe08] sm:$0xff]
        %v835 = vld [vmem:[%s270 + $0xe10] sm:$0xff]
        %v836 = vld [vmem:[%s270 + $0xe18] sm:$0xff]
        %v837 = vld [vmem:[%s270 + $0xe20] sm:$0xff]
        %v838 = vld [vmem:[%s270 + $0xe28] sm:$0xff]
        %v839 = vld [vmem:[%s270 + $0xe30] sm:$0xff]
        %v840 = vld [vmem:[%s270 + $0xe38] sm:$0xff]
        %v841 = vld [vmem:[%s270 + $0xe40] sm:$0xff]
        %v842 = vld [vmem:[%s270 + $0xe48] sm:$0xff]
        %v843 = vld [vmem:[%s270 + $0xe50] sm:$0xff]
        %v844 = vld [vmem:[%s270 + $0xe58] sm:$0xff]
        %v845 = vld [vmem:[%s270 + $0xe60] sm:$0xff]
        %v846 = vld [vmem:[%s270 + $0xe68] sm:$0xff]
        %v847 = vld [vmem:[%s270 + $0xe70] sm:$0xff]
        %v848 = vld [vmem:[%s270 + $0xe78] sm:$0xff]
        %v849 = vld [vmem:[%s270 + $0xe80] sm:$0xff]
        %v850 = vld [vmem:[%s270 + $0xe88] sm:$0xff]
        %v851 = vld [vmem:[%s270 + $0xe90] sm:$0xff]
        %v852 = vld [vmem:[%s270 + $0xe98] sm:$0xff]
        %v853 = vld [vmem:[%s270 + $0xea0] sm:$0xff]
        %v854 = vld [vmem:[%s270 + $0xea8] sm:$0xff]
        %v855 = vld [vmem:[%s270 + $0xeb0] sm:$0xff]
        %v856 = vld [vmem:[%s270 + $0xeb8] sm:$0xff]
        %v857 = vld [vmem:[%s270 + $0xec0] sm:$0xff]
        %v858 = vld [vmem:[%s270 + $0xec8] sm:$0xff]
        %v859 = vld [vmem:[%s270 + $0xed0] sm:$0xff]
        %v860 = vld [vmem:[%s270 + $0xed8] sm:$0xff]
        %v861 = vld [vmem:[%s270 + $0xee0] sm:$0xff]
        %v862 = vld [vmem:[%s270 + $0xee8] sm:$0xff]
        %v863 = vld [vmem:[%s270 + $0xef0] sm:$0xff]
        %v864 = vld [vmem:[%s270 + $0xef8] sm:$0xff]
        %v865 = vld [vmem:[%s270 + $0xf00] sm:$0xff]
        %v866 = vld [vmem:[%s270 + $0xf08] sm:$0xff]
        %v867 = vld [vmem:[%s270 + $0xf10] sm:$0xff]
        %v868 = vld [vmem:[%s270 + $0xf18] sm:$0xff]
        %v869 = vld [vmem:[%s270 + $0xf20] sm:$0xff]
        %v870 = vld [vmem:[%s270 + $0xf28] sm:$0xff]
        %v871 = vld [vmem:[%s270 + $0xf30] sm:$0xff]
        %v872 = vld [vmem:[%s270 + $0xf38] sm:$0xff]
        %v873 = vld [vmem:[%s270 + $0xf40] sm:$0xff]
        %v874 = vld [vmem:[%s270 + $0xf48] sm:$0xff]
        %v875 = vld [vmem:[%s270 + $0xf50] sm:$0xff]
        %v876 = vld [vmem:[%s270 + $0xf58] sm:$0xff]
        %v877 = vld [vmem:[%s270 + $0xf60] sm:$0xff]
        %v878 = vld [vmem:[%s270 + $0xf68] sm:$0xff]
        %v879 = vld [vmem:[%s270 + $0xf70] sm:$0xff]
        %v880 = vld [vmem:[%s270 + $0xf78] sm:$0xff]
        %v881 = vld [vmem:[%s270 + $0xf80] sm:$0xff]
        %v882 = vld [vmem:[%s270 + $0xf88] sm:$0xff]
        %v883 = vld [vmem:[%s270 + $0xf90] sm:$0xff]
        %v884 = vld [vmem:[%s270 + $0xf98] sm:$0xff]
        %v885 = vld [vmem:[%s270 + $0xfa0] sm:$0xff]
        %v886 = vld [vmem:[%s270 + $0xfa8] sm:$0xff]
        %v887 = vld [vmem:[%s270 + $0xfb0] sm:$0xff]
        %v888 = vld [vmem:[%s270 + $0xfb8] sm:$0xff]
        %v889 = vld [vmem:[%s270 + $0xfc0] sm:$0xff]
        %v890 = vld [vmem:[%s270 + $0xfc8] sm:$0xff]
        %v891 = vld [vmem:[%s270 + $0xfd0] sm:$0xff]
        %v892 = vld [vmem:[%s270 + $0xfd8] sm:$0xff]
        %v893 = vld [vmem:[%s270 + $0xfe0] sm:$0xff]
        %v894 = vld [vmem:[%s270 + $0xfe8] sm:$0xff]
        %v895 = vld [vmem:[%s270 + $0xff0] sm:$0xff]
        %v896 = vld [vmem:[%s270 + $0xff8] sm:$0xff]
        %v897 = vld [vmem:[%s270 + $0x1000] sm:$0xff]
        %v898 = vld [vmem:[%s270 + $0x1008] sm:$0xff]
        %v899 = vld [vmem:[%s270 + $0x1010] sm:$0xff]
        %v900 = vld [vmem:[%s270 + $0x1018] sm:$0xff]
        %v901 = vld [vmem:[%s270 + $0x1020] sm:$0xff]
        %v902 = vld [vmem:[%s270 + $0x1028] sm:$0xff]
        %v903 = vld [vmem:[%s270 + $0x1030] sm:$0xff]
        %v904 = vld [vmem:[%s270 + $0x1038] sm:$0xff]
        %v905 = vld [vmem:[%s270 + $0x1040] sm:$0xff]
        %v906 = vld [vmem:[%s270 + $0x1048] sm:$0xff]
        %v907 = vld [vmem:[%s270 + $0x1050] sm:$0xff]
        %v908 = vld [vmem:[%s270 + $0x1058] sm:$0xff]
        %v909 = vld [vmem:[%s270 + $0x1060] sm:$0xff]
        %v910 = vld [vmem:[%s270 + $0x1068] sm:$0xff]
        %v911 = vld [vmem:[%s270 + $0x1070] sm:$0xff]
        %v912 = vld [vmem:[%s270 + $0x1078] sm:$0xff]
        %v913 = vld [vmem:[%s270 + $0x1080] sm:$0xff]
        %v914 = vld [vmem:[%s270 + $0x1088] sm:$0xff]
        %v915 = vld [vmem:[%s270 + $0x1090] sm:$0xff]
        %v916 = vld [vmem:[%s270 + $0x1098] sm:$0xff]
        %v917 = vld [vmem:[%s270 + $0x10a0] sm:$0xff]
        %v918 = vld [vmem:[%s270 + $0x10a8] sm:$0xff]
        %v919 = vld [vmem:[%s270 + $0x10b0] sm:$0xff]
        %v920 = vld [vmem:[%s270 + $0x10b8] sm:$0xff]
        %v921 = vld [vmem:[%s270 + $0x10c0] sm:$0xff]
        %v922 = vld [vmem:[%s270 + $0x10c8] sm:$0xff]
        %v923 = vld [vmem:[%s270 + $0x10d0] sm:$0xff]
        %v924 = vld [vmem:[%s270 + $0x10d8] sm:$0xff]
        %v925 = vld [vmem:[%s270 + $0x10e0] sm:$0xff]
        %v926 = vld [vmem:[%s270 + $0x10e8] sm:$0xff]
        %v927 = vld [vmem:[%s270 + $0x10f0] sm:$0xff]
        %v928 = vld [vmem:[%s270 + $0x10f8] sm:$0xff]
        %v929 = vld [vmem:[%s270 + $0x1100] sm:$0xff]
        %v930 = vld [vmem:[%s270 + $0x1108] sm:$0xff]
        %v931 = vld [vmem:[%s270 + $0x1110] sm:$0xff]
        %v932 = vld [vmem:[%s270 + $0x1118] sm:$0xff]
        %v933 = vld [vmem:[%s270 + $0x1120] sm:$0xff]
        %v934 = vld [vmem:[%s270 + $0x1128] sm:$0xff]
        %v935 = vld [vmem:[%s270 + $0x1130] sm:$0xff]
        %v936 = vld [vmem:[%s270 + $0x1138] sm:$0xff]
        %v937 = vld [vmem:[%s270 + $0x1140] sm:$0xff]
        %v938 = vld [vmem:[%s270 + $0x1148] sm:$0xff]
        %v939 = vld [vmem:[%s270 + $0x1150] sm:$0xff]
        %v940 = vld [vmem:[%s270 + $0x1158] sm:$0xff]
        %v941 = vld [vmem:[%s270 + $0x1160] sm:$0xff]
        %v942 = vld [vmem:[%s270 + $0x1168] sm:$0xff]
        %v943 = vld [vmem:[%s270 + $0x1170] sm:$0xff]
        %v944 = vld [vmem:[%s270 + $0x1178] sm:$0xff]
        %v945 = vld [vmem:[%s270 + $0x1180] sm:$0xff]
        %v946 = vld [vmem:[%s270 + $0x1188] sm:$0xff]
        %v947 = vld [vmem:[%s270 + $0x1190] sm:$0xff]
        %v948 = vld [vmem:[%s270 + $0x1198] sm:$0xff]
        %v949 = vld [vmem:[%s270 + $0x11a0] sm:$0xff]
        %v950 = vld [vmem:[%s270 + $0x11a8] sm:$0xff]
        %v951 = vld [vmem:[%s270 + $0x11b0] sm:$0xff]
        %v952 = vld [vmem:[%s270 + $0x11b8] sm:$0xff]
        %v953 = vld [vmem:[%s270 + $0x11c0] sm:$0xff]
        %v954 = vld [vmem:[%s270 + $0x11c8] sm:$0xff]
        %v955 = vld [vmem:[%s270 + $0x11d0] sm:$0xff]
        %v956 = vld [vmem:[%s270 + $0x11d8] sm:$0xff]
        %v957 = vld [vmem:[%s270 + $0x11e0] sm:$0xff]
        %v958 = vld [vmem:[%s270 + $0x11e8] sm:$0xff]
        %v959 = vld [vmem:[%s270 + $0x11f0] sm:$0xff]
        %v960 = vld [vmem:[%s270 + $0x11f8] sm:$0xff]
        %v961 = vld [vmem:[%s270 + $0x1200] sm:$0xff]
        %v962 = vld [vmem:[%s270 + $0x1208] sm:$0xff]
        %v963 = vld [vmem:[%s270 + $0x1210] sm:$0xff]
        %v964 = vld [vmem:[%s270 + $0x1218] sm:$0xff]
        %v965 = vld [vmem:[%s270 + $0x1220] sm:$0xff]
        %v966 = vld [vmem:[%s270 + $0x1228] sm:$0xff]
        %v967 = vld [vmem:[%s270 + $0x1230] sm:$0xff]
        %v968 = vld [vmem:[%s270 + $0x1238] sm:$0xff]
        %v969 = vld [vmem:[%s270 + $0x1240] sm:$0xff]
        %v970 = vld [vmem:[%s270 + $0x1248] sm:$0xff]
        %v971 = vld [vmem:[%s270 + $0x1250] sm:$0xff]
        %v972 = vld [vmem:[%s270 + $0x1258] sm:$0xff]
        %v973 = vld [vmem:[%s270 + $0x1260] sm:$0xff]
        %v974 = vld [vmem:[%s270 + $0x1268] sm:$0xff]
        %v975 = vld [vmem:[%s270 + $0x1270] sm:$0xff]
        %v976 = vld [vmem:[%s270 + $0x1278] sm:$0xff]
        %v977 = vld [vmem:[%s270 + $0x1280] sm:$0xff]
        %v978 = vld [vmem:[%s270 + $0x1288] sm:$0xff]
        %v979 = vld [vmem:[%s270 + $0x1290] sm:$0xff]
        %v980 = vld [vmem:[%s270 + $0x1298] sm:$0xff]
        %v981 = vld [vmem:[%s270 + $0x12a0] sm:$0xff]
        %v982 = vld [vmem:[%s270 + $0x12a8] sm:$0xff]
        %v983 = vld [vmem:[%s270 + $0x12b0] sm:$0xff]
        %v984 = vld [vmem:[%s270 + $0x12b8] sm:$0xff]
        %v985 = vld [vmem:[%s270 + $0x12c0] sm:$0xff]
        %v986 = vld [vmem:[%s270 + $0x12c8] sm:$0xff]
        %v987 = vld [vmem:[%s270 + $0x12d0] sm:$0xff]
        %v988 = vld [vmem:[%s270 + $0x12d8] sm:$0xff]
        %v989 = vld [vmem:[%s270 + $0x12e0] sm:$0xff]
        %v990 = vld [vmem:[%s270 + $0x12e8] sm:$0xff]
        %v991 = vld [vmem:[%s270 + $0x12f0] sm:$0xff]
        %v992 = vld [vmem:[%s270 + $0x12f8] sm:$0xff]
        %v993 = vld [vmem:[%s270 + $0x1300] sm:$0xff]
        %v994 = vld [vmem:[%s270 + $0x1308] sm:$0xff]
        %v995 = vld [vmem:[%s270 + $0x1310] sm:$0xff]
        %v996 = vld [vmem:[%s270 + $0x1318] sm:$0xff]
        %v997 = vld [vmem:[%s270 + $0x1320] sm:$0xff]
        %v998 = vld [vmem:[%s270 + $0x1328] sm:$0xff]
        %v999 = vld [vmem:[%s270 + $0x1330] sm:$0xff]
        %v1000 = vld [vmem:[%s270 + $0x1338] sm:$0xff]
        %v1001 = vld [vmem:[%s270 + $0x1340] sm:$0xff]
        %v1002 = vld [vmem:[%s270 + $0x1348] sm:$0xff]
        %v1003 = vld [vmem:[%s270 + $0x1350] sm:$0xff]
        %v1004 = vld [vmem:[%s270 + $0x1358] sm:$0xff]
        %v1005 = vld [vmem:[%s270 + $0x1360] sm:$0xff]
        %v1006 = vld [vmem:[%s270 + $0x1368] sm:$0xff]
        %v1007 = vld [vmem:[%s270 + $0x1370] sm:$0xff]
        %v1008 = vld [vmem:[%s270 + $0x1378] sm:$0xff]
        %v1009 = vld [vmem:[%s270 + $0x1380] sm:$0xff]
        %v1010 = vld [vmem:[%s270 + $0x1388] sm:$0xff]
        %v1011 = vld [vmem:[%s270 + $0x1390] sm:$0xff]
        %v1012 = vld [vmem:[%s270 + $0x1398] sm:$0xff]
        %v1013 = vld [vmem:[%s270 + $0x13a0] sm:$0xff]
        %v1014 = vld [vmem:[%s270 + $0x13a8] sm:$0xff]
        %v1015 = vld [vmem:[%s270 + $0x13b0] sm:$0xff]
        %v1016 = vld [vmem:[%s270 + $0x13b8] sm:$0xff]
        %v1017 = vld [vmem:[%s270 + $0x13c0] sm:$0xff]
        %v1018 = vld [vmem:[%s270 + $0x13c8] sm:$0xff]
        %v1019 = vld [vmem:[%s270 + $0x13d0] sm:$0xff]
        %v1020 = vld [vmem:[%s270 + $0x13d8] sm:$0xff]
        %v1021 = vld [vmem:[%s270 + $0x13e0] sm:$0xff]
        %v1022 = vld [vmem:[%s270 + $0x13e8] sm:$0xff]
        %v1023 = vld [vmem:[%s270 + $0x13f0] sm:$0xff]
        %v1024 = vld [vmem:[%s270 + $0x13f8] sm:$0xff]
        %v1025 = vld [vmem:[%s270 + $0x1400] sm:$0xff]
        %v1026 = vld [vmem:[%s270 + $0x1408] sm:$0xff]
        %v1027 = vld [vmem:[%s270 + $0x1410] sm:$0xff]
        %v1028 = vld [vmem:[%s270 + $0x1418] sm:$0xff]
        %v1029 = vld [vmem:[%s270 + $0x1420] sm:$0xff]
        %v1030 = vld [vmem:[%s270 + $0x1428] sm:$0xff]
        %v1031 = vld [vmem:[%s270 + $0x1430] sm:$0xff]
        %v1032 = vld [vmem:[%s270 + $0x1438] sm:$0xff]
        %v1033 = vld [vmem:[%s270 + $0x1440] sm:$0xff]
        %v1034 = vld [vmem:[%s270 + $0x1448] sm:$0xff]
        %v1035 = vld [vmem:[%s270 + $0x1450] sm:$0xff]
        %v1036 = vld [vmem:[%s270 + $0x1458] sm:$0xff]
        %v1037 = vld [vmem:[%s270 + $0x1460] sm:$0xff]
        %v1038 = vld [vmem:[%s270 + $0x1468] sm:$0xff]
        %v1039 = vld [vmem:[%s270 + $0x1470] sm:$0xff]
        %v1040 = vld [vmem:[%s270 + $0x1478] sm:$0xff]
        %v1041 = vld [vmem:[%s270 + $0x1480] sm:$0xff]
        %v1042 = vld [vmem:[%s270 + $0x1488] sm:$0xff]
        %v1043 = vld [vmem:[%s270 + $0x1490] sm:$0xff]
        %v1044 = vld [vmem:[%s270 + $0x1498] sm:$0xff]
        %v1045 = vld [vmem:[%s270 + $0x14a0] sm:$0xff]
        %v1046 = vld [vmem:[%s270 + $0x14a8] sm:$0xff]
        %v1047 = vld [vmem:[%s270 + $0x14b0] sm:$0xff]
        %v1048 = vld [vmem:[%s270 + $0x14b8] sm:$0xff]
        %v1049 = vld [vmem:[%s270 + $0x14c0] sm:$0xff]
        %v1050 = vld [vmem:[%s270 + $0x14c8] sm:$0xff]
        %v1051 = vld [vmem:[%s270 + $0x14d0] sm:$0xff]
        %v1052 = vld [vmem:[%s270 + $0x14d8] sm:$0xff]
        %v1053 = vld [vmem:[%s270 + $0x14e0] sm:$0xff]
        %v1054 = vld [vmem:[%s270 + $0x14e8] sm:$0xff]
        %v1055 = vld [vmem:[%s270 + $0x14f0] sm:$0xff]
        %v1056 = vld [vmem:[%s270 + $0x14f8] sm:$0xff]
        %v1057 = vld [vmem:[%s270 + $0x1500] sm:$0xff]
        %v1058 = vld [vmem:[%s270 + $0x1508] sm:$0xff]
        %v1059 = vld [vmem:[%s270 + $0x1510] sm:$0xff]
        %v1060 = vld [vmem:[%s270 + $0x1518] sm:$0xff]
        %v1061 = vld [vmem:[%s270 + $0x1520] sm:$0xff]
        %v1062 = vld [vmem:[%s270 + $0x1528] sm:$0xff]
        %v1063 = vld [vmem:[%s270 + $0x1530] sm:$0xff]
        %v1064 = vld [vmem:[%s270 + $0x1538] sm:$0xff]
        %v1065 = vld [vmem:[%s270 + $0x1540] sm:$0xff]
        %v1066 = vld [vmem:[%s270 + $0x1548] sm:$0xff]
        %v1067 = vld [vmem:[%s270 + $0x1550] sm:$0xff]
        %v1068 = vld [vmem:[%s270 + $0x1558] sm:$0xff]
        %v1069 = vld [vmem:[%s270 + $0x1560] sm:$0xff]
        %v1070 = vld [vmem:[%s270 + $0x1568] sm:$0xff]
        %v1071 = vld [vmem:[%s270 + $0x1570] sm:$0xff]
        %v1072 = vld [vmem:[%s270 + $0x1578] sm:$0xff]
        %v1073 = vld [vmem:[%s270 + $0x1580] sm:$0xff]
        %v1074 = vld [vmem:[%s270 + $0x1588] sm:$0xff]
        %v1075 = vld [vmem:[%s270 + $0x1590] sm:$0xff]
        %v1076 = vld [vmem:[%s270 + $0x1598] sm:$0xff]
        %v1077 = vld [vmem:[%s270 + $0x15a0] sm:$0xff]
        %v1078 = vld [vmem:[%s270 + $0x15a8] sm:$0xff]
        %v1079 = vld [vmem:[%s270 + $0x15b0] sm:$0xff]
        %v1080 = vld [vmem:[%s270 + $0x15b8] sm:$0xff]
        %v1081 = vld [vmem:[%s270 + $0x15c0] sm:$0xff]
        %v1082 = vld [vmem:[%s270 + $0x15c8] sm:$0xff]
        %v1083 = vld [vmem:[%s270 + $0x15d0] sm:$0xff]
        %v1084 = vld [vmem:[%s270 + $0x15d8] sm:$0xff]
        %v1085 = vld [vmem:[%s270 + $0x15e0] sm:$0xff]
        %v1086 = vld [vmem:[%s270 + $0x15e8] sm:$0xff]
        %v1087 = vld [vmem:[%s270 + $0x15f0] sm:$0xff]
        %v1088 = vld [vmem:[%s270 + $0x15f8] sm:$0xff]
        %v1089 = vld [vmem:[%s270 + $0x1600] sm:$0xff]
        %v1090 = vld [vmem:[%s270 + $0x1608] sm:$0xff]
        %v1091 = vld [vmem:[%s270 + $0x1610] sm:$0xff]
        %v1092 = vld [vmem:[%s270 + $0x1618] sm:$0xff]
        %v1093 = vld [vmem:[%s270 + $0x1620] sm:$0xff]
        %v1094 = vld [vmem:[%s270 + $0x1628] sm:$0xff]
        %v1095 = vld [vmem:[%s270 + $0x1630] sm:$0xff]
        %v1096 = vld [vmem:[%s270 + $0x1638] sm:$0xff]
        %v1097 = vld [vmem:[%s270 + $0x1640] sm:$0xff]
        %v1098 = vld [vmem:[%s270 + $0x1648] sm:$0xff]
        %v1099 = vld [vmem:[%s270 + $0x1650] sm:$0xff]
        %v1100 = vld [vmem:[%s270 + $0x1658] sm:$0xff]
        %v1101 = vld [vmem:[%s270 + $0x1660] sm:$0xff]
        %v1102 = vld [vmem:[%s270 + $0x1668] sm:$0xff]
        %v1103 = vld [vmem:[%s270 + $0x1670] sm:$0xff]
        %v1104 = vld [vmem:[%s270 + $0x1678] sm:$0xff]
        %v1105 = vld [vmem:[%s270 + $0x1680] sm:$0xff]
        %v1106 = vld [vmem:[%s270 + $0x1688] sm:$0xff]
        %v1107 = vld [vmem:[%s270 + $0x1690] sm:$0xff]
        %v1108 = vld [vmem:[%s270 + $0x1698] sm:$0xff]
        %v1109 = vld [vmem:[%s270 + $0x16a0] sm:$0xff]
        %v1110 = vld [vmem:[%s270 + $0x16a8] sm:$0xff]
        %v1111 = vld [vmem:[%s270 + $0x16b0] sm:$0xff]
        %v1112 = vld [vmem:[%s270 + $0x16b8] sm:$0xff]
        %v1113 = vld [vmem:[%s270 + $0x16c0] sm:$0xff]
        %v1114 = vld [vmem:[%s270 + $0x16c8] sm:$0xff]
        %v1115 = vld [vmem:[%s270 + $0x16d0] sm:$0xff]
        %v1116 = vld [vmem:[%s270 + $0x16d8] sm:$0xff]
        %v1117 = vld [vmem:[%s270 + $0x16e0] sm:$0xff]
        %v1118 = vld [vmem:[%s270 + $0x16e8] sm:$0xff]
        %v1119 = vld [vmem:[%s270 + $0x16f0] sm:$0xff]
        %v1120 = vld [vmem:[%s270 + $0x16f8] sm:$0xff]
        %v1121 = vld [vmem:[%s270 + $0x1700] sm:$0xff]
        %v1122 = vld [vmem:[%s270 + $0x1708] sm:$0xff]
        %v1123 = vld [vmem:[%s270 + $0x1710] sm:$0xff]
        %v1124 = vld [vmem:[%s270 + $0x1718] sm:$0xff]
        %v1125 = vld [vmem:[%s270 + $0x1720] sm:$0xff]
        %v1126 = vld [vmem:[%s270 + $0x1728] sm:$0xff]
        %v1127 = vld [vmem:[%s270 + $0x1730] sm:$0xff]
        %v1128 = vld [vmem:[%s270 + $0x1738] sm:$0xff]
        %v1129 = vld [vmem:[%s270 + $0x1740] sm:$0xff]
        %v1130 = vld [vmem:[%s270 + $0x1748] sm:$0xff]
        %v1131 = vld [vmem:[%s270 + $0x1750] sm:$0xff]
        %v1132 = vld [vmem:[%s270 + $0x1758] sm:$0xff]
        %v1133 = vld [vmem:[%s270 + $0x1760] sm:$0xff]
        %v1134 = vld [vmem:[%s270 + $0x1768] sm:$0xff]
        %v1135 = vld [vmem:[%s270 + $0x1770] sm:$0xff]
        %v1136 = vld [vmem:[%s270 + $0x1778] sm:$0xff]
        %v1137 = vld [vmem:[%s270 + $0x1780] sm:$0xff]
        %v1138 = vld [vmem:[%s270 + $0x1788] sm:$0xff]
        %v1139 = vld [vmem:[%s270 + $0x1790] sm:$0xff]
        %v1140 = vld [vmem:[%s270 + $0x1798] sm:$0xff]
        %v1141 = vld [vmem:[%s270 + $0x17a0] sm:$0xff]
        %v1142 = vld [vmem:[%s270 + $0x17a8] sm:$0xff]
        %v1143 = vld [vmem:[%s270 + $0x17b0] sm:$0xff]
        %v1144 = vld [vmem:[%s270 + $0x17b8] sm:$0xff]
        %v1145 = vld [vmem:[%s270 + $0x17c0] sm:$0xff]
        %v1146 = vld [vmem:[%s270 + $0x17c8] sm:$0xff]
        %v1147 = vld [vmem:[%s270 + $0x17d0] sm:$0xff]
        %v1148 = vld [vmem:[%s270 + $0x17d8] sm:$0xff]
        %v1149 = vld [vmem:[%s270 + $0x17e0] sm:$0xff]
        %v1150 = vld [vmem:[%s270 + $0x17e8] sm:$0xff]
        %v1151 = vld [vmem:[%s270 + $0x17f0] sm:$0xff]
        %v1152 = vld [vmem:[%s270 + $0x17f8] sm:$0xff]
        %v1153 = vld [vmem:[%s270 + $0x1800] sm:$0xff]
        %v1154 = vld [vmem:[%s270 + $0x1808] sm:$0xff]
        %v1155 = vld [vmem:[%s270 + $0x1810] sm:$0xff]
        %v1156 = vld [vmem:[%s270 + $0x1818] sm:$0xff]
        %v1157 = vld [vmem:[%s270 + $0x1820] sm:$0xff]
        %v1158 = vld [vmem:[%s270 + $0x1828] sm:$0xff]
        %v1159 = vld [vmem:[%s270 + $0x1830] sm:$0xff]
        %v1160 = vld [vmem:[%s270 + $0x1838] sm:$0xff]
        %v1161 = vld [vmem:[%s270 + $0x1840] sm:$0xff]
        %v1162 = vld [vmem:[%s270 + $0x1848] sm:$0xff]
        %v1163 = vld [vmem:[%s270 + $0x1850] sm:$0xff]
        %v1164 = vld [vmem:[%s270 + $0x1858] sm:$0xff]
        %v1165 = vld [vmem:[%s270 + $0x1860] sm:$0xff]
        %v1166 = vld [vmem:[%s270 + $0x1868] sm:$0xff]
        %v1167 = vld [vmem:[%s270 + $0x1870] sm:$0xff]
        %v1168 = vld [vmem:[%s270 + $0x1878] sm:$0xff]
        %v1169 = vld [vmem:[%s270 + $0x1880] sm:$0xff]
        %v1170 = vld [vmem:[%s270 + $0x1888] sm:$0xff]
        %v1171 = vld [vmem:[%s270 + $0x1890] sm:$0xff]
        %v1172 = vld [vmem:[%s270 + $0x1898] sm:$0xff]
        %v1173 = vld [vmem:[%s270 + $0x18a0] sm:$0xff]
        %v1174 = vld [vmem:[%s270 + $0x18a8] sm:$0xff]
        %v1175 = vld [vmem:[%s270 + $0x18b0] sm:$0xff]
        %v1176 = vld [vmem:[%s270 + $0x18b8] sm:$0xff]
        %v1177 = vld [vmem:[%s270 + $0x18c0] sm:$0xff]
        %v1178 = vld [vmem:[%s270 + $0x18c8] sm:$0xff]
        %v1179 = vld [vmem:[%s270 + $0x18d0] sm:$0xff]
        %v1180 = vld [vmem:[%s270 + $0x18d8] sm:$0xff]
        %v1181 = vld [vmem:[%s270 + $0x18e0] sm:$0xff]
        %v1182 = vld [vmem:[%s270 + $0x18e8] sm:$0xff]
        %v1183 = vld [vmem:[%s270 + $0x18f0] sm:$0xff]
        %v1184 = vld [vmem:[%s270 + $0x18f8] sm:$0xff]
        %v1185 = vld [vmem:[%s270 + $0x1900] sm:$0xff]
        %v1186 = vld [vmem:[%s270 + $0x1908] sm:$0xff]
        %v1187 = vld [vmem:[%s270 + $0x1910] sm:$0xff]
        %v1188 = vld [vmem:[%s270 + $0x1918] sm:$0xff]
        %v1189 = vld [vmem:[%s270 + $0x1920] sm:$0xff]
        %v1190 = vld [vmem:[%s270 + $0x1928] sm:$0xff]
        %v1191 = vld [vmem:[%s270 + $0x1930] sm:$0xff]
        %v1192 = vld [vmem:[%s270 + $0x1938] sm:$0xff]
        %v1193 = vld [vmem:[%s270 + $0x1940] sm:$0xff]
        %v1194 = vld [vmem:[%s270 + $0x1948] sm:$0xff]
        %v1195 = vld [vmem:[%s270 + $0x1950] sm:$0xff]
        %v1196 = vld [vmem:[%s270 + $0x1958] sm:$0xff]
        %v1197 = vld [vmem:[%s270 + $0x1960] sm:$0xff]
        %v1198 = vld [vmem:[%s270 + $0x1968] sm:$0xff]
        %v1199 = vld [vmem:[%s270 + $0x1970] sm:$0xff]
        %v1200 = vld [vmem:[%s270 + $0x1978] sm:$0xff]
        %v1201 = vld [vmem:[%s270 + $0x1980] sm:$0xff]
        %v1202 = vld [vmem:[%s270 + $0x1988] sm:$0xff]
        %v1203 = vld [vmem:[%s270 + $0x1990] sm:$0xff]
        %v1204 = vld [vmem:[%s270 + $0x1998] sm:$0xff]
        %v1205 = vld [vmem:[%s270 + $0x19a0] sm:$0xff]
        %v1206 = vld [vmem:[%s270 + $0x19a8] sm:$0xff]
        %v1207 = vld [vmem:[%s270 + $0x19b0] sm:$0xff]
        %v1208 = vld [vmem:[%s270 + $0x19b8] sm:$0xff]
        %v1209 = vld [vmem:[%s270 + $0x19c0] sm:$0xff]
        %v1210 = vld [vmem:[%s270 + $0x19c8] sm:$0xff]
        %v1211 = vld [vmem:[%s270 + $0x19d0] sm:$0xff]
        %v1212 = vld [vmem:[%s270 + $0x19d8] sm:$0xff]
        %v1213 = vld [vmem:[%s270 + $0x19e0] sm:$0xff]
        %v1214 = vld [vmem:[%s270 + $0x19e8] sm:$0xff]
        %v1215 = vld [vmem:[%s270 + $0x19f0] sm:$0xff]
        %v1216 = vld [vmem:[%s270 + $0x19f8] sm:$0xff]
        %v1217 = vld [vmem:[%s270 + $0x1a00] sm:$0xff]
        %v1218 = vld [vmem:[%s270 + $0x1a08] sm:$0xff]
        %v1219 = vld [vmem:[%s270 + $0x1a10] sm:$0xff]
        %v1220 = vld [vmem:[%s270 + $0x1a18] sm:$0xff]
        %v1221 = vld [vmem:[%s270 + $0x1a20] sm:$0xff]
        %v1222 = vld [vmem:[%s270 + $0x1a28] sm:$0xff]
        %v1223 = vld [vmem:[%s270 + $0x1a30] sm:$0xff]
        %v1224 = vld [vmem:[%s270 + $0x1a38] sm:$0xff]
        %v1225 = vld [vmem:[%s270 + $0x1a40] sm:$0xff]
        %v1226 = vld [vmem:[%s270 + $0x1a48] sm:$0xff]
        %v1227 = vld [vmem:[%s270 + $0x1a50] sm:$0xff]
        %v1228 = vld [vmem:[%s270 + $0x1a58] sm:$0xff]
        %v1229 = vld [vmem:[%s270 + $0x1a60] sm:$0xff]
        %v1230 = vld [vmem:[%s270 + $0x1a68] sm:$0xff]
        %v1231 = vld [vmem:[%s270 + $0x1a70] sm:$0xff]
        %v1232 = vld [vmem:[%s270 + $0x1a78] sm:$0xff]
        %v1233 = vld [vmem:[%s270 + $0x1a80] sm:$0xff]
        %v1234 = vld [vmem:[%s270 + $0x1a88] sm:$0xff]
        %v1235 = vld [vmem:[%s270 + $0x1a90] sm:$0xff]
        %v1236 = vld [vmem:[%s270 + $0x1a98] sm:$0xff]
        %v1237 = vld [vmem:[%s270 + $0x1aa0] sm:$0xff]
        %v1238 = vld [vmem:[%s270 + $0x1aa8] sm:$0xff]
        %v1239 = vld [vmem:[%s270 + $0x1ab0] sm:$0xff]
        %v1240 = vld [vmem:[%s270 + $0x1ab8] sm:$0xff]
        %v1241 = vld [vmem:[%s270 + $0x1ac0] sm:$0xff]
        %v1242 = vld [vmem:[%s270 + $0x1ac8] sm:$0xff]
        %v1243 = vld [vmem:[%s270 + $0x1ad0] sm:$0xff]
        %v1244 = vld [vmem:[%s270 + $0x1ad8] sm:$0xff]
        %v1245 = vld [vmem:[%s270 + $0x1ae0] sm:$0xff]
        %v1246 = vld [vmem:[%s270 + $0x1ae8] sm:$0xff]
        %v1247 = vld [vmem:[%s270 + $0x1af0] sm:$0xff]
        %v1248 = vld [vmem:[%s270 + $0x1af8] sm:$0xff]
        %v1249 = vld [vmem:[%s270 + $0x1b00] sm:$0xff]
        %v1250 = vld [vmem:[%s270 + $0x1b08] sm:$0xff]
        %v1251 = vld [vmem:[%s270 + $0x1b10] sm:$0xff]
        %v1252 = vld [vmem:[%s270 + $0x1b18] sm:$0xff]
        %v1253 = vld [vmem:[%s270 + $0x1b20] sm:$0xff]
        %v1254 = vld [vmem:[%s270 + $0x1b28] sm:$0xff]
        %v1255 = vld [vmem:[%s270 + $0x1b30] sm:$0xff]
        %v1256 = vld [vmem:[%s270 + $0x1b38] sm:$0xff]
        %v1257 = vld [vmem:[%s270 + $0x1b40] sm:$0xff]
        %v1258 = vld [vmem:[%s270 + $0x1b48] sm:$0xff]
        %v1259 = vld [vmem:[%s270 + $0x1b50] sm:$0xff]
        %v1260 = vld [vmem:[%s270 + $0x1b58] sm:$0xff]
        %v1261 = vld [vmem:[%s270 + $0x1b60] sm:$0xff]
        %v1262 = vld [vmem:[%s270 + $0x1b68] sm:$0xff]
        %v1263 = vld [vmem:[%s270 + $0x1b70] sm:$0xff]
        %v1264 = vld [vmem:[%s270 + $0x1b78] sm:$0xff]
        %v1265 = vld [vmem:[%s270 + $0x1b80] sm:$0xff]
        %v1266 = vld [vmem:[%s270 + $0x1b88] sm:$0xff]
        %v1267 = vld [vmem:[%s270 + $0x1b90] sm:$0xff]
        %v1268 = vld [vmem:[%s270 + $0x1b98] sm:$0xff]
        %v1269 = vld [vmem:[%s270 + $0x1ba0] sm:$0xff]
        %v1270 = vld [vmem:[%s270 + $0x1ba8] sm:$0xff]
        %v1271 = vld [vmem:[%s270 + $0x1bb0] sm:$0xff]
        %v1272 = vld [vmem:[%s270 + $0x1bb8] sm:$0xff]
        %v1273 = vld [vmem:[%s270 + $0x1bc0] sm:$0xff]
        %v1274 = vld [vmem:[%s270 + $0x1bc8] sm:$0xff]
        %v1275 = vld [vmem:[%s270 + $0x1bd0] sm:$0xff]
        %v1276 = vld [vmem:[%s270 + $0x1bd8] sm:$0xff]
        %v1277 = vld [vmem:[%s270 + $0x1be0] sm:$0xff]
        %v1278 = vld [vmem:[%s270 + $0x1be8] sm:$0xff]
        %v1279 = vld [vmem:[%s270 + $0x1bf0] sm:$0xff]
        %v1280 = vld [vmem:[%s270 + $0x1bf8] sm:$0xff]
        %v1281 = vld [vmem:[%s270 + $0x1c00] sm:$0xff]
        %v1282 = vld [vmem:[%s270 + $0x1c08] sm:$0xff]
        %v1283 = vld [vmem:[%s270 + $0x1c10] sm:$0xff]
        %v1284 = vld [vmem:[%s270 + $0x1c18] sm:$0xff]
        %v1285 = vld [vmem:[%s270 + $0x1c20] sm:$0xff]
        %v1286 = vld [vmem:[%s270 + $0x1c28] sm:$0xff]
        %v1287 = vld [vmem:[%s270 + $0x1c30] sm:$0xff]
        %v1288 = vld [vmem:[%s270 + $0x1c38] sm:$0xff]
        %v1289 = vld [vmem:[%s270 + $0x1c40] sm:$0xff]
        %v1290 = vld [vmem:[%s270 + $0x1c48] sm:$0xff]
        %v1291 = vld [vmem:[%s270 + $0x1c50] sm:$0xff]
        %v1292 = vld [vmem:[%s270 + $0x1c58] sm:$0xff]
        %v1293 = vld [vmem:[%s270 + $0x1c60] sm:$0xff]
        %v1294 = vld [vmem:[%s270 + $0x1c68] sm:$0xff]
        %v1295 = vld [vmem:[%s270 + $0x1c70] sm:$0xff]
        %v1296 = vld [vmem:[%s270 + $0x1c78] sm:$0xff]
        %v1297 = vld [vmem:[%s270 + $0x1c80] sm:$0xff]
        %v1298 = vld [vmem:[%s270 + $0x1c88] sm:$0xff]
        %v1299 = vld [vmem:[%s270 + $0x1c90] sm:$0xff]
        %v1300 = vld [vmem:[%s270 + $0x1c98] sm:$0xff]
        %v1301 = vld [vmem:[%s270 + $0x1ca0] sm:$0xff]
        %v1302 = vld [vmem:[%s270 + $0x1ca8] sm:$0xff]
        %v1303 = vld [vmem:[%s270 + $0x1cb0] sm:$0xff]
        %v1304 = vld [vmem:[%s270 + $0x1cb8] sm:$0xff]
        %v1305 = vld [vmem:[%s270 + $0x1cc0] sm:$0xff]
        %v1306 = vld [vmem:[%s270 + $0x1cc8] sm:$0xff]
        %v1307 = vld [vmem:[%s270 + $0x1cd0] sm:$0xff]
        %v1308 = vld [vmem:[%s270 + $0x1cd8] sm:$0xff]
        %v1309 = vld [vmem:[%s270 + $0x1ce0] sm:$0xff]
        %v1310 = vld [vmem:[%s270 + $0x1ce8] sm:$0xff]
        %v1311 = vld [vmem:[%s270 + $0x1cf0] sm:$0xff]
        %v1312 = vld [vmem:[%s270 + $0x1cf8] sm:$0xff]
        %v1313 = vld [vmem:[%s270 + $0x1d00] sm:$0xff]
        %v1314 = vld [vmem:[%s270 + $0x1d08] sm:$0xff]
        %v1315 = vld [vmem:[%s270 + $0x1d10] sm:$0xff]
        %v1316 = vld [vmem:[%s270 + $0x1d18] sm:$0xff]
        %v1317 = vld [vmem:[%s270 + $0x1d20] sm:$0xff]
        %v1318 = vld [vmem:[%s270 + $0x1d28] sm:$0xff]
        %v1319 = vld [vmem:[%s270 + $0x1d30] sm:$0xff]
        %v1320 = vld [vmem:[%s270 + $0x1d38] sm:$0xff]
        %v1321 = vld [vmem:[%s270 + $0x1d40] sm:$0xff]
        %v1322 = vld [vmem:[%s270 + $0x1d48] sm:$0xff]
        %v1323 = vld [vmem:[%s270 + $0x1d50] sm:$0xff]
        %v1324 = vld [vmem:[%s270 + $0x1d58] sm:$0xff]
        %v1325 = vld [vmem:[%s270 + $0x1d60] sm:$0xff]
        %v1326 = vld [vmem:[%s270 + $0x1d68] sm:$0xff]
        %v1327 = vld [vmem:[%s270 + $0x1d70] sm:$0xff]
        %v1328 = vld [vmem:[%s270 + $0x1d78] sm:$0xff]
        %v1329 = vld [vmem:[%s270 + $0x1d80] sm:$0xff]
        %v1330 = vld [vmem:[%s270 + $0x1d88] sm:$0xff]
        %v1331 = vld [vmem:[%s270 + $0x1d90] sm:$0xff]
        %v1332 = vld [vmem:[%s270 + $0x1d98] sm:$0xff]
        %v1333 = vld [vmem:[%s270 + $0x1da0] sm:$0xff]
        %v1334 = vld [vmem:[%s270 + $0x1da8] sm:$0xff]
        %v1335 = vld [vmem:[%s270 + $0x1db0] sm:$0xff]
        %v1336 = vld [vmem:[%s270 + $0x1db8] sm:$0xff]
        %v1337 = vld [vmem:[%s270 + $0x1dc0] sm:$0xff]
        %v1338 = vld [vmem:[%s270 + $0x1dc8] sm:$0xff]
        %v1339 = vld [vmem:[%s270 + $0x1dd0] sm:$0xff]
        %v1340 = vld [vmem:[%s270 + $0x1dd8] sm:$0xff]
        %v1341 = vld [vmem:[%s270 + $0x1de0] sm:$0xff]
        %v1342 = vld [vmem:[%s270 + $0x1de8] sm:$0xff]
        %v1343 = vld [vmem:[%s270 + $0x1df0] sm:$0xff]
        %v1344 = vld [vmem:[%s270 + $0x1df8] sm:$0xff]
        %v1345 = vld [vmem:[%s270 + $0x1e00] sm:$0xff]
        %v1346 = vld [vmem:[%s270 + $0x1e08] sm:$0xff]
        %v1347 = vld [vmem:[%s270 + $0x1e10] sm:$0xff]
        %v1348 = vld [vmem:[%s270 + $0x1e18] sm:$0xff]
        %v1349 = vld [vmem:[%s270 + $0x1e20] sm:$0xff]
        %v1350 = vld [vmem:[%s270 + $0x1e28] sm:$0xff]
        %v1351 = vld [vmem:[%s270 + $0x1e30] sm:$0xff]
        %v1352 = vld [vmem:[%s270 + $0x1e38] sm:$0xff]
        %v1353 = vld [vmem:[%s270 + $0x1e40] sm:$0xff]
        %v1354 = vld [vmem:[%s270 + $0x1e48] sm:$0xff]
        %v1355 = vld [vmem:[%s270 + $0x1e50] sm:$0xff]
        %v1356 = vld [vmem:[%s270 + $0x1e58] sm:$0xff]
        %v1357 = vld [vmem:[%s270 + $0x1e60] sm:$0xff]
        %v1358 = vld [vmem:[%s270 + $0x1e68] sm:$0xff]
        %v1359 = vld [vmem:[%s270 + $0x1e70] sm:$0xff]
        %v1360 = vld [vmem:[%s270 + $0x1e78] sm:$0xff]
        %v1361 = vld [vmem:[%s270 + $0x1e80] sm:$0xff]
        %v1362 = vld [vmem:[%s270 + $0x1e88] sm:$0xff]
        %v1363 = vld [vmem:[%s270 + $0x1e90] sm:$0xff]
        %v1364 = vld [vmem:[%s270 + $0x1e98] sm:$0xff]
        %v1365 = vld [vmem:[%s270 + $0x1ea0] sm:$0xff]
        %v1366 = vld [vmem:[%s270 + $0x1ea8] sm:$0xff]
        %v1367 = vld [vmem:[%s270 + $0x1eb0] sm:$0xff]
        %v1368 = vld [vmem:[%s270 + $0x1eb8] sm:$0xff]
        %v1369 = vld [vmem:[%s270 + $0x1ec0] sm:$0xff]
        %v1370 = vld [vmem:[%s270 + $0x1ec8] sm:$0xff]
        %v1371 = vld [vmem:[%s270 + $0x1ed0] sm:$0xff]
        %v1372 = vld [vmem:[%s270 + $0x1ed8] sm:$0xff]
        %v1373 = vld [vmem:[%s270 + $0x1ee0] sm:$0xff]
        %v1374 = vld [vmem:[%s270 + $0x1ee8] sm:$0xff]
        %v1375 = vld [vmem:[%s270 + $0x1ef0] sm:$0xff]
        %v1376 = vld [vmem:[%s270 + $0x1ef8] sm:$0xff]
        %v1377 = vld [vmem:[%s270 + $0x1f00] sm:$0xff]
        %v1378 = vld [vmem:[%s270 + $0x1f08] sm:$0xff]
        %v1379 = vld [vmem:[%s270 + $0x1f10] sm:$0xff]
        %v1380 = vld [vmem:[%s270 + $0x1f18] sm:$0xff]
        %v1381 = vld [vmem:[%s270 + $0x1f20] sm:$0xff]
        %v1382 = vld [vmem:[%s270 + $0x1f28] sm:$0xff]
        %v1383 = vld [vmem:[%s270 + $0x1f30] sm:$0xff]
        %v1384 = vld [vmem:[%s270 + $0x1f38] sm:$0xff]
        %v1385 = vld [vmem:[%s270 + $0x1f40] sm:$0xff]
        %v1386 = vld [vmem:[%s270 + $0x1f48] sm:$0xff]
        %v1387 = vld [vmem:[%s270 + $0x1f50] sm:$0xff]
        %v1388 = vld [vmem:[%s270 + $0x1f58] sm:$0xff]
        %v1389 = vld [vmem:[%s270 + $0x1f60] sm:$0xff]
        %v1390 = vld [vmem:[%s270 + $0x1f68] sm:$0xff]
        %v1391 = vld [vmem:[%s270 + $0x1f70] sm:$0xff]
        %v1392 = vld [vmem:[%s270 + $0x1f78] sm:$0xff]
        %v1393 = vld [vmem:[%s270 + $0x1f80] sm:$0xff]
        %v1394 = vld [vmem:[%s270 + $0x1f88] sm:$0xff]
        %v1395 = vld [vmem:[%s270 + $0x1f90] sm:$0xff]
        %v1396 = vld [vmem:[%s270 + $0x1f98] sm:$0xff]
        %v1397 = vld [vmem:[%s270 + $0x1fa0] sm:$0xff]
        %v1398 = vld [vmem:[%s270 + $0x1fa8] sm:$0xff]
        %v1399 = vld [vmem:[%s270 + $0x1fb0] sm:$0xff]
        %v1400 = vld [vmem:[%s270 + $0x1fb8] sm:$0xff]
        %v1401 = vld [vmem:[%s270 + $0x1fc0] sm:$0xff]
        %v1402 = vld [vmem:[%s270 + $0x1fc8] sm:$0xff]
        %v1403 = vld [vmem:[%s270 + $0x1fd0] sm:$0xff]
        %v1404 = vld [vmem:[%s270 + $0x1fd8] sm:$0xff]
        %v1405 = vld [vmem:[%s270 + $0x1fe0] sm:$0xff]
        %v1406 = vld [vmem:[%s270 + $0x1fe8] sm:$0xff]
        %v1407 = vld [vmem:[%s270 + $0x1ff0] sm:$0xff]
        %v1408 = vld [vmem:[%s270 + $0x1ff8] sm:$0xff]
        %v1409 = vld [vmem:[%s270 + $0x2000] sm:$0xff]
        %v1410 = vld [vmem:[%s270 + $0x2008] sm:$0xff]
        %v1411 = vld [vmem:[%s270 + $0x2010] sm:$0xff]
        %v1412 = vld [vmem:[%s270 + $0x2018] sm:$0xff]
        %v1413 = vld [vmem:[%s270 + $0x2020] sm:$0xff]
        %v1414 = vld [vmem:[%s270 + $0x2028] sm:$0xff]
        %v1415 = vld [vmem:[%s270 + $0x2030] sm:$0xff]
        %v1416 = vld [vmem:[%s270 + $0x2038] sm:$0xff]
        %v1417 = vld [vmem:[%s270 + $0x2040] sm:$0xff]
        %v1418 = vld [vmem:[%s270 + $0x2048] sm:$0xff]
        %v1419 = vld [vmem:[%s270 + $0x2050] sm:$0xff]
        %v1420 = vld [vmem:[%s270 + $0x2058] sm:$0xff]
        %v1421 = vld [vmem:[%s270 + $0x2060] sm:$0xff]
        %v1422 = vld [vmem:[%s270 + $0x2068] sm:$0xff]
        %v1423 = vld [vmem:[%s270 + $0x2070] sm:$0xff]
        %v1424 = vld [vmem:[%s270 + $0x2078] sm:$0xff]
        %v1425 = vld [vmem:[%s270 + $0x2080] sm:$0xff]
        %v1426 = vld [vmem:[%s270 + $0x2088] sm:$0xff]
        %v1427 = vld [vmem:[%s270 + $0x2090] sm:$0xff]
        %v1428 = vld [vmem:[%s270 + $0x2098] sm:$0xff]
        %v1429 = vld [vmem:[%s270 + $0x20a0] sm:$0xff]
        %v1430 = vld [vmem:[%s270 + $0x20a8] sm:$0xff]
        %v1431 = vld [vmem:[%s270 + $0x20b0] sm:$0xff]
        %v1432 = vld [vmem:[%s270 + $0x20b8] sm:$0xff]
        %v1433 = vld [vmem:[%s270 + $0x20c0] sm:$0xff]
        %v1434 = vld [vmem:[%s270 + $0x20c8] sm:$0xff]
        %v1435 = vld [vmem:[%s270 + $0x20d0] sm:$0xff]
        %v1436 = vld [vmem:[%s270 + $0x20d8] sm:$0xff]
        %v1437 = vld [vmem:[%s270 + $0x20e0] sm:$0xff]
        %v1438 = vld [vmem:[%s270 + $0x20e8] sm:$0xff]
        %v1439 = vld [vmem:[%s270 + $0x20f0] sm:$0xff]
        %v1440 = vld [vmem:[%s270 + $0x20f8] sm:$0xff]
        %v1441 = vld [vmem:[%s270 + $0x2100] sm:$0xff]
        %v1442 = vld [vmem:[%s270 + $0x2108] sm:$0xff]
        %v1443 = vld [vmem:[%s270 + $0x2110] sm:$0xff]
        %v1444 = vld [vmem:[%s270 + $0x2118] sm:$0xff]
        %v1445 = vld [vmem:[%s270 + $0x2120] sm:$0xff]
        %v1446 = vld [vmem:[%s270 + $0x2128] sm:$0xff]
        %v1447 = vld [vmem:[%s270 + $0x2130] sm:$0xff]
        %v1448 = vld [vmem:[%s270 + $0x2138] sm:$0xff]
        %v1449 = vld [vmem:[%s270 + $0x2140] sm:$0xff]
        %v1450 = vld [vmem:[%s270 + $0x2148] sm:$0xff]
        %v1451 = vld [vmem:[%s270 + $0x2150] sm:$0xff]
        %v1452 = vld [vmem:[%s270 + $0x2158] sm:$0xff]
        %v1453 = vld [vmem:[%s270 + $0x2160] sm:$0xff]
        %v1454 = vld [vmem:[%s270 + $0x2168] sm:$0xff]
        %v1455 = vld [vmem:[%s270 + $0x2170] sm:$0xff]
        %v1456 = vld [vmem:[%s270 + $0x2178] sm:$0xff]
        %v1457 = vld [vmem:[%s270 + $0x2180] sm:$0xff]
        %v1458 = vld [vmem:[%s270 + $0x2188] sm:$0xff]
        %v1459 = vld [vmem:[%s270 + $0x2190] sm:$0xff]
        %v1460 = vld [vmem:[%s270 + $0x2198] sm:$0xff]
        %v1461 = vld [vmem:[%s270 + $0x21a0] sm:$0xff]
        %v1462 = vld [vmem:[%s270 + $0x21a8] sm:$0xff]
        %v1463 = vld [vmem:[%s270 + $0x21b0] sm:$0xff]
        %v1464 = vld [vmem:[%s270 + $0x21b8] sm:$0xff]
        %v1465 = vld [vmem:[%s270 + $0x21c0] sm:$0xff]
        %v1466 = vld [vmem:[%s270 + $0x21c8] sm:$0xff]
        %v1467 = vld [vmem:[%s270 + $0x21d0] sm:$0xff]
        %v1468 = vld [vmem:[%s270 + $0x21d8] sm:$0xff]
        %v1469 = vld [vmem:[%s270 + $0x21e0] sm:$0xff]
        %v1470 = vld [vmem:[%s270 + $0x21e8] sm:$0xff]
        %v1471 = vld [vmem:[%s270 + $0x21f0] sm:$0xff]
        %v1472 = vld [vmem:[%s270 + $0x21f8] sm:$0xff]
        %v1473 = vld [vmem:[%s270 + $0x2200] sm:$0xff]
        %v1474 = vld [vmem:[%s270 + $0x2208] sm:$0xff]
        %v1475 = vld [vmem:[%s270 + $0x2210] sm:$0xff]
        %v1476 = vld [vmem:[%s270 + $0x2218] sm:$0xff]
        %v1477 = vld [vmem:[%s270 + $0x2220] sm:$0xff]
        %v1478 = vld [vmem:[%s270 + $0x2228] sm:$0xff]
        %v1479 = vld [vmem:[%s270 + $0x2230] sm:$0xff]
        %v1480 = vld [vmem:[%s270 + $0x2238] sm:$0xff]
        %v1481 = vld [vmem:[%s270 + $0x2240] sm:$0xff]
        %v1482 = vld [vmem:[%s270 + $0x2248] sm:$0xff]
        %v1483 = vld [vmem:[%s270 + $0x2250] sm:$0xff]
        %v1484 = vld [vmem:[%s270 + $0x2258] sm:$0xff]
        %v1485 = vld [vmem:[%s270 + $0x2260] sm:$0xff]
        %v1486 = vld [vmem:[%s270 + $0x2268] sm:$0xff]
        %v1487 = vld [vmem:[%s270 + $0x2270] sm:$0xff]
        %v1488 = vld [vmem:[%s270 + $0x2278] sm:$0xff]
        %v1489 = vld [vmem:[%s270 + $0x2280] sm:$0xff]
        %v1490 = vld [vmem:[%s270 + $0x2288] sm:$0xff]
        %v1491 = vld [vmem:[%s270 + $0x2290] sm:$0xff]
        %v1492 = vld [vmem:[%s270 + $0x2298] sm:$0xff]
        %v1493 = vld [vmem:[%s270 + $0x22a0] sm:$0xff]
        %v1494 = vld [vmem:[%s270 + $0x22a8] sm:$0xff]
        %v1495 = vld [vmem:[%s270 + $0x22b0] sm:$0xff]
        %v1496 = vld [vmem:[%s270 + $0x22b8] sm:$0xff]
        %v1497 = vld [vmem:[%s270 + $0x22c0] sm:$0xff]
        %v1498 = vld [vmem:[%s270 + $0x22c8] sm:$0xff]
        %v1499 = vld [vmem:[%s270 + $0x22d0] sm:$0xff]
        %v1500 = vld [vmem:[%s270 + $0x22d8] sm:$0xff]
        %v1501 = vld [vmem:[%s270 + $0x22e0] sm:$0xff]
        %v1502 = vld [vmem:[%s270 + $0x22e8] sm:$0xff]
        %v1503 = vld [vmem:[%s270 + $0x22f0] sm:$0xff]
        %v1504 = vld [vmem:[%s270 + $0x22f8] sm:$0xff]
        %v1505 = vld [vmem:[%s270 + $0x2300] sm:$0xff]
        %v1506 = vld [vmem:[%s270 + $0x2308] sm:$0xff]
        %v1507 = vld [vmem:[%s270 + $0x2310] sm:$0xff]
        %v1508 = vld [vmem:[%s270 + $0x2318] sm:$0xff]
        %v1509 = vld [vmem:[%s270 + $0x2320] sm:$0xff]
        %v1510 = vld [vmem:[%s270 + $0x2328] sm:$0xff]
        %v1511 = vld [vmem:[%s270 + $0x2330] sm:$0xff]
        %v1512 = vld [vmem:[%s270 + $0x2338] sm:$0xff]
        %v1513 = vld [vmem:[%s270 + $0x2340] sm:$0xff]
        %v1514 = vld [vmem:[%s270 + $0x2348] sm:$0xff]
        %v1515 = vld [vmem:[%s270 + $0x2350] sm:$0xff]
        %v1516 = vld [vmem:[%s270 + $0x2358] sm:$0xff]
        %v1517 = vld [vmem:[%s270 + $0x2360] sm:$0xff]
        %v1518 = vld [vmem:[%s270 + $0x2368] sm:$0xff]
        %v1519 = vld [vmem:[%s270 + $0x2370] sm:$0xff]
        %v1520 = vld [vmem:[%s270 + $0x2378] sm:$0xff]
        %v1521 = vld [vmem:[%s270 + $0x2380] sm:$0xff]
        %v1522 = vld [vmem:[%s270 + $0x2388] sm:$0xff]
        %v1523 = vld [vmem:[%s270 + $0x2390] sm:$0xff]
        %v1524 = vld [vmem:[%s270 + $0x2398] sm:$0xff]
        %v1525 = vld [vmem:[%s270 + $0x23a0] sm:$0xff]
        %v1526 = vld [vmem:[%s270 + $0x23a8] sm:$0xff]
        %v1527 = vld [vmem:[%s270 + $0x23b0] sm:$0xff]
        %v1528 = vld [vmem:[%s270 + $0x23b8] sm:$0xff]
        %v1529 = vld [vmem:[%s270 + $0x23c0] sm:$0xff]
        %v1530 = vld [vmem:[%s270 + $0x23c8] sm:$0xff]
        %v1531 = vld [vmem:[%s270 + $0x23d0] sm:$0xff]
        %v1532 = vld [vmem:[%s270 + $0x23d8] sm:$0xff]
        %v1533 = vld [vmem:[%s270 + $0x23e0] sm:$0xff]
        %v1534 = vld [vmem:[%s270 + $0x23e8] sm:$0xff]
        %v1535 = vld [vmem:[%s270 + $0x23f0] sm:$0xff]
        %v1536 = vld [vmem:[%s270 + $0x23f8] sm:$0xff]
        %v1537 = vld [vmem:[%s270 + $0x2400] sm:$0xff]
        %v1538 = vld [vmem:[%s270 + $0x2408] sm:$0xff]
        %v1539 = vld [vmem:[%s270 + $0x2410] sm:$0xff]
        %v1540 = vld [vmem:[%s270 + $0x2418] sm:$0xff]
        %v1541 = vld [vmem:[%s270 + $0x2420] sm:$0xff]
        %v1542 = vld [vmem:[%s270 + $0x2428] sm:$0xff]
        %v1543 = vld [vmem:[%s270 + $0x2430] sm:$0xff]
        %v1544 = vld [vmem:[%s270 + $0x2438] sm:$0xff]
        %v1545 = vld [vmem:[%s270 + $0x2440] sm:$0xff]
        %v1546 = vld [vmem:[%s270 + $0x2448] sm:$0xff]
        %v1547 = vld [vmem:[%s270 + $0x2450] sm:$0xff]
        %v1548 = vld [vmem:[%s270 + $0x2458] sm:$0xff]
        %v1549 = vld [vmem:[%s270 + $0x2460] sm:$0xff]
        %v1550 = vld [vmem:[%s270 + $0x2468] sm:$0xff]
        %v1551 = vld [vmem:[%s270 + $0x2470] sm:$0xff]
        %v1552 = vld [vmem:[%s270 + $0x2478] sm:$0xff]
        %v1553 = vld [vmem:[%s270 + $0x2480] sm:$0xff]
        %v1554 = vld [vmem:[%s270 + $0x2488] sm:$0xff]
        %v1555 = vld [vmem:[%s270 + $0x2490] sm:$0xff]
        %v1556 = vld [vmem:[%s270 + $0x2498] sm:$0xff]
        %v1557 = vld [vmem:[%s270 + $0x24a0] sm:$0xff]
        %v1558 = vld [vmem:[%s270 + $0x24a8] sm:$0xff]
        %v1559 = vld [vmem:[%s270 + $0x24b0] sm:$0xff]
        %v1560 = vld [vmem:[%s270 + $0x24b8] sm:$0xff]
        %v1561 = vld [vmem:[%s270 + $0x24c0] sm:$0xff]
        %v1562 = vld [vmem:[%s270 + $0x24c8] sm:$0xff]
        %v1563 = vld [vmem:[%s270 + $0x24d0] sm:$0xff]
        %v1564 = vld [vmem:[%s270 + $0x24d8] sm:$0xff]
        %v1565 = vld [vmem:[%s270 + $0x24e0] sm:$0xff]
        %v1566 = vld [vmem:[%s270 + $0x24e8] sm:$0xff]
        %v1567 = vld [vmem:[%s270 + $0x24f0] sm:$0xff]
        %v1568 = vld [vmem:[%s270 + $0x24f8] sm:$0xff]
        %v1569 = vld [vmem:[%s270 + $0x2500] sm:$0xff]
        %v1570 = vld [vmem:[%s270 + $0x2508] sm:$0xff]
        %v1571 = vld [vmem:[%s270 + $0x2510] sm:$0xff]
        %v1572 = vld [vmem:[%s270 + $0x2518] sm:$0xff]
        %v1573 = vld [vmem:[%s270 + $0x2520] sm:$0xff]
        %v1574 = vld [vmem:[%s270 + $0x2528] sm:$0xff]
        %v1575 = vld [vmem:[%s270 + $0x2530] sm:$0xff]
        %v1576 = vld [vmem:[%s270 + $0x2538] sm:$0xff]
        %v1577 = vld [vmem:[%s270 + $0x2540] sm:$0xff]
        %v1578 = vld [vmem:[%s270 + $0x2548] sm:$0xff]
        %v1579 = vld [vmem:[%s270 + $0x2550] sm:$0xff]
        %v1580 = vld [vmem:[%s270 + $0x2558] sm:$0xff]
        %v1581 = vld [vmem:[%s270 + $0x2560] sm:$0xff]
        %v1582 = vld [vmem:[%s270 + $0x2568] sm:$0xff]
        %v1583 = vld [vmem:[%s270 + $0x2570] sm:$0xff]
        %v1584 = vld [vmem:[%s270 + $0x2578] sm:$0xff]
        %v1585 = vld [vmem:[%s270 + $0x2580] sm:$0xff]
        %v1586 = vld [vmem:[%s270 + $0x2588] sm:$0xff]
        %v1587 = vld [vmem:[%s270 + $0x2590] sm:$0xff]
        %v1588 = vld [vmem:[%s270 + $0x2598] sm:$0xff]
        %v1589 = vld [vmem:[%s270 + $0x25a0] sm:$0xff]
        %v1590 = vld [vmem:[%s270 + $0x25a8] sm:$0xff]
        %v1591 = vld [vmem:[%s270 + $0x25b0] sm:$0xff]
        %v1592 = vld [vmem:[%s270 + $0x25b8] sm:$0xff]
        %v1593 = vld [vmem:[%s270 + $0x25c0] sm:$0xff]
        %v1594 = vld [vmem:[%s270 + $0x25c8] sm:$0xff]
        %v1595 = vld [vmem:[%s270 + $0x25d0] sm:$0xff]
        %v1596 = vld [vmem:[%s270 + $0x25d8] sm:$0xff]
        %v1597 = vld [vmem:[%s270 + $0x25e0] sm:$0xff]
        %v1598 = vld [vmem:[%s270 + $0x25e8] sm:$0xff]
        %v1599 = vld [vmem:[%s270 + $0x25f0] sm:$0xff]
        %v1600 = vld [vmem:[%s270 + $0x25f8] sm:$0xff]
        %v1601 = vld [vmem:[%s270 + $0x2600] sm:$0xff]
        %v1602 = vld [vmem:[%s270 + $0x2608] sm:$0xff]
        %v1603 = vld [vmem:[%s270 + $0x2610] sm:$0xff]
        %v1604 = vld [vmem:[%s270 + $0x2618] sm:$0xff]
        %v1605 = vld [vmem:[%s270 + $0x2620] sm:$0xff]
        %v1606 = vld [vmem:[%s270 + $0x2628] sm:$0xff]
        %v1607 = vld [vmem:[%s270 + $0x2630] sm:$0xff]
        %v1608 = vld [vmem:[%s270 + $0x2638] sm:$0xff]
        %v1609 = vld [vmem:[%s270 + $0x2640] sm:$0xff]
        %v1610 = vld [vmem:[%s270 + $0x2648] sm:$0xff]
        %v1611 = vld [vmem:[%s270 + $0x2650] sm:$0xff]
        %v1612 = vld [vmem:[%s270 + $0x2658] sm:$0xff]
        %v1613 = vld [vmem:[%s270 + $0x2660] sm:$0xff]
        %v1614 = vld [vmem:[%s270 + $0x2668] sm:$0xff]
        %v1615 = vld [vmem:[%s270 + $0x2670] sm:$0xff]
        %v1616 = vld [vmem:[%s270 + $0x2678] sm:$0xff]
        %v1617 = vld [vmem:[%s270 + $0x2680] sm:$0xff]
        %v1618 = vld [vmem:[%s270 + $0x2688] sm:$0xff]
        %v1619 = vld [vmem:[%s270 + $0x2690] sm:$0xff]
        %v1620 = vld [vmem:[%s270 + $0x2698] sm:$0xff]
        %v1621 = vld [vmem:[%s270 + $0x26a0] sm:$0xff]
        %v1622 = vld [vmem:[%s270 + $0x26a8] sm:$0xff]
        %v1623 = vld [vmem:[%s270 + $0x26b0] sm:$0xff]
        %v1624 = vld [vmem:[%s270 + $0x26b8] sm:$0xff]
        %v1625 = vld [vmem:[%s270 + $0x26c0] sm:$0xff]
        %v1626 = vld [vmem:[%s270 + $0x26c8] sm:$0xff]
        %v1627 = vld [vmem:[%s270 + $0x26d0] sm:$0xff]
        %v1628 = vld [vmem:[%s270 + $0x26d8] sm:$0xff]
        %v1629 = vld [vmem:[%s270 + $0x26e0] sm:$0xff]
        %v1630 = vld [vmem:[%s270 + $0x26e8] sm:$0xff]
        %v1631 = vld [vmem:[%s270 + $0x26f0] sm:$0xff]
        %v1632 = vld [vmem:[%s270 + $0x26f8] sm:$0xff]
        %v1633 = vld [vmem:[%s270 + $0x2700] sm:$0xff]
        %v1634 = vld [vmem:[%s270 + $0x2708] sm:$0xff]
        %v1635 = vld [vmem:[%s270 + $0x2710] sm:$0xff]
        %v1636 = vld [vmem:[%s270 + $0x2718] sm:$0xff]
        %v1637 = vld [vmem:[%s270 + $0x2720] sm:$0xff]
        %v1638 = vld [vmem:[%s270 + $0x2728] sm:$0xff]
        %v1639 = vld [vmem:[%s270 + $0x2730] sm:$0xff]
        %v1640 = vld [vmem:[%s270 + $0x2738] sm:$0xff]
        %v1641 = vld [vmem:[%s270 + $0x2740] sm:$0xff]
        %v1642 = vld [vmem:[%s270 + $0x2748] sm:$0xff]
        %v1643 = vld [vmem:[%s270 + $0x2750] sm:$0xff]
        %v1644 = vld [vmem:[%s270 + $0x2758] sm:$0xff]
        %v1645 = vld [vmem:[%s270 + $0x2760] sm:$0xff]
        %v1646 = vld [vmem:[%s270 + $0x2768] sm:$0xff]
        %v1647 = vld [vmem:[%s270 + $0x2770] sm:$0xff]
        %v1648 = vld [vmem:[%s270 + $0x2778] sm:$0xff]
        %v1649 = vld [vmem:[%s270 + $0x2780] sm:$0xff]
        %v1650 = vld [vmem:[%s270 + $0x2788] sm:$0xff]
        %v1651 = vld [vmem:[%s270 + $0x2790] sm:$0xff]
        %v1652 = vld [vmem:[%s270 + $0x2798] sm:$0xff]
        %v1653 = vld [vmem:[%s270 + $0x27a0] sm:$0xff]
        %v1654 = vld [vmem:[%s270 + $0x27a8] sm:$0xff]
        %v1655 = vld [vmem:[%s270 + $0x27b0] sm:$0xff]
        %v1656 = vld [vmem:[%s270 + $0x27b8] sm:$0xff]
        %v1657 = vld [vmem:[%s270 + $0x27c0] sm:$0xff]
        %v1658 = vld [vmem:[%s270 + $0x27c8] sm:$0xff]
        %v1659 = vld [vmem:[%s270 + $0x27d0] sm:$0xff]
        %v1660 = vld [vmem:[%s270 + $0x27d8] sm:$0xff]
        %v1661 = vld [vmem:[%s270 + $0x27e0] sm:$0xff]
        %v1662 = vld [vmem:[%s270 + $0x27e8] sm:$0xff]
        %v1663 = vld [vmem:[%s270 + $0x27f0] sm:$0xff]
        %v1664 = vld [vmem:[%s270 + $0x27f8] sm:$0xff]
        %v1665 = vld [vmem:[%s270 + $0x2800] sm:$0xff]
        %v1666 = vld [vmem:[%s270 + $0x2808] sm:$0xff]
        %v1667 = vld [vmem:[%s270 + $0x2810] sm:$0xff]
        %v1668 = vld [vmem:[%s270 + $0x2818] sm:$0xff]
        %v1669 = vld [vmem:[%s270 + $0x2820] sm:$0xff]
        %v1670 = vld [vmem:[%s270 + $0x2828] sm:$0xff]
        %v1671 = vld [vmem:[%s270 + $0x2830] sm:$0xff]
        %v1672 = vld [vmem:[%s270 + $0x2838] sm:$0xff]
        %v1673 = vld [vmem:[%s270 + $0x2840] sm:$0xff]
        %v1674 = vld [vmem:[%s270 + $0x2848] sm:$0xff]
        %v1675 = vld [vmem:[%s270 + $0x2850] sm:$0xff]
        %v1676 = vld [vmem:[%s270 + $0x2858] sm:$0xff]
        %v1677 = vld [vmem:[%s270 + $0x2860] sm:$0xff]
        %v1678 = vld [vmem:[%s270 + $0x2868] sm:$0xff]
        %v1679 = vld [vmem:[%s270 + $0x2870] sm:$0xff]
        %v1680 = vld [vmem:[%s270 + $0x2878] sm:$0xff]
        %v1681 = vld [vmem:[%s270 + $0x2880] sm:$0xff]
        %v1682 = vld [vmem:[%s270 + $0x2888] sm:$0xff]
        %v1683 = vld [vmem:[%s270 + $0x2890] sm:$0xff]
        %v1684 = vld [vmem:[%s270 + $0x2898] sm:$0xff]
        %v1685 = vld [vmem:[%s270 + $0x28a0] sm:$0xff]
        %v1686 = vld [vmem:[%s270 + $0x28a8] sm:$0xff]
        %v1687 = vld [vmem:[%s270 + $0x28b0] sm:$0xff]
        %v1688 = vld [vmem:[%s270 + $0x28b8] sm:$0xff]
        %v1689 = vld [vmem:[%s270 + $0x28c0] sm:$0xff]
        %v1690 = vld [vmem:[%s270 + $0x28c8] sm:$0xff]
        %v1691 = vld [vmem:[%s270 + $0x28d0] sm:$0xff]
        %v1692 = vld [vmem:[%s270 + $0x28d8] sm:$0xff]
        %v1693 = vld [vmem:[%s270 + $0x28e0] sm:$0xff]
        %v1694 = vld [vmem:[%s270 + $0x28e8] sm:$0xff]
        %v1695 = vld [vmem:[%s270 + $0x28f0] sm:$0xff]
        %v1696 = vld [vmem:[%s270 + $0x28f8] sm:$0xff]
        %v1697 = vld [vmem:[%s270 + $0x2900] sm:$0xff]
        %v1698 = vld [vmem:[%s270 + $0x2908] sm:$0xff]
        %v1699 = vld [vmem:[%s270 + $0x2910] sm:$0xff]
        %v1700 = vld [vmem:[%s270 + $0x2918] sm:$0xff]
        %v1701 = vld [vmem:[%s270 + $0x2920] sm:$0xff]
        %v1702 = vld [vmem:[%s270 + $0x2928] sm:$0xff]
        %v1703 = vld [vmem:[%s270 + $0x2930] sm:$0xff]
        %v1704 = vld [vmem:[%s270 + $0x2938] sm:$0xff]
        %v1705 = vld [vmem:[%s270 + $0x2940] sm:$0xff]
        %v1706 = vld [vmem:[%s270 + $0x2948] sm:$0xff]
        %v1707 = vld [vmem:[%s270 + $0x2950] sm:$0xff]
        %v1708 = vld [vmem:[%s270 + $0x2958] sm:$0xff]
        %v1709 = vld [vmem:[%s270 + $0x2960] sm:$0xff]
        %v1710 = vld [vmem:[%s270 + $0x2968] sm:$0xff]
        %v1711 = vld [vmem:[%s270 + $0x2970] sm:$0xff]
        %v1712 = vld [vmem:[%s270 + $0x2978] sm:$0xff]
        %v1713 = vld [vmem:[%s270 + $0x2980] sm:$0xff]
        %v1714 = vld [vmem:[%s270 + $0x2988] sm:$0xff]
        %v1715 = vld [vmem:[%s270 + $0x2990] sm:$0xff]
        %v1716 = vld [vmem:[%s270 + $0x2998] sm:$0xff]
        %v1717 = vld [vmem:[%s270 + $0x29a0] sm:$0xff]
        %v1718 = vld [vmem:[%s270 + $0x29a8] sm:$0xff]
        %v1719 = vld [vmem:[%s270 + $0x29b0] sm:$0xff]
        %v1720 = vld [vmem:[%s270 + $0x29b8] sm:$0xff]
        %v1721 = vld [vmem:[%s270 + $0x29c0] sm:$0xff]
        %v1722 = vld [vmem:[%s270 + $0x29c8] sm:$0xff]
        %v1723 = vld [vmem:[%s270 + $0x29d0] sm:$0xff]
        %v1724 = vld [vmem:[%s270 + $0x29d8] sm:$0xff]
        %v1725 = vld [vmem:[%s270 + $0x29e0] sm:$0xff]
        %v1726 = vld [vmem:[%s270 + $0x29e8] sm:$0xff]
        %v1727 = vld [vmem:[%s270 + $0x29f0] sm:$0xff]
        %v1728 = vld [vmem:[%s270 + $0x29f8] sm:$0xff]
        %v1729 = vld [vmem:[%s270 + $0x2a00] sm:$0xff]
        %v1730 = vld [vmem:[%s270 + $0x2a08] sm:$0xff]
        %v1731 = vld [vmem:[%s270 + $0x2a10] sm:$0xff]
        %v1732 = vld [vmem:[%s270 + $0x2a18] sm:$0xff]
        %v1733 = vld [vmem:[%s270 + $0x2a20] sm:$0xff]
        %v1734 = vld [vmem:[%s270 + $0x2a28] sm:$0xff]
        %v1735 = vld [vmem:[%s270 + $0x2a30] sm:$0xff]
        %v1736 = vld [vmem:[%s270 + $0x2a38] sm:$0xff]
        %v1737 = vld [vmem:[%s270 + $0x2a40] sm:$0xff]
        %v1738 = vld [vmem:[%s270 + $0x2a48] sm:$0xff]
        %v1739 = vld [vmem:[%s270 + $0x2a50] sm:$0xff]
        %v1740 = vld [vmem:[%s270 + $0x2a58] sm:$0xff]
        %v1741 = vld [vmem:[%s270 + $0x2a60] sm:$0xff]
        %v1742 = vld [vmem:[%s270 + $0x2a68] sm:$0xff]
        %v1743 = vld [vmem:[%s270 + $0x2a70] sm:$0xff]
        %v1744 = vld [vmem:[%s270 + $0x2a78] sm:$0xff]
        %v1745 = vld [vmem:[%s270 + $0x2a80] sm:$0xff]
        %v1746 = vld [vmem:[%s270 + $0x2a88] sm:$0xff]
        %v1747 = vld [vmem:[%s270 + $0x2a90] sm:$0xff]
        %v1748 = vld [vmem:[%s270 + $0x2a98] sm:$0xff]
        %v1749 = vld [vmem:[%s270 + $0x2aa0] sm:$0xff]
        %v1750 = vld [vmem:[%s270 + $0x2aa8] sm:$0xff]
        %v1751 = vld [vmem:[%s270 + $0x2ab0] sm:$0xff]
        %v1752 = vld [vmem:[%s270 + $0x2ab8] sm:$0xff]
        %v1753 = vld [vmem:[%s270 + $0x2ac0] sm:$0xff]
        %v1754 = vld [vmem:[%s270 + $0x2ac8] sm:$0xff]
        %v1755 = vld [vmem:[%s270 + $0x2ad0] sm:$0xff]
        %v1756 = vld [vmem:[%s270 + $0x2ad8] sm:$0xff]
        %v1757 = vld [vmem:[%s270 + $0x2ae0] sm:$0xff]
        %v1758 = vld [vmem:[%s270 + $0x2ae8] sm:$0xff]
        %v1759 = vld [vmem:[%s270 + $0x2af0] sm:$0xff]
        %v1760 = vld [vmem:[%s270 + $0x2af8] sm:$0xff]
        %v1761 = vld [vmem:[%s270 + $0x2b00] sm:$0xff]
        %v1762 = vld [vmem:[%s270 + $0x2b08] sm:$0xff]
        %v1763 = vld [vmem:[%s270 + $0x2b10] sm:$0xff]
        %v1764 = vld [vmem:[%s270 + $0x2b18] sm:$0xff]
        %v1765 = vld [vmem:[%s270 + $0x2b20] sm:$0xff]
        %v1766 = vld [vmem:[%s270 + $0x2b28] sm:$0xff]
        %v1767 = vld [vmem:[%s270 + $0x2b30] sm:$0xff]
        %v1768 = vld [vmem:[%s270 + $0x2b38] sm:$0xff]
        %v1769 = vld [vmem:[%s270 + $0x2b40] sm:$0xff]
        %v1770 = vld [vmem:[%s270 + $0x2b48] sm:$0xff]
        %v1771 = vld [vmem:[%s270 + $0x2b50] sm:$0xff]
        %v1772 = vld [vmem:[%s270 + $0x2b58] sm:$0xff]
        %v1773 = vld [vmem:[%s270 + $0x2b60] sm:$0xff]
        %v1774 = vld [vmem:[%s270 + $0x2b68] sm:$0xff]
        %v1775 = vld [vmem:[%s270 + $0x2b70] sm:$0xff]
        %v1776 = vld [vmem:[%s270 + $0x2b78] sm:$0xff]
        %v1777 = vld [vmem:[%s270 + $0x2b80] sm:$0xff]
        %v1778 = vld [vmem:[%s270 + $0x2b88] sm:$0xff]
        %v1779 = vld [vmem:[%s270 + $0x2b90] sm:$0xff]
        %v1780 = vld [vmem:[%s270 + $0x2b98] sm:$0xff]
        %v1781 = vld [vmem:[%s270 + $0x2ba0] sm:$0xff]
        %v1782 = vld [vmem:[%s270 + $0x2ba8] sm:$0xff]
        %v1783 = vld [vmem:[%s270 + $0x2bb0] sm:$0xff]
        %v1784 = vld [vmem:[%s270 + $0x2bb8] sm:$0xff]
        %v1785 = vld [vmem:[%s270 + $0x2bc0] sm:$0xff]
        %v1786 = vld [vmem:[%s270 + $0x2bc8] sm:$0xff]
        %v1787 = vld [vmem:[%s270 + $0x2bd0] sm:$0xff]
        %v1788 = vld [vmem:[%s270 + $0x2bd8] sm:$0xff]
        %v1789 = vld [vmem:[%s270 + $0x2be0] sm:$0xff]
        %v1790 = vld [vmem:[%s270 + $0x2be8] sm:$0xff]
        %v1791 = vld [vmem:[%s270 + $0x2bf0] sm:$0xff]
        %v1792 = vld [vmem:[%s270 + $0x2bf8] sm:$0xff]
        %v1793 = vld [vmem:[%s270 + $0x2c00] sm:$0xff]
        %v1794 = vld [vmem:[%s270 + $0x2c08] sm:$0xff]
        %v1795 = vld [vmem:[%s270 + $0x2c10] sm:$0xff]
        %v1796 = vld [vmem:[%s270 + $0x2c18] sm:$0xff]
        %v1797 = vld [vmem:[%s270 + $0x2c20] sm:$0xff]
        %v1798 = vld [vmem:[%s270 + $0x2c28] sm:$0xff]
        %v1799 = vld [vmem:[%s270 + $0x2c30] sm:$0xff]
        %v1800 = vld [vmem:[%s270 + $0x2c38] sm:$0xff]
        %v1801 = vld [vmem:[%s270 + $0x2c40] sm:$0xff]
        %v1802 = vld [vmem:[%s270 + $0x2c48] sm:$0xff]
        %v1803 = vld [vmem:[%s270 + $0x2c50] sm:$0xff]
        %v1804 = vld [vmem:[%s270 + $0x2c58] sm:$0xff]
        %v1805 = vld [vmem:[%s270 + $0x2c60] sm:$0xff]
        %v1806 = vld [vmem:[%s270 + $0x2c68] sm:$0xff]
        %v1807 = vld [vmem:[%s270 + $0x2c70] sm:$0xff]
        %v1808 = vld [vmem:[%s270 + $0x2c78] sm:$0xff]
        %v1809 = vld [vmem:[%s270 + $0x2c80] sm:$0xff]
        %v1810 = vld [vmem:[%s270 + $0x2c88] sm:$0xff]
        %v1811 = vld [vmem:[%s270 + $0x2c90] sm:$0xff]
        %v1812 = vld [vmem:[%s270 + $0x2c98] sm:$0xff]
        %v1813 = vld [vmem:[%s270 + $0x2ca0] sm:$0xff]
        %v1814 = vld [vmem:[%s270 + $0x2ca8] sm:$0xff]
        %v1815 = vld [vmem:[%s270 + $0x2cb0] sm:$0xff]
        %v1816 = vld [vmem:[%s270 + $0x2cb8] sm:$0xff]
        %v1817 = vld [vmem:[%s270 + $0x2cc0] sm:$0xff]
        %v1818 = vld [vmem:[%s270 + $0x2cc8] sm:$0xff]
        %v1819 = vld [vmem:[%s270 + $0x2cd0] sm:$0xff]
        %v1820 = vld [vmem:[%s270 + $0x2cd8] sm:$0xff]
        %v1821 = vld [vmem:[%s270 + $0x2ce0] sm:$0xff]
        %v1822 = vld [vmem:[%s270 + $0x2ce8] sm:$0xff]
        %v1823 = vld [vmem:[%s270 + $0x2cf0] sm:$0xff]
        %v1824 = vld [vmem:[%s270 + $0x2cf8] sm:$0xff]
        %v1825 = vld [vmem:[%s270 + $0x2d00] sm:$0xff]
        %v1826 = vld [vmem:[%s270 + $0x2d08] sm:$0xff]
        %v1827 = vld [vmem:[%s270 + $0x2d10] sm:$0xff]
        %v1828 = vld [vmem:[%s270 + $0x2d18] sm:$0xff]
        %v1829 = vld [vmem:[%s270 + $0x2d20] sm:$0xff]
        %v1830 = vld [vmem:[%s270 + $0x2d28] sm:$0xff]
        %v1831 = vld [vmem:[%s270 + $0x2d30] sm:$0xff]
        %v1832 = vld [vmem:[%s270 + $0x2d38] sm:$0xff]
        %v1833 = vld [vmem:[%s270 + $0x2d40] sm:$0xff]
        %v1834 = vld [vmem:[%s270 + $0x2d48] sm:$0xff]
        %v1835 = vld [vmem:[%s270 + $0x2d50] sm:$0xff]
        %v1836 = vld [vmem:[%s270 + $0x2d58] sm:$0xff]
        %v1837 = vld [vmem:[%s270 + $0x2d60] sm:$0xff]
        %v1838 = vld [vmem:[%s270 + $0x2d68] sm:$0xff]
        %v1839 = vld [vmem:[%s270 + $0x2d70] sm:$0xff]
        %v1840 = vld [vmem:[%s270 + $0x2d78] sm:$0xff]
        %v1841 = vld [vmem:[%s270 + $0x2d80] sm:$0xff]
        %v1842 = vld [vmem:[%s270 + $0x2d88] sm:$0xff]
        %v1843 = vld [vmem:[%s270 + $0x2d90] sm:$0xff]
        %v1844 = vld [vmem:[%s270 + $0x2d98] sm:$0xff]
        %v1845 = vld [vmem:[%s270 + $0x2da0] sm:$0xff]
        %v1846 = vld [vmem:[%s270 + $0x2da8] sm:$0xff]
        %v1847 = vld [vmem:[%s270 + $0x2db0] sm:$0xff]
        %v1848 = vld [vmem:[%s270 + $0x2db8] sm:$0xff]
        %v1849 = vld [vmem:[%s270 + $0x2dc0] sm:$0xff]
        %v1850 = vld [vmem:[%s270 + $0x2dc8] sm:$0xff]
        %v1851 = vld [vmem:[%s270 + $0x2dd0] sm:$0xff]
        %v1852 = vld [vmem:[%s270 + $0x2dd8] sm:$0xff]
        %v1853 = vld [vmem:[%s270 + $0x2de0] sm:$0xff]
        %v1854 = vld [vmem:[%s270 + $0x2de8] sm:$0xff]
        %v1855 = vld [vmem:[%s270 + $0x2df0] sm:$0xff]
        %v1856 = vld [vmem:[%s270 + $0x2df8] sm:$0xff]
        %v1857 = vld [vmem:[%s270 + $0x2e00] sm:$0xff]
        %v1858 = vld [vmem:[%s270 + $0x2e08] sm:$0xff]
        %v1859 = vld [vmem:[%s270 + $0x2e10] sm:$0xff]
        %v1860 = vld [vmem:[%s270 + $0x2e18] sm:$0xff]
        %v1861 = vld [vmem:[%s270 + $0x2e20] sm:$0xff]
        %v1862 = vld [vmem:[%s270 + $0x2e28] sm:$0xff]
        %v1863 = vld [vmem:[%s270 + $0x2e30] sm:$0xff]
        %v1864 = vld [vmem:[%s270 + $0x2e38] sm:$0xff]
        %v1865 = vld [vmem:[%s270 + $0x2e40] sm:$0xff]
        %v1866 = vld [vmem:[%s270 + $0x2e48] sm:$0xff]
        %v1867 = vld [vmem:[%s270 + $0x2e50] sm:$0xff]
        %v1868 = vld [vmem:[%s270 + $0x2e58] sm:$0xff]
        %v1869 = vld [vmem:[%s270 + $0x2e60] sm:$0xff]
        %v1870 = vld [vmem:[%s270 + $0x2e68] sm:$0xff]
        %v1871 = vld [vmem:[%s270 + $0x2e70] sm:$0xff]
        %v1872 = vld [vmem:[%s270 + $0x2e78] sm:$0xff]
        %v1873 = vld [vmem:[%s270 + $0x2e80] sm:$0xff]
        %v1874 = vld [vmem:[%s270 + $0x2e88] sm:$0xff]
        %v1875 = vld [vmem:[%s270 + $0x2e90] sm:$0xff]
        %v1876 = vld [vmem:[%s270 + $0x2e98] sm:$0xff]
        %v1877 = vld [vmem:[%s270 + $0x2ea0] sm:$0xff]
        %v1878 = vld [vmem:[%s270 + $0x2ea8] sm:$0xff]
        %v1879 = vld [vmem:[%s270 + $0x2eb0] sm:$0xff]
        %v1880 = vld [vmem:[%s270 + $0x2eb8] sm:$0xff]
        %v1881 = vld [vmem:[%s270 + $0x2ec0] sm:$0xff]
        %v1882 = vld [vmem:[%s270 + $0x2ec8] sm:$0xff]
        %v1883 = vld [vmem:[%s270 + $0x2ed0] sm:$0xff]
        %v1884 = vld [vmem:[%s270 + $0x2ed8] sm:$0xff]
        %v1885 = vld [vmem:[%s270 + $0x2ee0] sm:$0xff]
        %v1886 = vld [vmem:[%s270 + $0x2ee8] sm:$0xff]
        %v1887 = vld [vmem:[%s270 + $0x2ef0] sm:$0xff]
        %v1888 = vld [vmem:[%s270 + $0x2ef8] sm:$0xff]
        %v1889 = vld [vmem:[%s270 + $0x2f00] sm:$0xff]
        %v1890 = vld [vmem:[%s270 + $0x2f08] sm:$0xff]
        %v1891 = vld [vmem:[%s270 + $0x2f10] sm:$0xff]
        %v1892 = vld [vmem:[%s270 + $0x2f18] sm:$0xff]
        %v1893 = vld [vmem:[%s270 + $0x2f20] sm:$0xff]
        %v1894 = vld [vmem:[%s270 + $0x2f28] sm:$0xff]
        %v1895 = vld [vmem:[%s270 + $0x2f30] sm:$0xff]
        %v1896 = vld [vmem:[%s270 + $0x2f38] sm:$0xff]
        %v1897 = vld [vmem:[%s270 + $0x2f40] sm:$0xff]
        %v1898 = vld [vmem:[%s270 + $0x2f48] sm:$0xff]
        %v1899 = vld [vmem:[%s270 + $0x2f50] sm:$0xff]
        %v1900 = vld [vmem:[%s270 + $0x2f58] sm:$0xff]
        %v1901 = vld [vmem:[%s270 + $0x2f60] sm:$0xff]
        %v1902 = vld [vmem:[%s270 + $0x2f68] sm:$0xff]
        %v1903 = vld [vmem:[%s270 + $0x2f70] sm:$0xff]
        %v1904 = vld [vmem:[%s270 + $0x2f78] sm:$0xff]
        %v1905 = vld [vmem:[%s270 + $0x2f80] sm:$0xff]
        %v1906 = vld [vmem:[%s270 + $0x2f88] sm:$0xff]
        %v1907 = vld [vmem:[%s270 + $0x2f90] sm:$0xff]
        %v1908 = vld [vmem:[%s270 + $0x2f98] sm:$0xff]
        %v1909 = vld [vmem:[%s270 + $0x2fa0] sm:$0xff]
        %v1910 = vld [vmem:[%s270 + $0x2fa8] sm:$0xff]
        %v1911 = vld [vmem:[%s270 + $0x2fb0] sm:$0xff]
        %v1912 = vld [vmem:[%s270 + $0x2fb8] sm:$0xff]
        %v1913 = vld [vmem:[%s270 + $0x2fc0] sm:$0xff]
        %v1914 = vld [vmem:[%s270 + $0x2fc8] sm:$0xff]
        %v1915 = vld [vmem:[%s270 + $0x2fd0] sm:$0xff]
        %v1916 = vld [vmem:[%s270 + $0x2fd8] sm:$0xff]
        %v1917 = vld [vmem:[%s270 + $0x2fe0] sm:$0xff]
        %v1918 = vld [vmem:[%s270 + $0x2fe8] sm:$0xff]
        %v1919 = vld [vmem:[%s270 + $0x2ff0] sm:$0xff]
        %v1920 = vld [vmem:[%s270 + $0x2ff8] sm:$0xff]
        %v1921 = vld [vmem:[%s270 + $0x3000] sm:$0xff]
        %v1922 = vld [vmem:[%s270 + $0x3008] sm:$0xff]
        %v1923 = vld [vmem:[%s270 + $0x3010] sm:$0xff]
        %v1924 = vld [vmem:[%s270 + $0x3018] sm:$0xff]
        %v1925 = vld [vmem:[%s270 + $0x3020] sm:$0xff]
        %v1926 = vld [vmem:[%s270 + $0x3028] sm:$0xff]
        %v1927 = vld [vmem:[%s270 + $0x3030] sm:$0xff]
        %v1928 = vld [vmem:[%s270 + $0x3038] sm:$0xff]
        %v1929 = vld [vmem:[%s270 + $0x3040] sm:$0xff]
        %v1930 = vld [vmem:[%s270 + $0x3048] sm:$0xff]
        %v1931 = vld [vmem:[%s270 + $0x3050] sm:$0xff]
        %v1932 = vld [vmem:[%s270 + $0x3058] sm:$0xff]
        %v1933 = vld [vmem:[%s270 + $0x3060] sm:$0xff]
        %v1934 = vld [vmem:[%s270 + $0x3068] sm:$0xff]
        %v1935 = vld [vmem:[%s270 + $0x3070] sm:$0xff]
        %v1936 = vld [vmem:[%s270 + $0x3078] sm:$0xff]
        %v1937 = vld [vmem:[%s270 + $0x3080] sm:$0xff]
        %v1938 = vld [vmem:[%s270 + $0x3088] sm:$0xff]
        %v1939 = vld [vmem:[%s270 + $0x3090] sm:$0xff]
        %v1940 = vld [vmem:[%s270 + $0x3098] sm:$0xff]
        %v1941 = vld [vmem:[%s270 + $0x30a0] sm:$0xff]
        %v1942 = vld [vmem:[%s270 + $0x30a8] sm:$0xff]
        %v1943 = vld [vmem:[%s270 + $0x30b0] sm:$0xff]
        %v1944 = vld [vmem:[%s270 + $0x30b8] sm:$0xff]
        %v1945 = vld [vmem:[%s270 + $0x30c0] sm:$0xff]
        %v1946 = vld [vmem:[%s270 + $0x30c8] sm:$0xff]
        %v1947 = vld [vmem:[%s270 + $0x30d0] sm:$0xff]
        %v1948 = vld [vmem:[%s270 + $0x30d8] sm:$0xff]
        %v1949 = vld [vmem:[%s270 + $0x30e0] sm:$0xff]
        %v1950 = vld [vmem:[%s270 + $0x30e8] sm:$0xff]
        %v1951 = vld [vmem:[%s270 + $0x30f0] sm:$0xff]
        %v1952 = vld [vmem:[%s270 + $0x30f8] sm:$0xff]
        %1953 = vmatprep.subr.mxu0 0.0
        %1954 = vmatpush1.msra.mxu0 %v385
        %1955 = vmatprep.subr.mxu0 0.0
        %1956 = vmatpush1.msra.mxu0 %v386
        %1957 = vmatprep.subr.mxu0 0.0
        %1958 = vmatpush1.msra.mxu0 %v387
        %1959 = vmatprep.subr.mxu0 0.0
        %1960 = vmatpush1.msra.mxu0 %v388
        %1961 = vmatprep.subr.mxu0 0.0
        %1962 = vmatpush1.msra.mxu0 %v389
        %1963 = vmatprep.subr.mxu0 0.0
        %1964 = vmatpush1.msra.mxu0 %v390
        %1965 = vmatprep.subr.mxu0 0.0
        %1966 = vmatpush1.msra.mxu0 %v391
        %1967 = vmatprep.subr.mxu0 0.0
        %1968 = vmatpush1.msra.mxu0 %v392
        %1969 = vmatprep.subr.mxu0 0.0
        %1970 = vmatpush1.msra.mxu0 %v393
        %1971 = vmatprep.subr.mxu0 0.0
        %1972 = vmatpush1.msra.mxu0 %v394
        %1973 = vmatprep.subr.mxu0 0.0
        %1974 = vmatpush1.msra.mxu0 %v395
        %1975 = vmatprep.subr.mxu0 0.0
        %1976 = vmatpush1.msra.mxu0 %v396
        %1977 = vmatprep.subr.mxu0 0.0
        %1978 = vmatpush1.msra.mxu0 %v397
        %1979 = vmatprep.subr.mxu0 0.0
        %1980 = vmatpush1.msra.mxu0 %v398
        %1981 = vmatprep.subr.mxu0 0.0
        %1982 = vmatpush1.msra.mxu0 %v399
        %1983 = vmatprep.subr.mxu0 0.0
        %1984 = vmatpush1.msra.mxu0 %v400
        %1985 = vmatprep.subr.mxu0 0.0
        %1986 = vmatpush1.msra.mxu0 %v401
        %1987 = vmatprep.subr.mxu0 0.0
        %1988 = vmatpush1.msra.mxu0 %v402
        %1989 = vmatprep.subr.mxu0 0.0
        %1990 = vmatpush1.msra.mxu0 %v403
        %1991 = vmatprep.subr.mxu0 0.0
        %1992 = vmatpush1.msra.mxu0 %v404
        %1993 = vmatprep.subr.mxu0 0.0
        %1994 = vmatpush1.msra.mxu0 %v405
        %1995 = vmatprep.subr.mxu0 0.0
        %1996 = vmatpush1.msra.mxu0 %v406
        %1997 = vmatprep.subr.mxu0 0.0
        %1998 = vmatpush1.msra.mxu0 %v407
        %1999 = vmatprep.subr.mxu0 0.0
        %2000 = vmatpush1.msra.mxu0 %v408
        %2001 = vmatprep.subr.mxu0 0.0
        %2002 = vmatpush1.msra.mxu0 %v409
        %2003 = vmatprep.subr.mxu0 0.0
        %2004 = vmatpush1.msra.mxu0 %v410
        %2005 = vmatprep.subr.mxu0 0.0
        %2006 = vmatpush1.msra.mxu0 %v411
        %2007 = vmatprep.subr.mxu0 0.0
        %2008 = vmatpush1.msra.mxu0 %v412
        %2009 = vmatprep.subr.mxu0 0.0
        %2010 = vmatpush1.msra.mxu0 %v413
        %2011 = vmatprep.subr.mxu0 0.0
        %2012 = vmatpush1.msra.mxu0 %v414
        %2013 = vmatprep.subr.mxu0 0.0
        %2014 = vmatpush1.msra.mxu0 %v415
        %2015 = vmatprep.subr.mxu0 0.0
        %2016 = vmatpush1.msra.mxu0 %v416
        %2017 = vmatprep.mubr.f32.mxu0 %v288
        %2018 = vmatmul.mubr.f32.gmra.mrb[0].mxu0 %v287
        %v2019 = vpop.f32.mrb[0].mxu0
        %v2020 = vadd.f32 0.0, %v2019
        %v2021 = vpop.f32.mrb[0].mxu0
        %2022 = vdwg.mxu0
        %2023 = vmatprep.subr.mxu0 0.0
        %2024 = vmatpush1.msra.mxu0 %v417
        %2025 = vmatprep.subr.mxu0 0.0
        %2026 = vmatpush1.msra.mxu0 %v418
        %2027 = vmatprep.subr.mxu0 0.0
        %2028 = vmatpush1.msra.mxu0 %v419
        %2029 = vmatprep.subr.mxu0 0.0
        %2030 = vmatpush1.msra.mxu0 %v420
        %2031 = vmatprep.subr.mxu0 0.0
        %2032 = vmatpush1.msra.mxu0 %v421
        %2033 = vmatprep.subr.mxu0 0.0
        %2034 = vmatpush1.msra.mxu0 %v422
        %2035 = vmatprep.subr.mxu0 0.0
        %2036 = vmatpush1.msra.mxu0 %v423
        %2037 = vmatprep.subr.mxu0 0.0
        %2038 = vmatpush1.msra.mxu0 %v424
        %2039 = vmatprep.subr.mxu0 0.0
        %2040 = vmatpush1.msra.mxu0 %v425
        %2041 = vmatprep.subr.mxu0 0.0
        %2042 = vmatpush1.msra.mxu0 %v426
        %2043 = vmatprep.subr.mxu0 0.0
        %2044 = vmatpush1.msra.mxu0 %v427
        %2045 = vmatprep.subr.mxu0 0.0
        %2046 = vmatpush1.msra.mxu0 %v428
        %2047 = vmatprep.subr.mxu0 0.0
        %2048 = vmatpush1.msra.mxu0 %v429
        %2049 = vmatprep.subr.mxu0 0.0
        %2050 = vmatpush1.msra.mxu0 %v430
        %2051 = vmatprep.subr.mxu0 0.0
        %2052 = vmatpush1.msra.mxu0 %v431
        %2053 = vmatprep.subr.mxu0 0.0
        %2054 = vmatpush1.msra.mxu0 %v432
        %2055 = vmatprep.subr.mxu0 0.0
        %2056 = vmatpush1.msra.mxu0 %v433
        %2057 = vmatprep.subr.mxu0 0.0
        %2058 = vmatpush1.msra.mxu0 %v434
        %2059 = vmatprep.subr.mxu0 0.0
        %2060 = vmatpush1.msra.mxu0 %v435
        %2061 = vmatprep.subr.mxu0 0.0
        %2062 = vmatpush1.msra.mxu0 %v436
        %2063 = vmatprep.subr.mxu0 0.0
        %2064 = vmatpush1.msra.mxu0 %v437
        %2065 = vmatprep.subr.mxu0 0.0
        %2066 = vmatpush1.msra.mxu0 %v438
        %2067 = vmatprep.subr.mxu0 0.0
        %2068 = vmatpush1.msra.mxu0 %v439
        %2069 = vmatprep.subr.mxu0 0.0
        %2070 = vmatpush1.msra.mxu0 %v440
        %2071 = vmatprep.subr.mxu0 0.0
        %2072 = vmatpush1.msra.mxu0 %v441
        %2073 = vmatprep.subr.mxu0 0.0
        %2074 = vmatpush1.msra.mxu0 %v442
        %2075 = vmatprep.subr.mxu0 0.0
        %2076 = vmatpush1.msra.mxu0 %v443
        %2077 = vmatprep.subr.mxu0 0.0
        %2078 = vmatpush1.msra.mxu0 %v444
        %2079 = vmatprep.subr.mxu0 0.0
        %2080 = vmatpush1.msra.mxu0 %v445
        %2081 = vmatprep.subr.mxu0 0.0
        %2082 = vmatpush1.msra.mxu0 %v446
        %2083 = vmatprep.subr.mxu0 0.0
        %2084 = vmatpush1.msra.mxu0 %v447
        %2085 = vmatprep.subr.mxu0 0.0
        %2086 = vmatpush1.msra.mxu0 %v448
        %2087 = vmatprep.mubr.f32.mxu0 %v290
        %2088 = vmatmul.mubr.f32.gmra.mrb[0].mxu0 %v289
        %v2089 = vpop.f32.mrb[0].mxu0
        %v2090 = vadd.f32 %v2020, %v2089
        %v2091 = vpop.f32.mrb[0].mxu0
        %2092 = vdwg.mxu0
        %2093 = vmatprep.subr.mxu0 0.0
        %2094 = vmatpush1.msra.mxu0 %v449
        %2095 = vmatprep.subr.mxu0 0.0
        %2096 = vmatpush1.msra.mxu0 %v450
        %2097 = vmatprep.subr.mxu0 0.0
        %2098 = vmatpush1.msra.mxu0 %v451
        %2099 = vmatprep.subr.mxu0 0.0
        %2100 = vmatpush1.msra.mxu0 %v452
        %2101 = vmatprep.subr.mxu0 0.0
        %2102 = vmatpush1.msra.mxu0 %v453
        %2103 = vmatprep.subr.mxu0 0.0
        %2104 = vmatpush1.msra.mxu0 %v454
        %2105 = vmatprep.subr.mxu0 0.0
        %2106 = vmatpush1.msra.mxu0 %v455
        %2107 = vmatprep.subr.mxu0 0.0
        %2108 = vmatpush1.msra.mxu0 %v456
        %2109 = vmatprep.subr.mxu0 0.0
        %2110 = vmatpush1.msra.mxu0 %v457
        %2111 = vmatprep.subr.mxu0 0.0
        %2112 = vmatpush1.msra.mxu0 %v458
        %2113 = vmatprep.subr.mxu0 0.0
        %2114 = vmatpush1.msra.mxu0 %v459
        %2115 = vmatprep.subr.mxu0 0.0
        %2116 = vmatpush1.msra.mxu0 %v460
        %2117 = vmatprep.subr.mxu0 0.0
        %2118 = vmatpush1.msra.mxu0 %v461
        %2119 = vmatprep.subr.mxu0 0.0
        %2120 = vmatpush1.msra.mxu0 %v462
        %2121 = vmatprep.subr.mxu0 0.0
        %2122 = vmatpush1.msra.mxu0 %v463
        %2123 = vmatprep.subr.mxu0 0.0
        %2124 = vmatpush1.msra.mxu0 %v464
        %2125 = vmatprep.subr.mxu0 0.0
        %2126 = vmatpush1.msra.mxu0 %v465
        %2127 = vmatprep.subr.mxu0 0.0
        %2128 = vmatpush1.msra.mxu0 %v466
        %2129 = vmatprep.subr.mxu0 0.0
        %2130 = vmatpush1.msra.mxu0 %v467
        %2131 = vmatprep.subr.mxu0 0.0
        %2132 = vmatpush1.msra.mxu0 %v468
        %2133 = vmatprep.subr.mxu0 0.0
        %2134 = vmatpush1.msra.mxu0 %v469
        %2135 = vmatprep.subr.mxu0 0.0
        %2136 = vmatpush1.msra.mxu0 %v470
        %2137 = vmatprep.subr.mxu0 0.0
        %2138 = vmatpush1.msra.mxu0 %v471
        %2139 = vmatprep.subr.mxu0 0.0
        %2140 = vmatpush1.msra.mxu0 %v472
        %2141 = vmatprep.subr.mxu0 0.0
        %2142 = vmatpush1.msra.mxu0 %v473
        %2143 = vmatprep.subr.mxu0 0.0
        %2144 = vmatpush1.msra.mxu0 %v474
        %2145 = vmatprep.subr.mxu0 0.0
        %2146 = vmatpush1.msra.mxu0 %v475
        %2147 = vmatprep.subr.mxu0 0.0
        %2148 = vmatpush1.msra.mxu0 %v476
        %2149 = vmatprep.subr.mxu0 0.0
        %2150 = vmatpush1.msra.mxu0 %v477
        %2151 = vmatprep.subr.mxu0 0.0
        %2152 = vmatpush1.msra.mxu0 %v478
        %2153 = vmatprep.subr.mxu0 0.0
        %2154 = vmatpush1.msra.mxu0 %v479
        %2155 = vmatprep.subr.mxu0 0.0
        %2156 = vmatpush1.msra.mxu0 %v480
        %2157 = vmatprep.mubr.f32.mxu0 %v292
        %2158 = vmatmul.mubr.f32.gmra.mrb[0].mxu0 %v291
        %v2159 = vpop.f32.mrb[0].mxu0
        %v2160 = vadd.f32 %v2090, %v2159
        %v2161 = vpop.f32.mrb[0].mxu0
        %2162 = vdwg.mxu0
        %2163 = vmatprep.subr.mxu0 0.0
        %2164 = vmatpush1.msra.mxu0 %v481
        %2165 = vmatprep.subr.mxu0 0.0
        %2166 = vmatpush1.msra.mxu0 %v482
        %2167 = vmatprep.subr.mxu0 0.0
        %2168 = vmatpush1.msra.mxu0 %v483
        %2169 = vmatprep.subr.mxu0 0.0
        %2170 = vmatpush1.msra.mxu0 %v484
        %2171 = vmatprep.subr.mxu0 0.0
        %2172 = vmatpush1.msra.mxu0 %v485
        %2173 = vmatprep.subr.mxu0 0.0
        %2174 = vmatpush1.msra.mxu0 %v486
        %2175 = vmatprep.subr.mxu0 0.0
        %2176 = vmatpush1.msra.mxu0 %v487
        %2177 = vmatprep.subr.mxu0 0.0
        %2178 = vmatpush1.msra.mxu0 %v488
        %2179 = vmatprep.subr.mxu0 0.0
        %2180 = vmatpush1.msra.mxu0 %v489
        %2181 = vmatprep.subr.mxu0 0.0
        %2182 = vmatpush1.msra.mxu0 %v490
        %2183 = vmatprep.subr.mxu0 0.0
        %2184 = vmatpush1.msra.mxu0 %v491
        %2185 = vmatprep.subr.mxu0 0.0
        %2186 = vmatpush1.msra.mxu0 %v492
        %2187 = vmatprep.subr.mxu0 0.0
        %2188 = vmatpush1.msra.mxu0 %v493
        %2189 = vmatprep.subr.mxu0 0.0
        %2190 = vmatpush1.msra.mxu0 %v494
        %2191 = vmatprep.subr.mxu0 0.0
        %2192 = vmatpush1.msra.mxu0 %v495
        %2193 = vmatprep.subr.mxu0 0.0
        %2194 = vmatpush1.msra.mxu0 %v496
        %2195 = vmatprep.subr.mxu0 0.0
        %2196 = vmatpush1.msra.mxu0 %v497
        %2197 = vmatprep.subr.mxu0 0.0
        %2198 = vmatpush1.msra.mxu0 %v498
        %2199 = vmatprep.subr.mxu0 0.0
        %2200 = vmatpush1.msra.mxu0 %v499
        %2201 = vmatprep.subr.mxu0 0.0
        %2202 = vmatpush1.msra.mxu0 %v500
        %2203 = vmatprep.subr.mxu0 0.0
        %2204 = vmatpush1.msra.mxu0 %v501
        %2205 = vmatprep.subr.mxu0 0.0
        %2206 = vmatpush1.msra.mxu0 %v502
        %2207 = vmatprep.subr.mxu0 0.0
        %2208 = vmatpush1.msra.mxu0 %v503
        %2209 = vmatprep.subr.mxu0 0.0
        %2210 = vmatpush1.msra.mxu0 %v504
        %2211 = vmatprep.subr.mxu0 0.0
        %2212 = vmatpush1.msra.mxu0 %v505
        %2213 = vmatprep.subr.mxu0 0.0
        %2214 = vmatpush1.msra.mxu0 %v506
        %2215 = vmatprep.subr.mxu0 0.0
        %2216 = vmatpush1.msra.mxu0 %v507
        %2217 = vmatprep.subr.mxu0 0.0
        %2218 = vmatpush1.msra.mxu0 %v508
        %2219 = vmatprep.subr.mxu0 0.0
        %2220 = vmatpush1.msra.mxu0 %v509
        %2221 = vmatprep.subr.mxu0 0.0
        %2222 = vmatpush1.msra.mxu0 %v510
        %2223 = vmatprep.subr.mxu0 0.0
        %2224 = vmatpush1.msra.mxu0 %v511
        %2225 = vmatprep.subr.mxu0 0.0
        %2226 = vmatpush1.msra.mxu0 %v512
        %2227 = vmatprep.mubr.f32.mxu0 %v294
        %2228 = vmatmul.mubr.f32.gmra.mrb[0].mxu0 %v293
        %v2229 = vpop.f32.mrb[0].mxu0
        %v2230 = vadd.f32 %v2160, %v2229
        %v2231 = vpop.f32.mrb[0].mxu0
        %2232 = vdwg.mxu0
        %2233 = vmatprep.subr.mxu0 0.0
        %2234 = vmatpush1.msra.mxu0 %v513
        %2235 = vmatprep.subr.mxu0 0.0
        %2236 = vmatpush1.msra.mxu0 %v514
        %2237 = vmatprep.subr.mxu0 0.0
        %2238 = vmatpush1.msra.mxu0 %v515
        %2239 = vmatprep.subr.mxu0 0.0
        %2240 = vmatpush1.msra.mxu0 %v516
        %2241 = vmatprep.subr.mxu0 0.0
        %2242 = vmatpush1.msra.mxu0 %v517
        %2243 = vmatprep.subr.mxu0 0.0
        %2244 = vmatpush1.msra.mxu0 %v518
        %2245 = vmatprep.subr.mxu0 0.0
        %2246 = vmatpush1.msra.mxu0 %v519
        %2247 = vmatprep.subr.mxu0 0.0
        %2248 = vmatpush1.msra.mxu0 %v520
        %2249 = vmatprep.subr.mxu0 0.0
        %2250 = vmatpush1.msra.mxu0 %v521
        %2251 = vmatprep.subr.mxu0 0.0
        %2252 = vmatpush1.msra.mxu0 %v522
        %2253 = vmatprep.subr.mxu0 0.0
        %2254 = vmatpush1.msra.mxu0 %v523
        %2255 = vmatprep.subr.mxu0 0.0
        %2256 = vmatpush1.msra.mxu0 %v524
        %2257 = vmatprep.subr.mxu0 0.0
        %2258 = vmatpush1.msra.mxu0 %v525
        %2259 = vmatprep.subr.mxu0 0.0
        %2260 = vmatpush1.msra.mxu0 %v526
        %2261 = vmatprep.subr.mxu0 0.0
        %2262 = vmatpush1.msra.mxu0 %v527
        %2263 = vmatprep.subr.mxu0 0.0
        %2264 = vmatpush1.msra.mxu0 %v528
        %2265 = vmatprep.subr.mxu0 0.0
        %2266 = vmatpush1.msra.mxu0 %v529
        %2267 = vmatprep.subr.mxu0 0.0
        %2268 = vmatpush1.msra.mxu0 %v530
        %2269 = vmatprep.subr.mxu0 0.0
        %2270 = vmatpush1.msra.mxu0 %v531
        %2271 = vmatprep.subr.mxu0 0.0
        %2272 = vmatpush1.msra.mxu0 %v532
        %2273 = vmatprep.subr.mxu0 0.0
        %2274 = vmatpush1.msra.mxu0 %v533
        %2275 = vmatprep.subr.mxu0 0.0
        %2276 = vmatpush1.msra.mxu0 %v534
        %2277 = vmatprep.subr.mxu0 0.0
        %2278 = vmatpush1.msra.mxu0 %v535
        %2279 = vmatprep.subr.mxu0 0.0
        %2280 = vmatpush1.msra.mxu0 %v536
        %2281 = vmatprep.subr.mxu0 0.0
        %2282 = vmatpush1.msra.mxu0 %v537
        %2283 = vmatprep.subr.mxu0 0.0
        %2284 = vmatpush1.msra.mxu0 %v538
        %2285 = vmatprep.subr.mxu0 0.0
        %2286 = vmatpush1.msra.mxu0 %v539
        %2287 = vmatprep.subr.mxu0 0.0
        %2288 = vmatpush1.msra.mxu0 %v540
        %2289 = vmatprep.subr.mxu0 0.0
        %2290 = vmatpush1.msra.mxu0 %v541
        %2291 = vmatprep.subr.mxu0 0.0
        %2292 = vmatpush1.msra.mxu0 %v542
        %2293 = vmatprep.subr.mxu0 0.0
        %2294 = vmatpush1.msra.mxu0 %v543
        %2295 = vmatprep.subr.mxu0 0.0
        %2296 = vmatpush1.msra.mxu0 %v544
        %2297 = vmatprep.mubr.f32.mxu0 %v296
        %2298 = vmatmul.mubr.f32.gmra.mrb[0].mxu0 %v295
        %v2299 = vpop.f32.mrb[0].mxu0
        %v2300 = vadd.f32 %v2230, %v2299
        %v2301 = vpop.f32.mrb[0].mxu0
        %2302 = vdwg.mxu0
        %2303 = vmatprep.subr.mxu0 0.0
        %2304 = vmatpush1.msra.mxu0 %v545
        %2305 = vmatprep.subr.mxu0 0.0
        %2306 = vmatpush1.msra.mxu0 %v546
        %2307 = vmatprep.subr.mxu0 0.0
        %2308 = vmatpush1.msra.mxu0 %v547
        %2309 = vmatprep.subr.mxu0 0.0
        %2310 = vmatpush1.msra.mxu0 %v548
        %2311 = vmatprep.subr.mxu0 0.0
        %2312 = vmatpush1.msra.mxu0 %v549
        %2313 = vmatprep.subr.mxu0 0.0
        %2314 = vmatpush1.msra.mxu0 %v550
        %2315 = vmatprep.subr.mxu0 0.0
        %2316 = vmatpush1.msra.mxu0 %v551
        %2317 = vmatprep.subr.mxu0 0.0
        %2318 = vmatpush1.msra.mxu0 %v552
        %2319 = vmatprep.subr.mxu0 0.0
        %2320 = vmatpush1.msra.mxu0 %v553
        %2321 = vmatprep.subr.mxu0 0.0
        %2322 = vmatpush1.msra.mxu0 %v554
        %2323 = vmatprep.subr.mxu0 0.0
        %2324 = vmatpush1.msra.mxu0 %v555
        %2325 = vmatprep.subr.mxu0 0.0
        %2326 = vmatpush1.msra.mxu0 %v556
        %2327 = vmatprep.subr.mxu0 0.0
        %2328 = vmatpush1.msra.mxu0 %v557
        %2329 = vmatprep.subr.mxu0 0.0
        %2330 = vmatpush1.msra.mxu0 %v558
        %2331 = vmatprep.subr.mxu0 0.0
        %2332 = vmatpush1.msra.mxu0 %v559
        %2333 = vmatprep.subr.mxu0 0.0
        %2334 = vmatpush1.msra.mxu0 %v560
        %2335 = vmatprep.subr.mxu0 0.0
        %2336 = vmatpush1.msra.mxu0 %v561
        %2337 = vmatprep.subr.mxu0 0.0
        %2338 = vmatpush1.msra.mxu0 %v562
        %2339 = vmatprep.subr.mxu0 0.0
        %2340 = vmatpush1.msra.mxu0 %v563
        %2341 = vmatprep.subr.mxu0 0.0
        %2342 = vmatpush1.msra.mxu0 %v564
        %2343 = vmatprep.subr.mxu0 0.0
        %2344 = vmatpush1.msra.mxu0 %v565
        %2345 = vmatprep.subr.mxu0 0.0
        %2346 = vmatpush1.msra.mxu0 %v566
        %2347 = vmatprep.subr.mxu0 0.0
        %2348 = vmatpush1.msra.mxu0 %v567
        %2349 = vmatprep.subr.mxu0 0.0
        %2350 = vmatpush1.msra.mxu0 %v568
        %2351 = vmatprep.subr.mxu0 0.0
        %2352 = vmatpush1.msra.mxu0 %v569
        %2353 = vmatprep.subr.mxu0 0.0
        %2354 = vmatpush1.msra.mxu0 %v570
        %2355 = vmatprep.subr.mxu0 0.0
        %2356 = vmatpush1.msra.mxu0 %v571
        %2357 = vmatprep.subr.mxu0 0.0
        %2358 = vmatpush1.msra.mxu0 %v572
        %2359 = vmatprep.subr.mxu0 0.0
        %2360 = vmatpush1.msra.mxu0 %v573
        %2361 = vmatprep.subr.mxu0 0.0
        %2362 = vmatpush1.msra.mxu0 %v574
        %2363 = vmatprep.subr.mxu0 0.0
        %2364 = vmatpush1.msra.mxu0 %v575
        %2365 = vmatprep.subr.mxu0 0.0
        %2366 = vmatpush1.msra.mxu0 %v576
        %2367 = vmatprep.mubr.f32.mxu0 %v298
        %2368 = vmatmul.mubr.f32.gmra.mrb[0].mxu0 %v297
        %v2369 = vpop.f32.mrb[0].mxu0
        %v2370 = vadd.f32 %v2300, %v2369
        %v2371 = vpop.f32.mrb[0].mxu0
        %2372 = vdwg.mxu0
        %2373 = vmatprep.subr.mxu0 0.0
        %2374 = vmatpush1.msra.mxu0 %v577
        %2375 = vmatprep.subr.mxu0 0.0
        %2376 = vmatpush1.msra.mxu0 %v578
        %2377 = vmatprep.subr.mxu0 0.0
        %2378 = vmatpush1.msra.mxu0 %v579
        %2379 = vmatprep.subr.mxu0 0.0
        %2380 = vmatpush1.msra.mxu0 %v580
        %2381 = vmatprep.subr.mxu0 0.0
        %2382 = vmatpush1.msra.mxu0 %v581
        %2383 = vmatprep.subr.mxu0 0.0
        %2384 = vmatpush1.msra.mxu0 %v582
        %2385 = vmatprep.subr.mxu0 0.0
        %2386 = vmatpush1.msra.mxu0 %v583
        %2387 = vmatprep.subr.mxu0 0.0
        %2388 = vmatpush1.msra.mxu0 %v584
        %2389 = vmatprep.subr.mxu0 0.0
        %2390 = vmatpush1.msra.mxu0 %v585
        %2391 = vmatprep.subr.mxu0 0.0
        %2392 = vmatpush1.msra.mxu0 %v586
        %2393 = vmatprep.subr.mxu0 0.0
        %2394 = vmatpush1.msra.mxu0 %v587
        %2395 = vmatprep.subr.mxu0 0.0
        %2396 = vmatpush1.msra.mxu0 %v588
        %2397 = vmatprep.subr.mxu0 0.0
        %2398 = vmatpush1.msra.mxu0 %v589
        %2399 = vmatprep.subr.mxu0 0.0
        %2400 = vmatpush1.msra.mxu0 %v590
        %2401 = vmatprep.subr.mxu0 0.0
        %2402 = vmatpush1.msra.mxu0 %v591
        %2403 = vmatprep.subr.mxu0 0.0
        %2404 = vmatpush1.msra.mxu0 %v592
        %2405 = vmatprep.subr.mxu0 0.0
        %2406 = vmatpush1.msra.mxu0 %v593
        %2407 = vmatprep.subr.mxu0 0.0
        %2408 = vmatpush1.msra.mxu0 %v594
        %2409 = vmatprep.subr.mxu0 0.0
        %2410 = vmatpush1.msra.mxu0 %v595
        %2411 = vmatprep.subr.mxu0 0.0
        %2412 = vmatpush1.msra.mxu0 %v596
        %2413 = vmatprep.subr.mxu0 0.0
        %2414 = vmatpush1.msra.mxu0 %v597
        %2415 = vmatprep.subr.mxu0 0.0
        %2416 = vmatpush1.msra.mxu0 %v598
        %2417 = vmatprep.subr.mxu0 0.0
        %2418 = vmatpush1.msra.mxu0 %v599
        %2419 = vmatprep.subr.mxu0 0.0
        %2420 = vmatpush1.msra.mxu0 %v600
        %2421 = vmatprep.subr.mxu0 0.0
        %2422 = vmatpush1.msra.mxu0 %v601
        %2423 = vmatprep.subr.mxu0 0.0
        %2424 = vmatpush1.msra.mxu0 %v602
        %2425 = vmatprep.subr.mxu0 0.0
        %2426 = vmatpush1.msra.mxu0 %v603
        %2427 = vmatprep.subr.mxu0 0.0
        %2428 = vmatpush1.msra.mxu0 %v604
        %2429 = vmatprep.subr.mxu0 0.0
        %2430 = vmatpush1.msra.mxu0 %v605
        %2431 = vmatprep.subr.mxu0 0.0
        %2432 = vmatpush1.msra.mxu0 %v606
        %2433 = vmatprep.subr.mxu0 0.0
        %2434 = vmatpush1.msra.mxu0 %v607
        %2435 = vmatprep.subr.mxu0 0.0
        %2436 = vmatpush1.msra.mxu0 %v608
        %2437 = vmatprep.mubr.f32.mxu0 %v300
        %2438 = vmatmul.mubr.f32.gmra.mrb[0].mxu0 %v299
        %v2439 = vpop.f32.mrb[0].mxu0
        %v2440 = vadd.f32 %v2370, %v2439
        %v2441 = vpop.f32.mrb[0].mxu0
        %2442 = vdwg.mxu0
        %2443 = vmatprep.subr.mxu0 0.0
        %2444 = vmatpush1.msra.mxu0 %v609
        %2445 = vmatprep.subr.mxu0 0.0
        %2446 = vmatpush1.msra.mxu0 %v610
        %2447 = vmatprep.subr.mxu0 0.0
        %2448 = vmatpush1.msra.mxu0 %v611
        %2449 = vmatprep.subr.mxu0 0.0
        %2450 = vmatpush1.msra.mxu0 %v612
        %2451 = vmatprep.subr.mxu0 0.0
        %2452 = vmatpush1.msra.mxu0 %v613
        %2453 = vmatprep.subr.mxu0 0.0
        %2454 = vmatpush1.msra.mxu0 %v614
        %2455 = vmatprep.subr.mxu0 0.0
        %2456 = vmatpush1.msra.mxu0 %v615
        %2457 = vmatprep.subr.mxu0 0.0
        %2458 = vmatpush1.msra.mxu0 %v616
        %2459 = vmatprep.subr.mxu0 0.0
        %2460 = vmatpush1.msra.mxu0 %v617
        %2461 = vmatprep.subr.mxu0 0.0
        %2462 = vmatpush1.msra.mxu0 %v618
        %2463 = vmatprep.subr.mxu0 0.0
        %2464 = vmatpush1.msra.mxu0 %v619
        %2465 = vmatprep.subr.mxu0 0.0
        %2466 = vmatpush1.msra.mxu0 %v620
        %2467 = vmatprep.subr.mxu0 0.0
        %2468 = vmatpush1.msra.mxu0 %v621
        %2469 = vmatprep.subr.mxu0 0.0
        %2470 = vmatpush1.msra.mxu0 %v622
        %2471 = vmatprep.subr.mxu0 0.0
        %2472 = vmatpush1.msra.mxu0 %v623
        %2473 = vmatprep.subr.mxu0 0.0
        %2474 = vmatpush1.msra.mxu0 %v624
        %2475 = vmatprep.subr.mxu0 0.0
        %2476 = vmatpush1.msra.mxu0 %v625
        %2477 = vmatprep.subr.mxu0 0.0
        %2478 = vmatpush1.msra.mxu0 %v626
        %2479 = vmatprep.subr.mxu0 0.0
        %2480 = vmatpush1.msra.mxu0 %v627
        %2481 = vmatprep.subr.mxu0 0.0
        %2482 = vmatpush1.msra.mxu0 %v628
        %2483 = vmatprep.subr.mxu0 0.0
        %2484 = vmatpush1.msra.mxu0 %v629
        %2485 = vmatprep.subr.mxu0 0.0
        %2486 = vmatpush1.msra.mxu0 %v630
        %2487 = vmatprep.subr.mxu0 0.0
        %2488 = vmatpush1.msra.mxu0 %v631
        %2489 = vmatprep.subr.mxu0 0.0
        %2490 = vmatpush1.msra.mxu0 %v632
        %2491 = vmatprep.subr.mxu0 0.0
        %2492 = vmatpush1.msra.mxu0 %v633
        %2493 = vmatprep.subr.mxu0 0.0
        %2494 = vmatpush1.msra.mxu0 %v634
        %2495 = vmatprep.subr.mxu0 0.0
        %2496 = vmatpush1.msra.mxu0 %v635
        %2497 = vmatprep.subr.mxu0 0.0
        %2498 = vmatpush1.msra.mxu0 %v636
        %2499 = vmatprep.subr.mxu0 0.0
        %2500 = vmatpush1.msra.mxu0 %v637
        %2501 = vmatprep.subr.mxu0 0.0
        %2502 = vmatpush1.msra.mxu0 %v638
        %2503 = vmatprep.subr.mxu0 0.0
        %2504 = vmatpush1.msra.mxu0 %v639
        %2505 = vmatprep.subr.mxu0 0.0
        %2506 = vmatpush1.msra.mxu0 %v640
        %2507 = vmatprep.mubr.f32.mxu0 %v302
        %2508 = vmatmul.mubr.f32.gmra.mrb[0].mxu0 %v301
        %v2509 = vpop.f32.mrb[0].mxu0
        %v2510 = vadd.f32 %v2440, %v2509
        %v2511 = vpop.f32.mrb[0].mxu0
        %2512 = vdwg.mxu0
        %2513 = vmatprep.subr.mxu0 0.0
        %2514 = vmatpush1.msra.mxu0 %v641
        %2515 = vmatprep.subr.mxu0 0.0
        %2516 = vmatpush1.msra.mxu0 %v642
        %2517 = vmatprep.subr.mxu0 0.0
        %2518 = vmatpush1.msra.mxu0 %v643
        %2519 = vmatprep.subr.mxu0 0.0
        %2520 = vmatpush1.msra.mxu0 %v644
        %2521 = vmatprep.subr.mxu0 0.0
        %2522 = vmatpush1.msra.mxu0 %v645
        %2523 = vmatprep.subr.mxu0 0.0
        %2524 = vmatpush1.msra.mxu0 %v646
        %2525 = vmatprep.subr.mxu0 0.0
        %2526 = vmatpush1.msra.mxu0 %v647
        %2527 = vmatprep.subr.mxu0 0.0
        %2528 = vmatpush1.msra.mxu0 %v648
        %2529 = vmatprep.subr.mxu0 0.0
        %2530 = vmatpush1.msra.mxu0 %v649
        %2531 = vmatprep.subr.mxu0 0.0
        %2532 = vmatpush1.msra.mxu0 %v650
        %2533 = vmatprep.subr.mxu0 0.0
        %2534 = vmatpush1.msra.mxu0 %v651
        %2535 = vmatprep.subr.mxu0 0.0
        %2536 = vmatpush1.msra.mxu0 %v652
        %2537 = vmatprep.subr.mxu0 0.0
        %2538 = vmatpush1.msra.mxu0 %v653
        %2539 = vmatprep.subr.mxu0 0.0
        %2540 = vmatpush1.msra.mxu0 %v654
        %2541 = vmatprep.subr.mxu0 0.0
        %2542 = vmatpush1.msra.mxu0 %v655
        %2543 = vmatprep.subr.mxu0 0.0
        %2544 = vmatpush1.msra.mxu0 %v656
        %2545 = vmatprep.subr.mxu0 0.0
        %2546 = vmatpush1.msra.mxu0 %v657
        %2547 = vmatprep.subr.mxu0 0.0
        %2548 = vmatpush1.msra.mxu0 %v658
        %2549 = vmatprep.subr.mxu0 0.0
        %2550 = vmatpush1.msra.mxu0 %v659
        %2551 = vmatprep.subr.mxu0 0.0
        %2552 = vmatpush1.msra.mxu0 %v660
        %2553 = vmatprep.subr.mxu0 0.0
        %2554 = vmatpush1.msra.mxu0 %v661
        %2555 = vmatprep.subr.mxu0 0.0
        %2556 = vmatpush1.msra.mxu0 %v662
        %2557 = vmatprep.subr.mxu0 0.0
        %2558 = vmatpush1.msra.mxu0 %v663
        %2559 = vmatprep.subr.mxu0 0.0
        %2560 = vmatpush1.msra.mxu0 %v664
        %2561 = vmatprep.subr.mxu0 0.0
        %2562 = vmatpush1.msra.mxu0 %v665
        %2563 = vmatprep.subr.mxu0 0.0
        %2564 = vmatpush1.msra.mxu0 %v666
        %2565 = vmatprep.subr.mxu0 0.0
        %2566 = vmatpush1.msra.mxu0 %v667
        %2567 = vmatprep.subr.mxu0 0.0
        %2568 = vmatpush1.msra.mxu0 %v668
        %2569 = vmatprep.subr.mxu0 0.0
        %2570 = vmatpush1.msra.mxu0 %v669
        %2571 = vmatprep.subr.mxu0 0.0
        %2572 = vmatpush1.msra.mxu0 %v670
        %2573 = vmatprep.subr.mxu0 0.0
        %2574 = vmatpush1.msra.mxu0 %v671
        %2575 = vmatprep.subr.mxu0 0.0
        %2576 = vmatpush1.msra.mxu0 %v672
        %2577 = vmatprep.mubr.f32.mxu0 %v304
        %2578 = vmatmul.mubr.f32.gmra.mrb[0].mxu0 %v303
        %v2579 = vpop.f32.mrb[0].mxu0
        %v2580 = vadd.f32 %v2510, %v2579
        %v2581 = vpop.f32.mrb[0].mxu0
        %2582 = vdwg.mxu0
        %2583 = vmatprep.subr.mxu0 0.0
        %2584 = vmatpush1.msra.mxu0 %v673
        %2585 = vmatprep.subr.mxu0 0.0
        %2586 = vmatpush1.msra.mxu0 %v674
        %2587 = vmatprep.subr.mxu0 0.0
        %2588 = vmatpush1.msra.mxu0 %v675
        %2589 = vmatprep.subr.mxu0 0.0
        %2590 = vmatpush1.msra.mxu0 %v676
        %2591 = vmatprep.subr.mxu0 0.0
        %2592 = vmatpush1.msra.mxu0 %v677
        %2593 = vmatprep.subr.mxu0 0.0
        %2594 = vmatpush1.msra.mxu0 %v678
        %2595 = vmatprep.subr.mxu0 0.0
        %2596 = vmatpush1.msra.mxu0 %v679
        %2597 = vmatprep.subr.mxu0 0.0
        %2598 = vmatpush1.msra.mxu0 %v680
        %2599 = vmatprep.subr.mxu0 0.0
        %2600 = vmatpush1.msra.mxu0 %v681
        %2601 = vmatprep.subr.mxu0 0.0
        %2602 = vmatpush1.msra.mxu0 %v682
        %2603 = vmatprep.subr.mxu0 0.0
        %2604 = vmatpush1.msra.mxu0 %v683
        %2605 = vmatprep.subr.mxu0 0.0
        %2606 = vmatpush1.msra.mxu0 %v684
        %2607 = vmatprep.subr.mxu0 0.0
        %2608 = vmatpush1.msra.mxu0 %v685
        %2609 = vmatprep.subr.mxu0 0.0
        %2610 = vmatpush1.msra.mxu0 %v686
        %2611 = vmatprep.subr.mxu0 0.0
        %2612 = vmatpush1.msra.mxu0 %v687
        %2613 = vmatprep.subr.mxu0 0.0
        %2614 = vmatpush1.msra.mxu0 %v688
        %2615 = vmatprep.subr.mxu0 0.0
        %2616 = vmatpush1.msra.mxu0 %v689
        %2617 = vmatprep.subr.mxu0 0.0
        %2618 = vmatpush1.msra.mxu0 %v690
        %2619 = vmatprep.subr.mxu0 0.0
        %2620 = vmatpush1.msra.mxu0 %v691
        %2621 = vmatprep.subr.mxu0 0.0
        %2622 = vmatpush1.msra.mxu0 %v692
        %2623 = vmatprep.subr.mxu0 0.0
        %2624 = vmatpush1.msra.mxu0 %v693
        %2625 = vmatprep.subr.mxu0 0.0
        %2626 = vmatpush1.msra.mxu0 %v694
        %2627 = vmatprep.subr.mxu0 0.0
        %2628 = vmatpush1.msra.mxu0 %v695
        %2629 = vmatprep.subr.mxu0 0.0
        %2630 = vmatpush1.msra.mxu0 %v696
        %2631 = vmatprep.subr.mxu0 0.0
        %2632 = vmatpush1.msra.mxu0 %v697
        %2633 = vmatprep.subr.mxu0 0.0
        %2634 = vmatpush1.msra.mxu0 %v698
        %2635 = vmatprep.subr.mxu0 0.0
        %2636 = vmatpush1.msra.mxu0 %v699
        %2637 = vmatprep.subr.mxu0 0.0
        %2638 = vmatpush1.msra.mxu0 %v700
        %2639 = vmatprep.subr.mxu0 0.0
        %2640 = vmatpush1.msra.mxu0 %v701
        %2641 = vmatprep.subr.mxu0 0.0
        %2642 = vmatpush1.msra.mxu0 %v702
        %2643 = vmatprep.subr.mxu0 0.0
        %2644 = vmatpush1.msra.mxu0 %v703
        %2645 = vmatprep.subr.mxu0 0.0
        %2646 = vmatpush1.msra.mxu0 %v704
        %2647 = vmatprep.mubr.f32.mxu0 %v306
        %2648 = vmatmul.mubr.f32.gmra.mrb[0].mxu0 %v305
        %v2649 = vpop.f32.mrb[0].mxu0
        %v2650 = vadd.f32 %v2580, %v2649
        %v2651 = vpop.f32.mrb[0].mxu0
        %2652 = vdwg.mxu0
        %2653 = vmatprep.subr.mxu0 0.0
        %2654 = vmatpush1.msra.mxu0 %v705
        %2655 = vmatprep.subr.mxu0 0.0
        %2656 = vmatpush1.msra.mxu0 %v706
        %2657 = vmatprep.subr.mxu0 0.0
        %2658 = vmatpush1.msra.mxu0 %v707
        %2659 = vmatprep.subr.mxu0 0.0
        %2660 = vmatpush1.msra.mxu0 %v708
        %2661 = vmatprep.subr.mxu0 0.0
        %2662 = vmatpush1.msra.mxu0 %v709
        %2663 = vmatprep.subr.mxu0 0.0
        %2664 = vmatpush1.msra.mxu0 %v710
        %2665 = vmatprep.subr.mxu0 0.0
        %2666 = vmatpush1.msra.mxu0 %v711
        %2667 = vmatprep.subr.mxu0 0.0
        %2668 = vmatpush1.msra.mxu0 %v712
        %2669 = vmatprep.subr.mxu0 0.0
        %2670 = vmatpush1.msra.mxu0 %v713
        %2671 = vmatprep.subr.mxu0 0.0
        %2672 = vmatpush1.msra.mxu0 %v714
        %2673 = vmatprep.subr.mxu0 0.0
        %2674 = vmatpush1.msra.mxu0 %v715
        %2675 = vmatprep.subr.mxu0 0.0
        %2676 = vmatpush1.msra.mxu0 %v716
        %2677 = vmatprep.subr.mxu0 0.0
        %2678 = vmatpush1.msra.mxu0 %v717
        %2679 = vmatprep.subr.mxu0 0.0
        %2680 = vmatpush1.msra.mxu0 %v718
        %2681 = vmatprep.subr.mxu0 0.0
        %2682 = vmatpush1.msra.mxu0 %v719
        %2683 = vmatprep.subr.mxu0 0.0
        %2684 = vmatpush1.msra.mxu0 %v720
        %2685 = vmatprep.subr.mxu0 0.0
        %2686 = vmatpush1.msra.mxu0 %v721
        %2687 = vmatprep.subr.mxu0 0.0
        %2688 = vmatpush1.msra.mxu0 %v722
        %2689 = vmatprep.subr.mxu0 0.0
        %2690 = vmatpush1.msra.mxu0 %v723
        %2691 = vmatprep.subr.mxu0 0.0
        %2692 = vmatpush1.msra.mxu0 %v724
        %2693 = vmatprep.subr.mxu0 0.0
        %2694 = vmatpush1.msra.mxu0 %v725
        %2695 = vmatprep.subr.mxu0 0.0
        %2696 = vmatpush1.msra.mxu0 %v726
        %2697 = vmatprep.subr.mxu0 0.0
        %2698 = vmatpush1.msra.mxu0 %v727
        %2699 = vmatprep.subr.mxu0 0.0
        %2700 = vmatpush1.msra.mxu0 %v728
        %2701 = vmatprep.subr.mxu0 0.0
        %2702 = vmatpush1.msra.mxu0 %v729
        %2703 = vmatprep.subr.mxu0 0.0
        %2704 = vmatpush1.msra.mxu0 %v730
        %2705 = vmatprep.subr.mxu0 0.0
        %2706 = vmatpush1.msra.mxu0 %v731
        %2707 = vmatprep.subr.mxu0 0.0
        %2708 = vmatpush1.msra.mxu0 %v732
        %2709 = vmatprep.subr.mxu0 0.0
        %2710 = vmatpush1.msra.mxu0 %v733
        %2711 = vmatprep.subr.mxu0 0.0
        %2712 = vmatpush1.msra.mxu0 %v734
        %2713 = vmatprep.subr.mxu0 0.0
        %2714 = vmatpush1.msra.mxu0 %v735
        %2715 = vmatprep.subr.mxu0 0.0
        %2716 = vmatpush1.msra.mxu0 %v736
        %2717 = vmatprep.mubr.f32.mxu0 %v308
        %2718 = vmatmul.mubr.f32.gmra.mrb[0].mxu0 %v307
        %v2719 = vpop.f32.mrb[0].mxu0
        %v2720 = vadd.f32 %v2650, %v2719
        %v2721 = vpop.f32.mrb[0].mxu0
        %2722 = vdwg.mxu0
        %2723 = vmatprep.subr.mxu0 0.0
        %2724 = vmatpush1.msra.mxu0 %v737
        %2725 = vmatprep.subr.mxu0 0.0
        %2726 = vmatpush1.msra.mxu0 %v738
        %2727 = vmatprep.subr.mxu0 0.0
        %2728 = vmatpush1.msra.mxu0 %v739
        %2729 = vmatprep.subr.mxu0 0.0
        %2730 = vmatpush1.msra.mxu0 %v740
        %2731 = vmatprep.subr.mxu0 0.0
        %2732 = vmatpush1.msra.mxu0 %v741
        %2733 = vmatprep.subr.mxu0 0.0
        %2734 = vmatpush1.msra.mxu0 %v742
        %2735 = vmatprep.subr.mxu0 0.0
        %2736 = vmatpush1.msra.mxu0 %v743
        %2737 = vmatprep.subr.mxu0 0.0
        %2738 = vmatpush1.msra.mxu0 %v744
        %2739 = vmatprep.subr.mxu0 0.0
        %2740 = vmatpush1.msra.mxu0 %v745
        %2741 = vmatprep.subr.mxu0 0.0
        %2742 = vmatpush1.msra.mxu0 %v746
        %2743 = vmatprep.subr.mxu0 0.0
        %2744 = vmatpush1.msra.mxu0 %v747
        %2745 = vmatprep.subr.mxu0 0.0
        %2746 = vmatpush1.msra.mxu0 %v748
        %2747 = vmatprep.subr.mxu0 0.0
        %2748 = vmatpush1.msra.mxu0 %v749
        %2749 = vmatprep.subr.mxu0 0.0
        %2750 = vmatpush1.msra.mxu0 %v750
        %2751 = vmatprep.subr.mxu0 0.0
        %2752 = vmatpush1.msra.mxu0 %v751
        %2753 = vmatprep.subr.mxu0 0.0
        %2754 = vmatpush1.msra.mxu0 %v752
        %2755 = vmatprep.subr.mxu0 0.0
        %2756 = vmatpush1.msra.mxu0 %v753
        %2757 = vmatprep.subr.mxu0 0.0
        %2758 = vmatpush1.msra.mxu0 %v754
        %2759 = vmatprep.subr.mxu0 0.0
        %2760 = vmatpush1.msra.mxu0 %v755
        %2761 = vmatprep.subr.mxu0 0.0
        %2762 = vmatpush1.msra.mxu0 %v756
        %2763 = vmatprep.subr.mxu0 0.0
        %2764 = vmatpush1.msra.mxu0 %v757
        %2765 = vmatprep.subr.mxu0 0.0
        %2766 = vmatpush1.msra.mxu0 %v758
        %2767 = vmatprep.subr.mxu0 0.0
        %2768 = vmatpush1.msra.mxu0 %v759
        %2769 = vmatprep.subr.mxu0 0.0
        %2770 = vmatpush1.msra.mxu0 %v760
        %2771 = vmatprep.subr.mxu0 0.0
        %2772 = vmatpush1.msra.mxu0 %v761
        %2773 = vmatprep.subr.mxu0 0.0
        %2774 = vmatpush1.msra.mxu0 %v762
        %2775 = vmatprep.subr.mxu0 0.0
        %2776 = vmatpush1.msra.mxu0 %v763
        %2777 = vmatprep.subr.mxu0 0.0
        %2778 = vmatpush1.msra.mxu0 %v764
        %2779 = vmatprep.subr.mxu0 0.0
        %2780 = vmatpush1.msra.mxu0 %v765
        %2781 = vmatprep.subr.mxu0 0.0
        %2782 = vmatpush1.msra.mxu0 %v766
        %2783 = vmatprep.subr.mxu0 0.0
        %2784 = vmatpush1.msra.mxu0 %v767
        %2785 = vmatprep.subr.mxu0 0.0
        %2786 = vmatpush1.msra.mxu0 %v768
        %2787 = vmatprep.mubr.f32.mxu0 %v310
        %2788 = vmatmul.mubr.f32.gmra.mrb[0].mxu0 %v309
        %v2789 = vpop.f32.mrb[0].mxu0
        %v2790 = vadd.f32 %v2720, %v2789
        %v2791 = vpop.f32.mrb[0].mxu0
        %2792 = vdwg.mxu0
        %2793 = vmatprep.subr.mxu0 0.0
        %2794 = vmatpush1.msra.mxu0 %v769
        %2795 = vmatprep.subr.mxu0 0.0
        %2796 = vmatpush1.msra.mxu0 %v770
        %2797 = vmatprep.subr.mxu0 0.0
        %2798 = vmatpush1.msra.mxu0 %v771
        %2799 = vmatprep.subr.mxu0 0.0
        %2800 = vmatpush1.msra.mxu0 %v772
        %2801 = vmatprep.subr.mxu0 0.0
        %2802 = vmatpush1.msra.mxu0 %v773
        %2803 = vmatprep.subr.mxu0 0.0
        %2804 = vmatpush1.msra.mxu0 %v774
        %2805 = vmatprep.subr.mxu0 0.0
        %2806 = vmatpush1.msra.mxu0 %v775
        %2807 = vmatprep.subr.mxu0 0.0
        %2808 = vmatpush1.msra.mxu0 %v776
        %2809 = vmatprep.subr.mxu0 0.0
        %2810 = vmatpush1.msra.mxu0 %v777
        %2811 = vmatprep.subr.mxu0 0.0
        %2812 = vmatpush1.msra.mxu0 %v778
        %2813 = vmatprep.subr.mxu0 0.0
        %2814 = vmatpush1.msra.mxu0 %v779
        %2815 = vmatprep.subr.mxu0 0.0
        %2816 = vmatpush1.msra.mxu0 %v780
        %2817 = vmatprep.subr.mxu0 0.0
        %2818 = vmatpush1.msra.mxu0 %v781
        %2819 = vmatprep.subr.mxu0 0.0
        %2820 = vmatpush1.msra.mxu0 %v782
        %2821 = vmatprep.subr.mxu0 0.0
        %2822 = vmatpush1.msra.mxu0 %v783
        %2823 = vmatprep.subr.mxu0 0.0
        %2824 = vmatpush1.msra.mxu0 %v784
        %2825 = vmatprep.subr.mxu0 0.0
        %2826 = vmatpush1.msra.mxu0 %v785
        %2827 = vmatprep.subr.mxu0 0.0
        %2828 = vmatpush1.msra.mxu0 %v786
        %2829 = vmatprep.subr.mxu0 0.0
        %2830 = vmatpush1.msra.mxu0 %v787
        %2831 = vmatprep.subr.mxu0 0.0
        %2832 = vmatpush1.msra.mxu0 %v788
        %2833 = vmatprep.subr.mxu0 0.0
        %2834 = vmatpush1.msra.mxu0 %v789
        %2835 = vmatprep.subr.mxu0 0.0
        %2836 = vmatpush1.msra.mxu0 %v790
        %2837 = vmatprep.subr.mxu0 0.0
        %2838 = vmatpush1.msra.mxu0 %v791
        %2839 = vmatprep.subr.mxu0 0.0
        %2840 = vmatpush1.msra.mxu0 %v792
        %2841 = vmatprep.subr.mxu0 0.0
        %2842 = vmatpush1.msra.mxu0 %v793
        %2843 = vmatprep.subr.mxu0 0.0
        %2844 = vmatpush1.msra.mxu0 %v794
        %2845 = vmatprep.subr.mxu0 0.0
        %2846 = vmatpush1.msra.mxu0 %v795
        %2847 = vmatprep.subr.mxu0 0.0
        %2848 = vmatpush1.msra.mxu0 %v796
        %2849 = vmatprep.subr.mxu0 0.0
        %2850 = vmatpush1.msra.mxu0 %v797
        %2851 = vmatprep.subr.mxu0 0.0
        %2852 = vmatpush1.msra.mxu0 %v798
        %2853 = vmatprep.subr.mxu0 0.0
        %2854 = vmatpush1.msra.mxu0 %v799
        %2855 = vmatprep.subr.mxu0 0.0
        %2856 = vmatpush1.msra.mxu0 %v800
        %2857 = vmatprep.mubr.f32.mxu0 %v312
        %2858 = vmatmul.mubr.f32.gmra.mrb[0].mxu0 %v311
        %v2859 = vpop.f32.mrb[0].mxu0
        %v2860 = vadd.f32 %v2790, %v2859
        %v2861 = vpop.f32.mrb[0].mxu0
        %2862 = vdwg.mxu0
        %2863 = vmatprep.subr.mxu0 0.0
        %2864 = vmatpush1.msra.mxu0 %v801
        %2865 = vmatprep.subr.mxu0 0.0
        %2866 = vmatpush1.msra.mxu0 %v802
        %2867 = vmatprep.subr.mxu0 0.0
        %2868 = vmatpush1.msra.mxu0 %v803
        %2869 = vmatprep.subr.mxu0 0.0
        %2870 = vmatpush1.msra.mxu0 %v804
        %2871 = vmatprep.subr.mxu0 0.0
        %2872 = vmatpush1.msra.mxu0 %v805
        %2873 = vmatprep.subr.mxu0 0.0
        %2874 = vmatpush1.msra.mxu0 %v806
        %2875 = vmatprep.subr.mxu0 0.0
        %2876 = vmatpush1.msra.mxu0 %v807
        %2877 = vmatprep.subr.mxu0 0.0
        %2878 = vmatpush1.msra.mxu0 %v808
        %2879 = vmatprep.subr.mxu0 0.0
        %2880 = vmatpush1.msra.mxu0 %v809
        %2881 = vmatprep.subr.mxu0 0.0
        %2882 = vmatpush1.msra.mxu0 %v810
        %2883 = vmatprep.subr.mxu0 0.0
        %2884 = vmatpush1.msra.mxu0 %v811
        %2885 = vmatprep.subr.mxu0 0.0
        %2886 = vmatpush1.msra.mxu0 %v812
        %2887 = vmatprep.subr.mxu0 0.0
        %2888 = vmatpush1.msra.mxu0 %v813
        %2889 = vmatprep.subr.mxu0 0.0
        %2890 = vmatpush1.msra.mxu0 %v814
        %2891 = vmatprep.subr.mxu0 0.0
        %2892 = vmatpush1.msra.mxu0 %v815
        %2893 = vmatprep.subr.mxu0 0.0
        %2894 = vmatpush1.msra.mxu0 %v816
        %2895 = vmatprep.subr.mxu0 0.0
        %2896 = vmatpush1.msra.mxu0 %v817
        %2897 = vmatprep.subr.mxu0 0.0
        %2898 = vmatpush1.msra.mxu0 %v818
        %2899 = vmatprep.subr.mxu0 0.0
        %2900 = vmatpush1.msra.mxu0 %v819
        %2901 = vmatprep.subr.mxu0 0.0
        %2902 = vmatpush1.msra.mxu0 %v820
        %2903 = vmatprep.subr.mxu0 0.0
        %2904 = vmatpush1.msra.mxu0 %v821
        %2905 = vmatprep.subr.mxu0 0.0
        %2906 = vmatpush1.msra.mxu0 %v822
        %2907 = vmatprep.subr.mxu0 0.0
        %2908 = vmatpush1.msra.mxu0 %v823
        %2909 = vmatprep.subr.mxu0 0.0
        %2910 = vmatpush1.msra.mxu0 %v824
        %2911 = vmatprep.subr.mxu0 0.0
        %2912 = vmatpush1.msra.mxu0 %v825
        %2913 = vmatprep.subr.mxu0 0.0
        %2914 = vmatpush1.msra.mxu0 %v826
        %2915 = vmatprep.subr.mxu0 0.0
        %2916 = vmatpush1.msra.mxu0 %v827
        %2917 = vmatprep.subr.mxu0 0.0
        %2918 = vmatpush1.msra.mxu0 %v828
        %2919 = vmatprep.subr.mxu0 0.0
        %2920 = vmatpush1.msra.mxu0 %v829
        %2921 = vmatprep.subr.mxu0 0.0
        %2922 = vmatpush1.msra.mxu0 %v830
        %2923 = vmatprep.subr.mxu0 0.0
        %2924 = vmatpush1.msra.mxu0 %v831
        %2925 = vmatprep.subr.mxu0 0.0
        %2926 = vmatpush1.msra.mxu0 %v832
        %2927 = vmatprep.mubr.f32.mxu0 %v314
        %2928 = vmatmul.mubr.f32.gmra.mrb[0].mxu0 %v313
        %v2929 = vpop.f32.mrb[0].mxu0
        %v2930 = vadd.f32 %v2860, %v2929
        %v2931 = vpop.f32.mrb[0].mxu0
        %2932 = vdwg.mxu0
        %2933 = vmatprep.subr.mxu0 0.0
        %2934 = vmatpush1.msra.mxu0 %v833
        %2935 = vmatprep.subr.mxu0 0.0
        %2936 = vmatpush1.msra.mxu0 %v834
        %2937 = vmatprep.subr.mxu0 0.0
        %2938 = vmatpush1.msra.mxu0 %v835
        %2939 = vmatprep.subr.mxu0 0.0
        %2940 = vmatpush1.msra.mxu0 %v836
        %2941 = vmatprep.subr.mxu0 0.0
        %2942 = vmatpush1.msra.mxu0 %v837
        %2943 = vmatprep.subr.mxu0 0.0
        %2944 = vmatpush1.msra.mxu0 %v838
        %2945 = vmatprep.subr.mxu0 0.0
        %2946 = vmatpush1.msra.mxu0 %v839
        %2947 = vmatprep.subr.mxu0 0.0
        %2948 = vmatpush1.msra.mxu0 %v840
        %2949 = vmatprep.subr.mxu0 0.0
        %2950 = vmatpush1.msra.mxu0 %v841
        %2951 = vmatprep.subr.mxu0 0.0
        %2952 = vmatpush1.msra.mxu0 %v842
        %2953 = vmatprep.subr.mxu0 0.0
        %2954 = vmatpush1.msra.mxu0 %v843
        %2955 = vmatprep.subr.mxu0 0.0
        %2956 = vmatpush1.msra.mxu0 %v844
        %2957 = vmatprep.subr.mxu0 0.0
        %2958 = vmatpush1.msra.mxu0 %v845
        %2959 = vmatprep.subr.mxu0 0.0
        %2960 = vmatpush1.msra.mxu0 %v846
        %2961 = vmatprep.subr.mxu0 0.0
        %2962 = vmatpush1.msra.mxu0 %v847
        %2963 = vmatprep.subr.mxu0 0.0
        %2964 = vmatpush1.msra.mxu0 %v848
        %2965 = vmatprep.subr.mxu0 0.0
        %2966 = vmatpush1.msra.mxu0 %v849
        %2967 = vmatprep.subr.mxu0 0.0
        %2968 = vmatpush1.msra.mxu0 %v850
        %2969 = vmatprep.subr.mxu0 0.0
        %2970 = vmatpush1.msra.mxu0 %v851
        %2971 = vmatprep.subr.mxu0 0.0
        %2972 = vmatpush1.msra.mxu0 %v852
        %2973 = vmatprep.subr.mxu0 0.0
        %2974 = vmatpush1.msra.mxu0 %v853
        %2975 = vmatprep.subr.mxu0 0.0
        %2976 = vmatpush1.msra.mxu0 %v854
        %2977 = vmatprep.subr.mxu0 0.0
        %2978 = vmatpush1.msra.mxu0 %v855
        %2979 = vmatprep.subr.mxu0 0.0
        %2980 = vmatpush1.msra.mxu0 %v856
        %2981 = vmatprep.subr.mxu0 0.0
        %2982 = vmatpush1.msra.mxu0 %v857
        %2983 = vmatprep.subr.mxu0 0.0
        %2984 = vmatpush1.msra.mxu0 %v858
        %2985 = vmatprep.subr.mxu0 0.0
        %2986 = vmatpush1.msra.mxu0 %v859
        %2987 = vmatprep.subr.mxu0 0.0
        %2988 = vmatpush1.msra.mxu0 %v860
        %2989 = vmatprep.subr.mxu0 0.0
        %2990 = vmatpush1.msra.mxu0 %v861
        %2991 = vmatprep.subr.mxu0 0.0
        %2992 = vmatpush1.msra.mxu0 %v862
        %2993 = vmatprep.subr.mxu0 0.0
        %2994 = vmatpush1.msra.mxu0 %v863
        %2995 = vmatprep.subr.mxu0 0.0
        %2996 = vmatpush1.msra.mxu0 %v864
        %2997 = vmatprep.mubr.f32.mxu0 %v316
        %2998 = vmatmul.mubr.f32.gmra.mrb[0].mxu0 %v315
        %v2999 = vpop.f32.mrb[0].mxu0
        %v3000 = vadd.f32 %v2930, %v2999
        %v3001 = vpop.f32.mrb[0].mxu0
        %3002 = vdwg.mxu0
        %3003 = vmatprep.subr.mxu0 0.0
        %3004 = vmatpush1.msra.mxu0 %v865
        %3005 = vmatprep.subr.mxu0 0.0
        %3006 = vmatpush1.msra.mxu0 %v866
        %3007 = vmatprep.subr.mxu0 0.0
        %3008 = vmatpush1.msra.mxu0 %v867
        %3009 = vmatprep.subr.mxu0 0.0
        %3010 = vmatpush1.msra.mxu0 %v868
        %3011 = vmatprep.subr.mxu0 0.0
        %3012 = vmatpush1.msra.mxu0 %v869
        %3013 = vmatprep.subr.mxu0 0.0
        %3014 = vmatpush1.msra.mxu0 %v870
        %3015 = vmatprep.subr.mxu0 0.0
        %3016 = vmatpush1.msra.mxu0 %v871
        %3017 = vmatprep.subr.mxu0 0.0
        %3018 = vmatpush1.msra.mxu0 %v872
        %3019 = vmatprep.subr.mxu0 0.0
        %3020 = vmatpush1.msra.mxu0 %v873
        %3021 = vmatprep.subr.mxu0 0.0
        %3022 = vmatpush1.msra.mxu0 %v874
        %3023 = vmatprep.subr.mxu0 0.0
        %3024 = vmatpush1.msra.mxu0 %v875
        %3025 = vmatprep.subr.mxu0 0.0
        %3026 = vmatpush1.msra.mxu0 %v876
        %3027 = vmatprep.subr.mxu0 0.0
        %3028 = vmatpush1.msra.mxu0 %v877
        %3029 = vmatprep.subr.mxu0 0.0
        %3030 = vmatpush1.msra.mxu0 %v878
        %3031 = vmatprep.subr.mxu0 0.0
        %3032 = vmatpush1.msra.mxu0 %v879
        %3033 = vmatprep.subr.mxu0 0.0
        %3034 = vmatpush1.msra.mxu0 %v880
        %3035 = vmatprep.subr.mxu0 0.0
        %3036 = vmatpush1.msra.mxu0 %v881
        %3037 = vmatprep.subr.mxu0 0.0
        %3038 = vmatpush1.msra.mxu0 %v882
        %3039 = vmatprep.subr.mxu0 0.0
        %3040 = vmatpush1.msra.mxu0 %v883
        %3041 = vmatprep.subr.mxu0 0.0
        %3042 = vmatpush1.msra.mxu0 %v884
        %3043 = vmatprep.subr.mxu0 0.0
        %3044 = vmatpush1.msra.mxu0 %v885
        %3045 = vmatprep.subr.mxu0 0.0
        %3046 = vmatpush1.msra.mxu0 %v886
        %3047 = vmatprep.subr.mxu0 0.0
        %3048 = vmatpush1.msra.mxu0 %v887
        %3049 = vmatprep.subr.mxu0 0.0
        %3050 = vmatpush1.msra.mxu0 %v888
        %3051 = vmatprep.subr.mxu0 0.0
        %3052 = vmatpush1.msra.mxu0 %v889
        %3053 = vmatprep.subr.mxu0 0.0
        %3054 = vmatpush1.msra.mxu0 %v890
        %3055 = vmatprep.subr.mxu0 0.0
        %3056 = vmatpush1.msra.mxu0 %v891
        %3057 = vmatprep.subr.mxu0 0.0
        %3058 = vmatpush1.msra.mxu0 %v892
        %3059 = vmatprep.subr.mxu0 0.0
        %3060 = vmatpush1.msra.mxu0 %v893
        %3061 = vmatprep.subr.mxu0 0.0
        %3062 = vmatpush1.msra.mxu0 %v894
        %3063 = vmatprep.subr.mxu0 0.0
        %3064 = vmatpush1.msra.mxu0 %v895
        %3065 = vmatprep.subr.mxu0 0.0
        %3066 = vmatpush1.msra.mxu0 %v896
        %3067 = vmatprep.mubr.f32.mxu0 %v318
        %3068 = vmatmul.mubr.f32.gmra.mrb[0].mxu0 %v317
        %v3069 = vpop.f32.mrb[0].mxu0
        %v3070 = vadd.f32 %v3000, %v3069
        %v3071 = vpop.f32.mrb[0].mxu0
        %3072 = vdwg.mxu0
        %3073 = vmatprep.subr.mxu0 0.0
        %3074 = vmatpush1.msra.mxu0 %v897
        %3075 = vmatprep.subr.mxu0 0.0
        %3076 = vmatpush1.msra.mxu0 %v898
        %3077 = vmatprep.subr.mxu0 0.0
        %3078 = vmatpush1.msra.mxu0 %v899
        %3079 = vmatprep.subr.mxu0 0.0
        %3080 = vmatpush1.msra.mxu0 %v900
        %3081 = vmatprep.subr.mxu0 0.0
        %3082 = vmatpush1.msra.mxu0 %v901
        %3083 = vmatprep.subr.mxu0 0.0
        %3084 = vmatpush1.msra.mxu0 %v902
        %3085 = vmatprep.subr.mxu0 0.0
        %3086 = vmatpush1.msra.mxu0 %v903
        %3087 = vmatprep.subr.mxu0 0.0
        %3088 = vmatpush1.msra.mxu0 %v904
        %3089 = vmatprep.subr.mxu0 0.0
        %3090 = vmatpush1.msra.mxu0 %v905
        %3091 = vmatprep.subr.mxu0 0.0
        %3092 = vmatpush1.msra.mxu0 %v906
        %3093 = vmatprep.subr.mxu0 0.0
        %3094 = vmatpush1.msra.mxu0 %v907
        %3095 = vmatprep.subr.mxu0 0.0
        %3096 = vmatpush1.msra.mxu0 %v908
        %3097 = vmatprep.subr.mxu0 0.0
        %3098 = vmatpush1.msra.mxu0 %v909
        %3099 = vmatprep.subr.mxu0 0.0
        %3100 = vmatpush1.msra.mxu0 %v910
        %3101 = vmatprep.subr.mxu0 0.0
        %3102 = vmatpush1.msra.mxu0 %v911
        %3103 = vmatprep.subr.mxu0 0.0
        %3104 = vmatpush1.msra.mxu0 %v912
        %3105 = vmatprep.subr.mxu0 0.0
        %3106 = vmatpush1.msra.mxu0 %v913
        %3107 = vmatprep.subr.mxu0 0.0
        %3108 = vmatpush1.msra.mxu0 %v914
        %3109 = vmatprep.subr.mxu0 0.0
        %3110 = vmatpush1.msra.mxu0 %v915
        %3111 = vmatprep.subr.mxu0 0.0
        %3112 = vmatpush1.msra.mxu0 %v916
        %3113 = vmatprep.subr.mxu0 0.0
        %3114 = vmatpush1.msra.mxu0 %v917
        %3115 = vmatprep.subr.mxu0 0.0
        %3116 = vmatpush1.msra.mxu0 %v918
        %3117 = vmatprep.subr.mxu0 0.0
        %3118 = vmatpush1.msra.mxu0 %v919
        %3119 = vmatprep.subr.mxu0 0.0
        %3120 = vmatpush1.msra.mxu0 %v920
        %3121 = vmatprep.subr.mxu0 0.0
        %3122 = vmatpush1.msra.mxu0 %v921
        %3123 = vmatprep.subr.mxu0 0.0
        %3124 = vmatpush1.msra.mxu0 %v922
        %3125 = vmatprep.subr.mxu0 0.0
        %3126 = vmatpush1.msra.mxu0 %v923
        %3127 = vmatprep.subr.mxu0 0.0
        %3128 = vmatpush1.msra.mxu0 %v924
        %3129 = vmatprep.subr.mxu0 0.0
        %3130 = vmatpush1.msra.mxu0 %v925
        %3131 = vmatprep.subr.mxu0 0.0
        %3132 = vmatpush1.msra.mxu0 %v926
        %3133 = vmatprep.subr.mxu0 0.0
        %3134 = vmatpush1.msra.mxu0 %v927
        %3135 = vmatprep.subr.mxu0 0.0
        %3136 = vmatpush1.msra.mxu0 %v928
        %3137 = vmatprep.mubr.f32.mxu0 %v320
        %3138 = vmatmul.mubr.f32.gmra.mrb[0].mxu0 %v319
        %v3139 = vpop.f32.mrb[0].mxu0
        %v3140 = vadd.f32 %v3070, %v3139
        %v3141 = vpop.f32.mrb[0].mxu0
        %3142 = vdwg.mxu0
        %3143 = vmatprep.subr.mxu0 0.0
        %3144 = vmatpush1.msra.mxu0 %v929
        %3145 = vmatprep.subr.mxu0 0.0
        %3146 = vmatpush1.msra.mxu0 %v930
        %3147 = vmatprep.subr.mxu0 0.0
        %3148 = vmatpush1.msra.mxu0 %v931
        %3149 = vmatprep.subr.mxu0 0.0
        %3150 = vmatpush1.msra.mxu0 %v932
        %3151 = vmatprep.subr.mxu0 0.0
        %3152 = vmatpush1.msra.mxu0 %v933
        %3153 = vmatprep.subr.mxu0 0.0
        %3154 = vmatpush1.msra.mxu0 %v934
        %3155 = vmatprep.subr.mxu0 0.0
        %3156 = vmatpush1.msra.mxu0 %v935
        %3157 = vmatprep.subr.mxu0 0.0
        %3158 = vmatpush1.msra.mxu0 %v936
        %3159 = vmatprep.subr.mxu0 0.0
        %3160 = vmatpush1.msra.mxu0 %v937
        %3161 = vmatprep.subr.mxu0 0.0
        %3162 = vmatpush1.msra.mxu0 %v938
        %3163 = vmatprep.subr.mxu0 0.0
        %3164 = vmatpush1.msra.mxu0 %v939
        %3165 = vmatprep.subr.mxu0 0.0
        %3166 = vmatpush1.msra.mxu0 %v940
        %3167 = vmatprep.subr.mxu0 0.0
        %3168 = vmatpush1.msra.mxu0 %v941
        %3169 = vmatprep.subr.mxu0 0.0
        %3170 = vmatpush1.msra.mxu0 %v942
        %3171 = vmatprep.subr.mxu0 0.0
        %3172 = vmatpush1.msra.mxu0 %v943
        %3173 = vmatprep.subr.mxu0 0.0
        %3174 = vmatpush1.msra.mxu0 %v944
        %3175 = vmatprep.subr.mxu0 0.0
        %3176 = vmatpush1.msra.mxu0 %v945
        %3177 = vmatprep.subr.mxu0 0.0
        %3178 = vmatpush1.msra.mxu0 %v946
        %3179 = vmatprep.subr.mxu0 0.0
        %3180 = vmatpush1.msra.mxu0 %v947
        %3181 = vmatprep.subr.mxu0 0.0
        %3182 = vmatpush1.msra.mxu0 %v948
        %3183 = vmatprep.subr.mxu0 0.0
        %3184 = vmatpush1.msra.mxu0 %v949
        %3185 = vmatprep.subr.mxu0 0.0
        %3186 = vmatpush1.msra.mxu0 %v950
        %3187 = vmatprep.subr.mxu0 0.0
        %3188 = vmatpush1.msra.mxu0 %v951
        %3189 = vmatprep.subr.mxu0 0.0
        %3190 = vmatpush1.msra.mxu0 %v952
        %3191 = vmatprep.subr.mxu0 0.0
        %3192 = vmatpush1.msra.mxu0 %v953
        %3193 = vmatprep.subr.mxu0 0.0
        %3194 = vmatpush1.msra.mxu0 %v954
        %3195 = vmatprep.subr.mxu0 0.0
        %3196 = vmatpush1.msra.mxu0 %v955
        %3197 = vmatprep.subr.mxu0 0.0
        %3198 = vmatpush1.msra.mxu0 %v956
        %3199 = vmatprep.subr.mxu0 0.0
        %3200 = vmatpush1.msra.mxu0 %v957
        %3201 = vmatprep.subr.mxu0 0.0
        %3202 = vmatpush1.msra.mxu0 %v958
        %3203 = vmatprep.subr.mxu0 0.0
        %3204 = vmatpush1.msra.mxu0 %v959
        %3205 = vmatprep.subr.mxu0 0.0
        %3206 = vmatpush1.msra.mxu0 %v960
        %3207 = vmatprep.mubr.f32.mxu0 %v322
        %3208 = vmatmul.mubr.f32.gmra.mrb[0].mxu0 %v321
        %v3209 = vpop.f32.mrb[0].mxu0
        %v3210 = vadd.f32 %v3140, %v3209
        %v3211 = vpop.f32.mrb[0].mxu0
        %3212 = vdwg.mxu0
        %3213 = vmatprep.subr.mxu0 0.0
        %3214 = vmatpush1.msra.mxu0 %v961
        %3215 = vmatprep.subr.mxu0 0.0
        %3216 = vmatpush1.msra.mxu0 %v962
        %3217 = vmatprep.subr.mxu0 0.0
        %3218 = vmatpush1.msra.mxu0 %v963
        %3219 = vmatprep.subr.mxu0 0.0
        %3220 = vmatpush1.msra.mxu0 %v964
        %3221 = vmatprep.subr.mxu0 0.0
        %3222 = vmatpush1.msra.mxu0 %v965
        %3223 = vmatprep.subr.mxu0 0.0
        %3224 = vmatpush1.msra.mxu0 %v966
        %3225 = vmatprep.subr.mxu0 0.0
        %3226 = vmatpush1.msra.mxu0 %v967
        %3227 = vmatprep.subr.mxu0 0.0
        %3228 = vmatpush1.msra.mxu0 %v968
        %3229 = vmatprep.subr.mxu0 0.0
        %3230 = vmatpush1.msra.mxu0 %v969
        %3231 = vmatprep.subr.mxu0 0.0
        %3232 = vmatpush1.msra.mxu0 %v970
        %3233 = vmatprep.subr.mxu0 0.0
        %3234 = vmatpush1.msra.mxu0 %v971
        %3235 = vmatprep.subr.mxu0 0.0
        %3236 = vmatpush1.msra.mxu0 %v972
        %3237 = vmatprep.subr.mxu0 0.0
        %3238 = vmatpush1.msra.mxu0 %v973
        %3239 = vmatprep.subr.mxu0 0.0
        %3240 = vmatpush1.msra.mxu0 %v974
        %3241 = vmatprep.subr.mxu0 0.0
        %3242 = vmatpush1.msra.mxu0 %v975
        %3243 = vmatprep.subr.mxu0 0.0
        %3244 = vmatpush1.msra.mxu0 %v976
        %3245 = vmatprep.subr.mxu0 0.0
        %3246 = vmatpush1.msra.mxu0 %v977
        %3247 = vmatprep.subr.mxu0 0.0
        %3248 = vmatpush1.msra.mxu0 %v978
        %3249 = vmatprep.subr.mxu0 0.0
        %3250 = vmatpush1.msra.mxu0 %v979
        %3251 = vmatprep.subr.mxu0 0.0
        %3252 = vmatpush1.msra.mxu0 %v980
        %3253 = vmatprep.subr.mxu0 0.0
        %3254 = vmatpush1.msra.mxu0 %v981
        %3255 = vmatprep.subr.mxu0 0.0
        %3256 = vmatpush1.msra.mxu0 %v982
        %3257 = vmatprep.subr.mxu0 0.0
        %3258 = vmatpush1.msra.mxu0 %v983
        %3259 = vmatprep.subr.mxu0 0.0
        %3260 = vmatpush1.msra.mxu0 %v984
        %3261 = vmatprep.subr.mxu0 0.0
        %3262 = vmatpush1.msra.mxu0 %v985
        %3263 = vmatprep.subr.mxu0 0.0
        %3264 = vmatpush1.msra.mxu0 %v986
        %3265 = vmatprep.subr.mxu0 0.0
        %3266 = vmatpush1.msra.mxu0 %v987
        %3267 = vmatprep.subr.mxu0 0.0
        %3268 = vmatpush1.msra.mxu0 %v988
        %3269 = vmatprep.subr.mxu0 0.0
        %3270 = vmatpush1.msra.mxu0 %v989
        %3271 = vmatprep.subr.mxu0 0.0
        %3272 = vmatpush1.msra.mxu0 %v990
        %3273 = vmatprep.subr.mxu0 0.0
        %3274 = vmatpush1.msra.mxu0 %v991
        %3275 = vmatprep.subr.mxu0 0.0
        %3276 = vmatpush1.msra.mxu0 %v992
        %3277 = vmatprep.mubr.f32.mxu0 %v324
        %3278 = vmatmul.mubr.f32.gmra.mrb[0].mxu0 %v323
        %v3279 = vpop.f32.mrb[0].mxu0
        %v3280 = vadd.f32 %v3210, %v3279
        %v3281 = vpop.f32.mrb[0].mxu0
        %3282 = vdwg.mxu0
        %3283 = vmatprep.subr.mxu0 0.0
        %3284 = vmatpush1.msra.mxu0 %v993
        %3285 = vmatprep.subr.mxu0 0.0
        %3286 = vmatpush1.msra.mxu0 %v994
        %3287 = vmatprep.subr.mxu0 0.0
        %3288 = vmatpush1.msra.mxu0 %v995
        %3289 = vmatprep.subr.mxu0 0.0
        %3290 = vmatpush1.msra.mxu0 %v996
        %3291 = vmatprep.subr.mxu0 0.0
        %3292 = vmatpush1.msra.mxu0 %v997
        %3293 = vmatprep.subr.mxu0 0.0
        %3294 = vmatpush1.msra.mxu0 %v998
        %3295 = vmatprep.subr.mxu0 0.0
        %3296 = vmatpush1.msra.mxu0 %v999
        %3297 = vmatprep.subr.mxu0 0.0
        %3298 = vmatpush1.msra.mxu0 %v1000
        %3299 = vmatprep.subr.mxu0 0.0
        %3300 = vmatpush1.msra.mxu0 %v1001
        %3301 = vmatprep.subr.mxu0 0.0
        %3302 = vmatpush1.msra.mxu0 %v1002
        %3303 = vmatprep.subr.mxu0 0.0
        %3304 = vmatpush1.msra.mxu0 %v1003
        %3305 = vmatprep.subr.mxu0 0.0
        %3306 = vmatpush1.msra.mxu0 %v1004
        %3307 = vmatprep.subr.mxu0 0.0
        %3308 = vmatpush1.msra.mxu0 %v1005
        %3309 = vmatprep.subr.mxu0 0.0
        %3310 = vmatpush1.msra.mxu0 %v1006
        %3311 = vmatprep.subr.mxu0 0.0
        %3312 = vmatpush1.msra.mxu0 %v1007
        %3313 = vmatprep.subr.mxu0 0.0
        %3314 = vmatpush1.msra.mxu0 %v1008
        %3315 = vmatprep.subr.mxu0 0.0
        %3316 = vmatpush1.msra.mxu0 %v1009
        %3317 = vmatprep.subr.mxu0 0.0
        %3318 = vmatpush1.msra.mxu0 %v1010
        %3319 = vmatprep.subr.mxu0 0.0
        %3320 = vmatpush1.msra.mxu0 %v1011
        %3321 = vmatprep.subr.mxu0 0.0
        %3322 = vmatpush1.msra.mxu0 %v1012
        %3323 = vmatprep.subr.mxu0 0.0
        %3324 = vmatpush1.msra.mxu0 %v1013
        %3325 = vmatprep.subr.mxu0 0.0
        %3326 = vmatpush1.msra.mxu0 %v1014
        %3327 = vmatprep.subr.mxu0 0.0
        %3328 = vmatpush1.msra.mxu0 %v1015
        %3329 = vmatprep.subr.mxu0 0.0
        %3330 = vmatpush1.msra.mxu0 %v1016
        %3331 = vmatprep.subr.mxu0 0.0
        %3332 = vmatpush1.msra.mxu0 %v1017
        %3333 = vmatprep.subr.mxu0 0.0
        %3334 = vmatpush1.msra.mxu0 %v1018
        %3335 = vmatprep.subr.mxu0 0.0
        %3336 = vmatpush1.msra.mxu0 %v1019
        %3337 = vmatprep.subr.mxu0 0.0
        %3338 = vmatpush1.msra.mxu0 %v1020
        %3339 = vmatprep.subr.mxu0 0.0
        %3340 = vmatpush1.msra.mxu0 %v1021
        %3341 = vmatprep.subr.mxu0 0.0
        %3342 = vmatpush1.msra.mxu0 %v1022
        %3343 = vmatprep.subr.mxu0 0.0
        %3344 = vmatpush1.msra.mxu0 %v1023
        %3345 = vmatprep.subr.mxu0 0.0
        %3346 = vmatpush1.msra.mxu0 %v1024
        %3347 = vmatprep.mubr.f32.mxu0 %v326
        %3348 = vmatmul.mubr.f32.gmra.mrb[0].mxu0 %v325
        %v3349 = vpop.f32.mrb[0].mxu0
        %v3350 = vadd.f32 %v3280, %v3349
        %v3351 = vpop.f32.mrb[0].mxu0
        %3352 = vdwg.mxu0
        %3353 = vmatprep.subr.mxu0 0.0
        %3354 = vmatpush1.msra.mxu0 %v1025
        %3355 = vmatprep.subr.mxu0 0.0
        %3356 = vmatpush1.msra.mxu0 %v1026
        %3357 = vmatprep.subr.mxu0 0.0
        %3358 = vmatpush1.msra.mxu0 %v1027
        %3359 = vmatprep.subr.mxu0 0.0
        %3360 = vmatpush1.msra.mxu0 %v1028
        %3361 = vmatprep.subr.mxu0 0.0
        %3362 = vmatpush1.msra.mxu0 %v1029
        %3363 = vmatprep.subr.mxu0 0.0
        %3364 = vmatpush1.msra.mxu0 %v1030
        %3365 = vmatprep.subr.mxu0 0.0
        %3366 = vmatpush1.msra.mxu0 %v1031
        %3367 = vmatprep.subr.mxu0 0.0
        %3368 = vmatpush1.msra.mxu0 %v1032
        %3369 = vmatprep.subr.mxu0 0.0
        %3370 = vmatpush1.msra.mxu0 %v1033
        %3371 = vmatprep.subr.mxu0 0.0
        %3372 = vmatpush1.msra.mxu0 %v1034
        %3373 = vmatprep.subr.mxu0 0.0
        %3374 = vmatpush1.msra.mxu0 %v1035
        %3375 = vmatprep.subr.mxu0 0.0
        %3376 = vmatpush1.msra.mxu0 %v1036
        %3377 = vmatprep.subr.mxu0 0.0
        %3378 = vmatpush1.msra.mxu0 %v1037
        %3379 = vmatprep.subr.mxu0 0.0
        %3380 = vmatpush1.msra.mxu0 %v1038
        %3381 = vmatprep.subr.mxu0 0.0
        %3382 = vmatpush1.msra.mxu0 %v1039
        %3383 = vmatprep.subr.mxu0 0.0
        %3384 = vmatpush1.msra.mxu0 %v1040
        %3385 = vmatprep.subr.mxu0 0.0
        %3386 = vmatpush1.msra.mxu0 %v1041
        %3387 = vmatprep.subr.mxu0 0.0
        %3388 = vmatpush1.msra.mxu0 %v1042
        %3389 = vmatprep.subr.mxu0 0.0
        %3390 = vmatpush1.msra.mxu0 %v1043
        %3391 = vmatprep.subr.mxu0 0.0
        %3392 = vmatpush1.msra.mxu0 %v1044
        %3393 = vmatprep.subr.mxu0 0.0
        %3394 = vmatpush1.msra.mxu0 %v1045
        %3395 = vmatprep.subr.mxu0 0.0
        %3396 = vmatpush1.msra.mxu0 %v1046
        %3397 = vmatprep.subr.mxu0 0.0
        %3398 = vmatpush1.msra.mxu0 %v1047
        %3399 = vmatprep.subr.mxu0 0.0
        %3400 = vmatpush1.msra.mxu0 %v1048
        %3401 = vmatprep.subr.mxu0 0.0
        %3402 = vmatpush1.msra.mxu0 %v1049
        %3403 = vmatprep.subr.mxu0 0.0
        %3404 = vmatpush1.msra.mxu0 %v1050
        %3405 = vmatprep.subr.mxu0 0.0
        %3406 = vmatpush1.msra.mxu0 %v1051
        %3407 = vmatprep.subr.mxu0 0.0
        %3408 = vmatpush1.msra.mxu0 %v1052
        %3409 = vmatprep.subr.mxu0 0.0
        %3410 = vmatpush1.msra.mxu0 %v1053
        %3411 = vmatprep.subr.mxu0 0.0
        %3412 = vmatpush1.msra.mxu0 %v1054
        %3413 = vmatprep.subr.mxu0 0.0
        %3414 = vmatpush1.msra.mxu0 %v1055
        %3415 = vmatprep.subr.mxu0 0.0
        %3416 = vmatpush1.msra.mxu0 %v1056
        %3417 = vmatprep.mubr.f32.mxu0 %v328
        %3418 = vmatmul.mubr.f32.gmra.mrb[0].mxu0 %v327
        %v3419 = vpop.f32.mrb[0].mxu0
        %v3420 = vadd.f32 %v3350, %v3419
        %v3421 = vpop.f32.mrb[0].mxu0
        %3422 = vdwg.mxu0
        %3423 = vmatprep.subr.mxu0 0.0
        %3424 = vmatpush1.msra.mxu0 %v1057
        %3425 = vmatprep.subr.mxu0 0.0
        %3426 = vmatpush1.msra.mxu0 %v1058
        %3427 = vmatprep.subr.mxu0 0.0
        %3428 = vmatpush1.msra.mxu0 %v1059
        %3429 = vmatprep.subr.mxu0 0.0
        %3430 = vmatpush1.msra.mxu0 %v1060
        %3431 = vmatprep.subr.mxu0 0.0
        %3432 = vmatpush1.msra.mxu0 %v1061
        %3433 = vmatprep.subr.mxu0 0.0
        %3434 = vmatpush1.msra.mxu0 %v1062
        %3435 = vmatprep.subr.mxu0 0.0
        %3436 = vmatpush1.msra.mxu0 %v1063
        %3437 = vmatprep.subr.mxu0 0.0
        %3438 = vmatpush1.msra.mxu0 %v1064
        %3439 = vmatprep.subr.mxu0 0.0
        %3440 = vmatpush1.msra.mxu0 %v1065
        %3441 = vmatprep.subr.mxu0 0.0
        %3442 = vmatpush1.msra.mxu0 %v1066
        %3443 = vmatprep.subr.mxu0 0.0
        %3444 = vmatpush1.msra.mxu0 %v1067
        %3445 = vmatprep.subr.mxu0 0.0
        %3446 = vmatpush1.msra.mxu0 %v1068
        %3447 = vmatprep.subr.mxu0 0.0
        %3448 = vmatpush1.msra.mxu0 %v1069
        %3449 = vmatprep.subr.mxu0 0.0
        %3450 = vmatpush1.msra.mxu0 %v1070
        %3451 = vmatprep.subr.mxu0 0.0
        %3452 = vmatpush1.msra.mxu0 %v1071
        %3453 = vmatprep.subr.mxu0 0.0
        %3454 = vmatpush1.msra.mxu0 %v1072
        %3455 = vmatprep.subr.mxu0 0.0
        %3456 = vmatpush1.msra.mxu0 %v1073
        %3457 = vmatprep.subr.mxu0 0.0
        %3458 = vmatpush1.msra.mxu0 %v1074
        %3459 = vmatprep.subr.mxu0 0.0
        %3460 = vmatpush1.msra.mxu0 %v1075
        %3461 = vmatprep.subr.mxu0 0.0
        %3462 = vmatpush1.msra.mxu0 %v1076
        %3463 = vmatprep.subr.mxu0 0.0
        %3464 = vmatpush1.msra.mxu0 %v1077
        %3465 = vmatprep.subr.mxu0 0.0
        %3466 = vmatpush1.msra.mxu0 %v1078
        %3467 = vmatprep.subr.mxu0 0.0
        %3468 = vmatpush1.msra.mxu0 %v1079
        %3469 = vmatprep.subr.mxu0 0.0
        %3470 = vmatpush1.msra.mxu0 %v1080
        %3471 = vmatprep.subr.mxu0 0.0
        %3472 = vmatpush1.msra.mxu0 %v1081
        %3473 = vmatprep.subr.mxu0 0.0
        %3474 = vmatpush1.msra.mxu0 %v1082
        %3475 = vmatprep.subr.mxu0 0.0
        %3476 = vmatpush1.msra.mxu0 %v1083
        %3477 = vmatprep.subr.mxu0 0.0
        %3478 = vmatpush1.msra.mxu0 %v1084
        %3479 = vmatprep.subr.mxu0 0.0
        %3480 = vmatpush1.msra.mxu0 %v1085
        %3481 = vmatprep.subr.mxu0 0.0
        %3482 = vmatpush1.msra.mxu0 %v1086
        %3483 = vmatprep.subr.mxu0 0.0
        %3484 = vmatpush1.msra.mxu0 %v1087
        %3485 = vmatprep.subr.mxu0 0.0
        %3486 = vmatpush1.msra.mxu0 %v1088
        %3487 = vmatprep.mubr.f32.mxu0 %v330
        %3488 = vmatmul.mubr.f32.gmra.mrb[0].mxu0 %v329
        %v3489 = vpop.f32.mrb[0].mxu0
        %v3490 = vadd.f32 %v3420, %v3489
        %v3491 = vpop.f32.mrb[0].mxu0
        %3492 = vdwg.mxu0
        %3493 = vmatprep.subr.mxu0 0.0
        %3494 = vmatpush1.msra.mxu0 %v1089
        %3495 = vmatprep.subr.mxu0 0.0
        %3496 = vmatpush1.msra.mxu0 %v1090
        %3497 = vmatprep.subr.mxu0 0.0
        %3498 = vmatpush1.msra.mxu0 %v1091
        %3499 = vmatprep.subr.mxu0 0.0
        %3500 = vmatpush1.msra.mxu0 %v1092
        %3501 = vmatprep.subr.mxu0 0.0
        %3502 = vmatpush1.msra.mxu0 %v1093
        %3503 = vmatprep.subr.mxu0 0.0
        %3504 = vmatpush1.msra.mxu0 %v1094
        %3505 = vmatprep.subr.mxu0 0.0
        %3506 = vmatpush1.msra.mxu0 %v1095
        %3507 = vmatprep.subr.mxu0 0.0
        %3508 = vmatpush1.msra.mxu0 %v1096
        %3509 = vmatprep.subr.mxu0 0.0
        %3510 = vmatpush1.msra.mxu0 %v1097
        %3511 = vmatprep.subr.mxu0 0.0
        %3512 = vmatpush1.msra.mxu0 %v1098
        %3513 = vmatprep.subr.mxu0 0.0
        %3514 = vmatpush1.msra.mxu0 %v1099
        %3515 = vmatprep.subr.mxu0 0.0
        %3516 = vmatpush1.msra.mxu0 %v1100
        %3517 = vmatprep.subr.mxu0 0.0
        %3518 = vmatpush1.msra.mxu0 %v1101
        %3519 = vmatprep.subr.mxu0 0.0
        %3520 = vmatpush1.msra.mxu0 %v1102
        %3521 = vmatprep.subr.mxu0 0.0
        %3522 = vmatpush1.msra.mxu0 %v1103
        %3523 = vmatprep.subr.mxu0 0.0
        %3524 = vmatpush1.msra.mxu0 %v1104
        %3525 = vmatprep.subr.mxu0 0.0
        %3526 = vmatpush1.msra.mxu0 %v1105
        %3527 = vmatprep.subr.mxu0 0.0
        %3528 = vmatpush1.msra.mxu0 %v1106
        %3529 = vmatprep.subr.mxu0 0.0
        %3530 = vmatpush1.msra.mxu0 %v1107
        %3531 = vmatprep.subr.mxu0 0.0
        %3532 = vmatpush1.msra.mxu0 %v1108
        %3533 = vmatprep.subr.mxu0 0.0
        %3534 = vmatpush1.msra.mxu0 %v1109
        %3535 = vmatprep.subr.mxu0 0.0
        %3536 = vmatpush1.msra.mxu0 %v1110
        %3537 = vmatprep.subr.mxu0 0.0
        %3538 = vmatpush1.msra.mxu0 %v1111
        %3539 = vmatprep.subr.mxu0 0.0
        %3540 = vmatpush1.msra.mxu0 %v1112
        %3541 = vmatprep.subr.mxu0 0.0
        %3542 = vmatpush1.msra.mxu0 %v1113
        %3543 = vmatprep.subr.mxu0 0.0
        %3544 = vmatpush1.msra.mxu0 %v1114
        %3545 = vmatprep.subr.mxu0 0.0
        %3546 = vmatpush1.msra.mxu0 %v1115
        %3547 = vmatprep.subr.mxu0 0.0
        %3548 = vmatpush1.msra.mxu0 %v1116
        %3549 = vmatprep.subr.mxu0 0.0
        %3550 = vmatpush1.msra.mxu0 %v1117
        %3551 = vmatprep.subr.mxu0 0.0
        %3552 = vmatpush1.msra.mxu0 %v1118
        %3553 = vmatprep.subr.mxu0 0.0
        %3554 = vmatpush1.msra.mxu0 %v1119
        %3555 = vmatprep.subr.mxu0 0.0
        %3556 = vmatpush1.msra.mxu0 %v1120
        %3557 = vmatprep.mubr.f32.mxu0 %v332
        %3558 = vmatmul.mubr.f32.gmra.mrb[0].mxu0 %v331
        %v3559 = vpop.f32.mrb[0].mxu0
        %v3560 = vadd.f32 %v3490, %v3559
        %v3561 = vpop.f32.mrb[0].mxu0
        %3562 = vdwg.mxu0
        %3563 = vmatprep.subr.mxu0 0.0
        %3564 = vmatpush1.msra.mxu0 %v1121
        %3565 = vmatprep.subr.mxu0 0.0
        %3566 = vmatpush1.msra.mxu0 %v1122
        %3567 = vmatprep.subr.mxu0 0.0
        %3568 = vmatpush1.msra.mxu0 %v1123
        %3569 = vmatprep.subr.mxu0 0.0
        %3570 = vmatpush1.msra.mxu0 %v1124
        %3571 = vmatprep.subr.mxu0 0.0
        %3572 = vmatpush1.msra.mxu0 %v1125
        %3573 = vmatprep.subr.mxu0 0.0
        %3574 = vmatpush1.msra.mxu0 %v1126
        %3575 = vmatprep.subr.mxu0 0.0
        %3576 = vmatpush1.msra.mxu0 %v1127
        %3577 = vmatprep.subr.mxu0 0.0
        %3578 = vmatpush1.msra.mxu0 %v1128
        %3579 = vmatprep.subr.mxu0 0.0
        %3580 = vmatpush1.msra.mxu0 %v1129
        %3581 = vmatprep.subr.mxu0 0.0
        %3582 = vmatpush1.msra.mxu0 %v1130
        %3583 = vmatprep.subr.mxu0 0.0
        %3584 = vmatpush1.msra.mxu0 %v1131
        %3585 = vmatprep.subr.mxu0 0.0
        %3586 = vmatpush1.msra.mxu0 %v1132
        %3587 = vmatprep.subr.mxu0 0.0
        %3588 = vmatpush1.msra.mxu0 %v1133
        %3589 = vmatprep.subr.mxu0 0.0
        %3590 = vmatpush1.msra.mxu0 %v1134
        %3591 = vmatprep.subr.mxu0 0.0
        %3592 = vmatpush1.msra.mxu0 %v1135
        %3593 = vmatprep.subr.mxu0 0.0
        %3594 = vmatpush1.msra.mxu0 %v1136
        %3595 = vmatprep.subr.mxu0 0.0
        %3596 = vmatpush1.msra.mxu0 %v1137
        %3597 = vmatprep.subr.mxu0 0.0
        %3598 = vmatpush1.msra.mxu0 %v1138
        %3599 = vmatprep.subr.mxu0 0.0
        %3600 = vmatpush1.msra.mxu0 %v1139
        %3601 = vmatprep.subr.mxu0 0.0
        %3602 = vmatpush1.msra.mxu0 %v1140
        %3603 = vmatprep.subr.mxu0 0.0
        %3604 = vmatpush1.msra.mxu0 %v1141
        %3605 = vmatprep.subr.mxu0 0.0
        %3606 = vmatpush1.msra.mxu0 %v1142
        %3607 = vmatprep.subr.mxu0 0.0
        %3608 = vmatpush1.msra.mxu0 %v1143
        %3609 = vmatprep.subr.mxu0 0.0
        %3610 = vmatpush1.msra.mxu0 %v1144
        %3611 = vmatprep.subr.mxu0 0.0
        %3612 = vmatpush1.msra.mxu0 %v1145
        %3613 = vmatprep.subr.mxu0 0.0
        %3614 = vmatpush1.msra.mxu0 %v1146
        %3615 = vmatprep.subr.mxu0 0.0
        %3616 = vmatpush1.msra.mxu0 %v1147
        %3617 = vmatprep.subr.mxu0 0.0
        %3618 = vmatpush1.msra.mxu0 %v1148
        %3619 = vmatprep.subr.mxu0 0.0
        %3620 = vmatpush1.msra.mxu0 %v1149
        %3621 = vmatprep.subr.mxu0 0.0
        %3622 = vmatpush1.msra.mxu0 %v1150
        %3623 = vmatprep.subr.mxu0 0.0
        %3624 = vmatpush1.msra.mxu0 %v1151
        %3625 = vmatprep.subr.mxu0 0.0
        %3626 = vmatpush1.msra.mxu0 %v1152
        %3627 = vmatprep.mubr.f32.mxu0 %v334
        %3628 = vmatmul.mubr.f32.gmra.mrb[0].mxu0 %v333
        %v3629 = vpop.f32.mrb[0].mxu0
        %v3630 = vadd.f32 %v3560, %v3629
        %v3631 = vpop.f32.mrb[0].mxu0
        %3632 = vdwg.mxu0
        %3633 = vmatprep.subr.mxu0 0.0
        %3634 = vmatpush1.msra.mxu0 %v1153
        %3635 = vmatprep.subr.mxu0 0.0
        %3636 = vmatpush1.msra.mxu0 %v1154
        %3637 = vmatprep.subr.mxu0 0.0
        %3638 = vmatpush1.msra.mxu0 %v1155
        %3639 = vmatprep.subr.mxu0 0.0
        %3640 = vmatpush1.msra.mxu0 %v1156
        %3641 = vmatprep.subr.mxu0 0.0
        %3642 = vmatpush1.msra.mxu0 %v1157
        %3643 = vmatprep.subr.mxu0 0.0
        %3644 = vmatpush1.msra.mxu0 %v1158
        %3645 = vmatprep.subr.mxu0 0.0
        %3646 = vmatpush1.msra.mxu0 %v1159
        %3647 = vmatprep.subr.mxu0 0.0
        %3648 = vmatpush1.msra.mxu0 %v1160
        %3649 = vmatprep.subr.mxu0 0.0
        %3650 = vmatpush1.msra.mxu0 %v1161
        %3651 = vmatprep.subr.mxu0 0.0
        %3652 = vmatpush1.msra.mxu0 %v1162
        %3653 = vmatprep.subr.mxu0 0.0
        %3654 = vmatpush1.msra.mxu0 %v1163
        %3655 = vmatprep.subr.mxu0 0.0
        %3656 = vmatpush1.msra.mxu0 %v1164
        %3657 = vmatprep.subr.mxu0 0.0
        %3658 = vmatpush1.msra.mxu0 %v1165
        %3659 = vmatprep.subr.mxu0 0.0
        %3660 = vmatpush1.msra.mxu0 %v1166
        %3661 = vmatprep.subr.mxu0 0.0
        %3662 = vmatpush1.msra.mxu0 %v1167
        %3663 = vmatprep.subr.mxu0 0.0
        %3664 = vmatpush1.msra.mxu0 %v1168
        %3665 = vmatprep.subr.mxu0 0.0
        %3666 = vmatpush1.msra.mxu0 %v1169
        %3667 = vmatprep.subr.mxu0 0.0
        %3668 = vmatpush1.msra.mxu0 %v1170
        %3669 = vmatprep.subr.mxu0 0.0
        %3670 = vmatpush1.msra.mxu0 %v1171
        %3671 = vmatprep.subr.mxu0 0.0
        %3672 = vmatpush1.msra.mxu0 %v1172
        %3673 = vmatprep.subr.mxu0 0.0
        %3674 = vmatpush1.msra.mxu0 %v1173
        %3675 = vmatprep.subr.mxu0 0.0
        %3676 = vmatpush1.msra.mxu0 %v1174
        %3677 = vmatprep.subr.mxu0 0.0
        %3678 = vmatpush1.msra.mxu0 %v1175
        %3679 = vmatprep.subr.mxu0 0.0
        %3680 = vmatpush1.msra.mxu0 %v1176
        %3681 = vmatprep.subr.mxu0 0.0
        %3682 = vmatpush1.msra.mxu0 %v1177
        %3683 = vmatprep.subr.mxu0 0.0
        %3684 = vmatpush1.msra.mxu0 %v1178
        %3685 = vmatprep.subr.mxu0 0.0
        %3686 = vmatpush1.msra.mxu0 %v1179
        %3687 = vmatprep.subr.mxu0 0.0
        %3688 = vmatpush1.msra.mxu0 %v1180
        %3689 = vmatprep.subr.mxu0 0.0
        %3690 = vmatpush1.msra.mxu0 %v1181
        %3691 = vmatprep.subr.mxu0 0.0
        %3692 = vmatpush1.msra.mxu0 %v1182
        %3693 = vmatprep.subr.mxu0 0.0
        %3694 = vmatpush1.msra.mxu0 %v1183
        %3695 = vmatprep.subr.mxu0 0.0
        %3696 = vmatpush1.msra.mxu0 %v1184
        %3697 = vmatprep.mubr.f32.mxu0 %v336
        %3698 = vmatmul.mubr.f32.gmra.mrb[0].mxu0 %v335
        %v3699 = vpop.f32.mrb[0].mxu0
        %v3700 = vadd.f32 %v3630, %v3699
        %v3701 = vpop.f32.mrb[0].mxu0
        %3702 = vdwg.mxu0
        %3703 = vmatprep.subr.mxu0 0.0
        %3704 = vmatpush1.msra.mxu0 %v1185
        %3705 = vmatprep.subr.mxu0 0.0
        %3706 = vmatpush1.msra.mxu0 %v1186
        %3707 = vmatprep.subr.mxu0 0.0
        %3708 = vmatpush1.msra.mxu0 %v1187
        %3709 = vmatprep.subr.mxu0 0.0
        %3710 = vmatpush1.msra.mxu0 %v1188
        %3711 = vmatprep.subr.mxu0 0.0
        %3712 = vmatpush1.msra.mxu0 %v1189
        %3713 = vmatprep.subr.mxu0 0.0
        %3714 = vmatpush1.msra.mxu0 %v1190
        %3715 = vmatprep.subr.mxu0 0.0
        %3716 = vmatpush1.msra.mxu0 %v1191
        %3717 = vmatprep.subr.mxu0 0.0
        %3718 = vmatpush1.msra.mxu0 %v1192
        %3719 = vmatprep.subr.mxu0 0.0
        %3720 = vmatpush1.msra.mxu0 %v1193
        %3721 = vmatprep.subr.mxu0 0.0
        %3722 = vmatpush1.msra.mxu0 %v1194
        %3723 = vmatprep.subr.mxu0 0.0
        %3724 = vmatpush1.msra.mxu0 %v1195
        %3725 = vmatprep.subr.mxu0 0.0
        %3726 = vmatpush1.msra.mxu0 %v1196
        %3727 = vmatprep.subr.mxu0 0.0
        %3728 = vmatpush1.msra.mxu0 %v1197
        %3729 = vmatprep.subr.mxu0 0.0
        %3730 = vmatpush1.msra.mxu0 %v1198
        %3731 = vmatprep.subr.mxu0 0.0
        %3732 = vmatpush1.msra.mxu0 %v1199
        %3733 = vmatprep.subr.mxu0 0.0
        %3734 = vmatpush1.msra.mxu0 %v1200
        %3735 = vmatprep.subr.mxu0 0.0
        %3736 = vmatpush1.msra.mxu0 %v1201
        %3737 = vmatprep.subr.mxu0 0.0
        %3738 = vmatpush1.msra.mxu0 %v1202
        %3739 = vmatprep.subr.mxu0 0.0
        %3740 = vmatpush1.msra.mxu0 %v1203
        %3741 = vmatprep.subr.mxu0 0.0
        %3742 = vmatpush1.msra.mxu0 %v1204
        %3743 = vmatprep.subr.mxu0 0.0
        %3744 = vmatpush1.msra.mxu0 %v1205
        %3745 = vmatprep.subr.mxu0 0.0
        %3746 = vmatpush1.msra.mxu0 %v1206
        %3747 = vmatprep.subr.mxu0 0.0
        %3748 = vmatpush1.msra.mxu0 %v1207
        %3749 = vmatprep.subr.mxu0 0.0
        %3750 = vmatpush1.msra.mxu0 %v1208
        %3751 = vmatprep.subr.mxu0 0.0
        %3752 = vmatpush1.msra.mxu0 %v1209
        %3753 = vmatprep.subr.mxu0 0.0
        %3754 = vmatpush1.msra.mxu0 %v1210
        %3755 = vmatprep.subr.mxu0 0.0
        %3756 = vmatpush1.msra.mxu0 %v1211
        %3757 = vmatprep.subr.mxu0 0.0
        %3758 = vmatpush1.msra.mxu0 %v1212
        %3759 = vmatprep.subr.mxu0 0.0
        %3760 = vmatpush1.msra.mxu0 %v1213
        %3761 = vmatprep.subr.mxu0 0.0
        %3762 = vmatpush1.msra.mxu0 %v1214
        %3763 = vmatprep.subr.mxu0 0.0
        %3764 = vmatpush1.msra.mxu0 %v1215
        %3765 = vmatprep.subr.mxu0 0.0
        %3766 = vmatpush1.msra.mxu0 %v1216
        %3767 = vmatprep.mubr.f32.mxu0 %v338
        %3768 = vmatmul.mubr.f32.gmra.mrb[0].mxu0 %v337
        %v3769 = vpop.f32.mrb[0].mxu0
        %v3770 = vadd.f32 %v3700, %v3769
        %v3771 = vpop.f32.mrb[0].mxu0
        %3772 = vdwg.mxu0
        %3773 = vmatprep.subr.mxu0 0.0
        %3774 = vmatpush1.msra.mxu0 %v1217
        %3775 = vmatprep.subr.mxu0 0.0
        %3776 = vmatpush1.msra.mxu0 %v1218
        %3777 = vmatprep.subr.mxu0 0.0
        %3778 = vmatpush1.msra.mxu0 %v1219
        %3779 = vmatprep.subr.mxu0 0.0
        %3780 = vmatpush1.msra.mxu0 %v1220
        %3781 = vmatprep.subr.mxu0 0.0
        %3782 = vmatpush1.msra.mxu0 %v1221
        %3783 = vmatprep.subr.mxu0 0.0
        %3784 = vmatpush1.msra.mxu0 %v1222
        %3785 = vmatprep.subr.mxu0 0.0
        %3786 = vmatpush1.msra.mxu0 %v1223
        %3787 = vmatprep.subr.mxu0 0.0
        %3788 = vmatpush1.msra.mxu0 %v1224
        %3789 = vmatprep.subr.mxu0 0.0
        %3790 = vmatpush1.msra.mxu0 %v1225
        %3791 = vmatprep.subr.mxu0 0.0
        %3792 = vmatpush1.msra.mxu0 %v1226
        %3793 = vmatprep.subr.mxu0 0.0
        %3794 = vmatpush1.msra.mxu0 %v1227
        %3795 = vmatprep.subr.mxu0 0.0
        %3796 = vmatpush1.msra.mxu0 %v1228
        %3797 = vmatprep.subr.mxu0 0.0
        %3798 = vmatpush1.msra.mxu0 %v1229
        %3799 = vmatprep.subr.mxu0 0.0
        %3800 = vmatpush1.msra.mxu0 %v1230
        %3801 = vmatprep.subr.mxu0 0.0
        %3802 = vmatpush1.msra.mxu0 %v1231
        %3803 = vmatprep.subr.mxu0 0.0
        %3804 = vmatpush1.msra.mxu0 %v1232
        %3805 = vmatprep.subr.mxu0 0.0
        %3806 = vmatpush1.msra.mxu0 %v1233
        %3807 = vmatprep.subr.mxu0 0.0
        %3808 = vmatpush1.msra.mxu0 %v1234
        %3809 = vmatprep.subr.mxu0 0.0
        %3810 = vmatpush1.msra.mxu0 %v1235
        %3811 = vmatprep.subr.mxu0 0.0
        %3812 = vmatpush1.msra.mxu0 %v1236
        %3813 = vmatprep.subr.mxu0 0.0
        %3814 = vmatpush1.msra.mxu0 %v1237
        %3815 = vmatprep.subr.mxu0 0.0
        %3816 = vmatpush1.msra.mxu0 %v1238
        %3817 = vmatprep.subr.mxu0 0.0
        %3818 = vmatpush1.msra.mxu0 %v1239
        %3819 = vmatprep.subr.mxu0 0.0
        %3820 = vmatpush1.msra.mxu0 %v1240
        %3821 = vmatprep.subr.mxu0 0.0
        %3822 = vmatpush1.msra.mxu0 %v1241
        %3823 = vmatprep.subr.mxu0 0.0
        %3824 = vmatpush1.msra.mxu0 %v1242
        %3825 = vmatprep.subr.mxu0 0.0
        %3826 = vmatpush1.msra.mxu0 %v1243
        %3827 = vmatprep.subr.mxu0 0.0
        %3828 = vmatpush1.msra.mxu0 %v1244
        %3829 = vmatprep.subr.mxu0 0.0
        %3830 = vmatpush1.msra.mxu0 %v1245
        %3831 = vmatprep.subr.mxu0 0.0
        %3832 = vmatpush1.msra.mxu0 %v1246
        %3833 = vmatprep.subr.mxu0 0.0
        %3834 = vmatpush1.msra.mxu0 %v1247
        %3835 = vmatprep.subr.mxu0 0.0
        %3836 = vmatpush1.msra.mxu0 %v1248
        %3837 = vmatprep.mubr.f32.mxu0 %v340
        %3838 = vmatmul.mubr.f32.gmra.mrb[0].mxu0 %v339
        %v3839 = vpop.f32.mrb[0].mxu0
        %v3840 = vadd.f32 %v3770, %v3839
        %v3841 = vpop.f32.mrb[0].mxu0
        %3842 = vdwg.mxu0
        %3843 = vmatprep.subr.mxu0 0.0
        %3844 = vmatpush1.msra.mxu0 %v1249
        %3845 = vmatprep.subr.mxu0 0.0
        %3846 = vmatpush1.msra.mxu0 %v1250
        %3847 = vmatprep.subr.mxu0 0.0
        %3848 = vmatpush1.msra.mxu0 %v1251
        %3849 = vmatprep.subr.mxu0 0.0
        %3850 = vmatpush1.msra.mxu0 %v1252
        %3851 = vmatprep.subr.mxu0 0.0
        %3852 = vmatpush1.msra.mxu0 %v1253
        %3853 = vmatprep.subr.mxu0 0.0
        %3854 = vmatpush1.msra.mxu0 %v1254
        %3855 = vmatprep.subr.mxu0 0.0
        %3856 = vmatpush1.msra.mxu0 %v1255
        %3857 = vmatprep.subr.mxu0 0.0
        %3858 = vmatpush1.msra.mxu0 %v1256
        %3859 = vmatprep.subr.mxu0 0.0
        %3860 = vmatpush1.msra.mxu0 %v1257
        %3861 = vmatprep.subr.mxu0 0.0
        %3862 = vmatpush1.msra.mxu0 %v1258
        %3863 = vmatprep.subr.mxu0 0.0
        %3864 = vmatpush1.msra.mxu0 %v1259
        %3865 = vmatprep.subr.mxu0 0.0
        %3866 = vmatpush1.msra.mxu0 %v1260
        %3867 = vmatprep.subr.mxu0 0.0
        %3868 = vmatpush1.msra.mxu0 %v1261
        %3869 = vmatprep.subr.mxu0 0.0
        %3870 = vmatpush1.msra.mxu0 %v1262
        %3871 = vmatprep.subr.mxu0 0.0
        %3872 = vmatpush1.msra.mxu0 %v1263
        %3873 = vmatprep.subr.mxu0 0.0
        %3874 = vmatpush1.msra.mxu0 %v1264
        %3875 = vmatprep.subr.mxu0 0.0
        %3876 = vmatpush1.msra.mxu0 %v1265
        %3877 = vmatprep.subr.mxu0 0.0
        %3878 = vmatpush1.msra.mxu0 %v1266
        %3879 = vmatprep.subr.mxu0 0.0
        %3880 = vmatpush1.msra.mxu0 %v1267
        %3881 = vmatprep.subr.mxu0 0.0
        %3882 = vmatpush1.msra.mxu0 %v1268
        %3883 = vmatprep.subr.mxu0 0.0
        %3884 = vmatpush1.msra.mxu0 %v1269
        %3885 = vmatprep.subr.mxu0 0.0
        %3886 = vmatpush1.msra.mxu0 %v1270
        %3887 = vmatprep.subr.mxu0 0.0
        %3888 = vmatpush1.msra.mxu0 %v1271
        %3889 = vmatprep.subr.mxu0 0.0
        %3890 = vmatpush1.msra.mxu0 %v1272
        %3891 = vmatprep.subr.mxu0 0.0
        %3892 = vmatpush1.msra.mxu0 %v1273
        %3893 = vmatprep.subr.mxu0 0.0
        %3894 = vmatpush1.msra.mxu0 %v1274
        %3895 = vmatprep.subr.mxu0 0.0
        %3896 = vmatpush1.msra.mxu0 %v1275
        %3897 = vmatprep.subr.mxu0 0.0
        %3898 = vmatpush1.msra.mxu0 %v1276
        %3899 = vmatprep.subr.mxu0 0.0
        %3900 = vmatpush1.msra.mxu0 %v1277
        %3901 = vmatprep.subr.mxu0 0.0
        %3902 = vmatpush1.msra.mxu0 %v1278
        %3903 = vmatprep.subr.mxu0 0.0
        %3904 = vmatpush1.msra.mxu0 %v1279
        %3905 = vmatprep.subr.mxu0 0.0
        %3906 = vmatpush1.msra.mxu0 %v1280
        %3907 = vmatprep.mubr.f32.mxu0 %v342
        %3908 = vmatmul.mubr.f32.gmra.mrb[0].mxu0 %v341
        %v3909 = vpop.f32.mrb[0].mxu0
        %v3910 = vadd.f32 %v3840, %v3909
        %v3911 = vpop.f32.mrb[0].mxu0
        %3912 = vdwg.mxu0
        %3913 = vmatprep.subr.mxu0 0.0
        %3914 = vmatpush1.msra.mxu0 %v1281
        %3915 = vmatprep.subr.mxu0 0.0
        %3916 = vmatpush1.msra.mxu0 %v1282
        %3917 = vmatprep.subr.mxu0 0.0
        %3918 = vmatpush1.msra.mxu0 %v1283
        %3919 = vmatprep.subr.mxu0 0.0
        %3920 = vmatpush1.msra.mxu0 %v1284
        %3921 = vmatprep.subr.mxu0 0.0
        %3922 = vmatpush1.msra.mxu0 %v1285
        %3923 = vmatprep.subr.mxu0 0.0
        %3924 = vmatpush1.msra.mxu0 %v1286
        %3925 = vmatprep.subr.mxu0 0.0
        %3926 = vmatpush1.msra.mxu0 %v1287
        %3927 = vmatprep.subr.mxu0 0.0
        %3928 = vmatpush1.msra.mxu0 %v1288
        %3929 = vmatprep.subr.mxu0 0.0
        %3930 = vmatpush1.msra.mxu0 %v1289
        %3931 = vmatprep.subr.mxu0 0.0
        %3932 = vmatpush1.msra.mxu0 %v1290
        %3933 = vmatprep.subr.mxu0 0.0
        %3934 = vmatpush1.msra.mxu0 %v1291
        %3935 = vmatprep.subr.mxu0 0.0
        %3936 = vmatpush1.msra.mxu0 %v1292
        %3937 = vmatprep.subr.mxu0 0.0
        %3938 = vmatpush1.msra.mxu0 %v1293
        %3939 = vmatprep.subr.mxu0 0.0
        %3940 = vmatpush1.msra.mxu0 %v1294
        %3941 = vmatprep.subr.mxu0 0.0
        %3942 = vmatpush1.msra.mxu0 %v1295
        %3943 = vmatprep.subr.mxu0 0.0
        %3944 = vmatpush1.msra.mxu0 %v1296
        %3945 = vmatprep.subr.mxu0 0.0
        %3946 = vmatpush1.msra.mxu0 %v1297
        %3947 = vmatprep.subr.mxu0 0.0
        %3948 = vmatpush1.msra.mxu0 %v1298
        %3949 = vmatprep.subr.mxu0 0.0
        %3950 = vmatpush1.msra.mxu0 %v1299
        %3951 = vmatprep.subr.mxu0 0.0
        %3952 = vmatpush1.msra.mxu0 %v1300
        %3953 = vmatprep.subr.mxu0 0.0
        %3954 = vmatpush1.msra.mxu0 %v1301
        %3955 = vmatprep.subr.mxu0 0.0
        %3956 = vmatpush1.msra.mxu0 %v1302
        %3957 = vmatprep.subr.mxu0 0.0
        %3958 = vmatpush1.msra.mxu0 %v1303
        %3959 = vmatprep.subr.mxu0 0.0
        %3960 = vmatpush1.msra.mxu0 %v1304
        %3961 = vmatprep.subr.mxu0 0.0
        %3962 = vmatpush1.msra.mxu0 %v1305
        %3963 = vmatprep.subr.mxu0 0.0
        %3964 = vmatpush1.msra.mxu0 %v1306
        %3965 = vmatprep.subr.mxu0 0.0
        %3966 = vmatpush1.msra.mxu0 %v1307
        %3967 = vmatprep.subr.mxu0 0.0
        %3968 = vmatpush1.msra.mxu0 %v1308
        %3969 = vmatprep.subr.mxu0 0.0
        %3970 = vmatpush1.msra.mxu0 %v1309
        %3971 = vmatprep.subr.mxu0 0.0
        %3972 = vmatpush1.msra.mxu0 %v1310
        %3973 = vmatprep.subr.mxu0 0.0
        %3974 = vmatpush1.msra.mxu0 %v1311
        %3975 = vmatprep.subr.mxu0 0.0
        %3976 = vmatpush1.msra.mxu0 %v1312
        %3977 = vmatprep.mubr.f32.mxu0 %v344
        %3978 = vmatmul.mubr.f32.gmra.mrb[0].mxu0 %v343
        %v3979 = vpop.f32.mrb[0].mxu0
        %v3980 = vadd.f32 %v3910, %v3979
        %v3981 = vpop.f32.mrb[0].mxu0
        %3982 = vdwg.mxu0
        %3983 = vmatprep.subr.mxu0 0.0
        %3984 = vmatpush1.msra.mxu0 %v1313
        %3985 = vmatprep.subr.mxu0 0.0
        %3986 = vmatpush1.msra.mxu0 %v1314
        %3987 = vmatprep.subr.mxu0 0.0
        %3988 = vmatpush1.msra.mxu0 %v1315
        %3989 = vmatprep.subr.mxu0 0.0
        %3990 = vmatpush1.msra.mxu0 %v1316
        %3991 = vmatprep.subr.mxu0 0.0
        %3992 = vmatpush1.msra.mxu0 %v1317
        %3993 = vmatprep.subr.mxu0 0.0
        %3994 = vmatpush1.msra.mxu0 %v1318
        %3995 = vmatprep.subr.mxu0 0.0
        %3996 = vmatpush1.msra.mxu0 %v1319
        %3997 = vmatprep.subr.mxu0 0.0
        %3998 = vmatpush1.msra.mxu0 %v1320
        %3999 = vmatprep.subr.mxu0 0.0
        %4000 = vmatpush1.msra.mxu0 %v1321
        %4001 = vmatprep.subr.mxu0 0.0
        %4002 = vmatpush1.msra.mxu0 %v1322
        %4003 = vmatprep.subr.mxu0 0.0
        %4004 = vmatpush1.msra.mxu0 %v1323
        %4005 = vmatprep.subr.mxu0 0.0
        %4006 = vmatpush1.msra.mxu0 %v1324
        %4007 = vmatprep.subr.mxu0 0.0
        %4008 = vmatpush1.msra.mxu0 %v1325
        %4009 = vmatprep.subr.mxu0 0.0
        %4010 = vmatpush1.msra.mxu0 %v1326
        %4011 = vmatprep.subr.mxu0 0.0
        %4012 = vmatpush1.msra.mxu0 %v1327
        %4013 = vmatprep.subr.mxu0 0.0
        %4014 = vmatpush1.msra.mxu0 %v1328
        %4015 = vmatprep.subr.mxu0 0.0
        %4016 = vmatpush1.msra.mxu0 %v1329
        %4017 = vmatprep.subr.mxu0 0.0
        %4018 = vmatpush1.msra.mxu0 %v1330
        %4019 = vmatprep.subr.mxu0 0.0
        %4020 = vmatpush1.msra.mxu0 %v1331
        %4021 = vmatprep.subr.mxu0 0.0
        %4022 = vmatpush1.msra.mxu0 %v1332
        %4023 = vmatprep.subr.mxu0 0.0
        %4024 = vmatpush1.msra.mxu0 %v1333
        %4025 = vmatprep.subr.mxu0 0.0
        %4026 = vmatpush1.msra.mxu0 %v1334
        %4027 = vmatprep.subr.mxu0 0.0
        %4028 = vmatpush1.msra.mxu0 %v1335
        %4029 = vmatprep.subr.mxu0 0.0
        %4030 = vmatpush1.msra.mxu0 %v1336
        %4031 = vmatprep.subr.mxu0 0.0
        %4032 = vmatpush1.msra.mxu0 %v1337
        %4033 = vmatprep.subr.mxu0 0.0
        %4034 = vmatpush1.msra.mxu0 %v1338
        %4035 = vmatprep.subr.mxu0 0.0
        %4036 = vmatpush1.msra.mxu0 %v1339
        %4037 = vmatprep.subr.mxu0 0.0
        %4038 = vmatpush1.msra.mxu0 %v1340
        %4039 = vmatprep.subr.mxu0 0.0
        %4040 = vmatpush1.msra.mxu0 %v1341
        %4041 = vmatprep.subr.mxu0 0.0
        %4042 = vmatpush1.msra.mxu0 %v1342
        %4043 = vmatprep.subr.mxu0 0.0
        %4044 = vmatpush1.msra.mxu0 %v1343
        %4045 = vmatprep.subr.mxu0 0.0
        %4046 = vmatpush1.msra.mxu0 %v1344
        %4047 = vmatprep.mubr.f32.mxu0 %v346
        %4048 = vmatmul.mubr.f32.gmra.mrb[0].mxu0 %v345
        %v4049 = vpop.f32.mrb[0].mxu0
        %v4050 = vadd.f32 %v3980, %v4049
        %v4051 = vpop.f32.mrb[0].mxu0
        %4052 = vdwg.mxu0
        %4053 = vmatprep.subr.mxu0 0.0
        %4054 = vmatpush1.msra.mxu0 %v1345
        %4055 = vmatprep.subr.mxu0 0.0
        %4056 = vmatpush1.msra.mxu0 %v1346
        %4057 = vmatprep.subr.mxu0 0.0
        %4058 = vmatpush1.msra.mxu0 %v1347
        %4059 = vmatprep.subr.mxu0 0.0
        %4060 = vmatpush1.msra.mxu0 %v1348
        %4061 = vmatprep.subr.mxu0 0.0
        %4062 = vmatpush1.msra.mxu0 %v1349
        %4063 = vmatprep.subr.mxu0 0.0
        %4064 = vmatpush1.msra.mxu0 %v1350
        %4065 = vmatprep.subr.mxu0 0.0
        %4066 = vmatpush1.msra.mxu0 %v1351
        %4067 = vmatprep.subr.mxu0 0.0
        %4068 = vmatpush1.msra.mxu0 %v1352
        %4069 = vmatprep.subr.mxu0 0.0
        %4070 = vmatpush1.msra.mxu0 %v1353
        %4071 = vmatprep.subr.mxu0 0.0
        %4072 = vmatpush1.msra.mxu0 %v1354
        %4073 = vmatprep.subr.mxu0 0.0
        %4074 = vmatpush1.msra.mxu0 %v1355
        %4075 = vmatprep.subr.mxu0 0.0
        %4076 = vmatpush1.msra.mxu0 %v1356
        %4077 = vmatprep.subr.mxu0 0.0
        %4078 = vmatpush1.msra.mxu0 %v1357
        %4079 = vmatprep.subr.mxu0 0.0
        %4080 = vmatpush1.msra.mxu0 %v1358
        %4081 = vmatprep.subr.mxu0 0.0
        %4082 = vmatpush1.msra.mxu0 %v1359
        %4083 = vmatprep.subr.mxu0 0.0
        %4084 = vmatpush1.msra.mxu0 %v1360
        %4085 = vmatprep.subr.mxu0 0.0
        %4086 = vmatpush1.msra.mxu0 %v1361
        %4087 = vmatprep.subr.mxu0 0.0
        %4088 = vmatpush1.msra.mxu0 %v1362
        %4089 = vmatprep.subr.mxu0 0.0
        %4090 = vmatpush1.msra.mxu0 %v1363
        %4091 = vmatprep.subr.mxu0 0.0
        %4092 = vmatpush1.msra.mxu0 %v1364
        %4093 = vmatprep.subr.mxu0 0.0
        %4094 = vmatpush1.msra.mxu0 %v1365
        %4095 = vmatprep.subr.mxu0 0.0
        %4096 = vmatpush1.msra.mxu0 %v1366
        %4097 = vmatprep.subr.mxu0 0.0
        %4098 = vmatpush1.msra.mxu0 %v1367
        %4099 = vmatprep.subr.mxu0 0.0
        %4100 = vmatpush1.msra.mxu0 %v1368
        %4101 = vmatprep.subr.mxu0 0.0
        %4102 = vmatpush1.msra.mxu0 %v1369
        %4103 = vmatprep.subr.mxu0 0.0
        %4104 = vmatpush1.msra.mxu0 %v1370
        %4105 = vmatprep.subr.mxu0 0.0
        %4106 = vmatpush1.msra.mxu0 %v1371
        %4107 = vmatprep.subr.mxu0 0.0
        %4108 = vmatpush1.msra.mxu0 %v1372
        %4109 = vmatprep.subr.mxu0 0.0
        %4110 = vmatpush1.msra.mxu0 %v1373
        %4111 = vmatprep.subr.mxu0 0.0
        %4112 = vmatpush1.msra.mxu0 %v1374
        %4113 = vmatprep.subr.mxu0 0.0
        %4114 = vmatpush1.msra.mxu0 %v1375
        %4115 = vmatprep.subr.mxu0 0.0
        %4116 = vmatpush1.msra.mxu0 %v1376
        %4117 = vmatprep.mubr.f32.mxu0 %v348
        %4118 = vmatmul.mubr.f32.gmra.mrb[0].mxu0 %v347
        %v4119 = vpop.f32.mrb[0].mxu0
        %v4120 = vadd.f32 %v4050, %v4119
        %v4121 = vpop.f32.mrb[0].mxu0
        %4122 = vdwg.mxu0
        %4123 = vmatprep.subr.mxu0 0.0
        %4124 = vmatpush1.msra.mxu0 %v1377
        %4125 = vmatprep.subr.mxu0 0.0
        %4126 = vmatpush1.msra.mxu0 %v1378
        %4127 = vmatprep.subr.mxu0 0.0
        %4128 = vmatpush1.msra.mxu0 %v1379
        %4129 = vmatprep.subr.mxu0 0.0
        %4130 = vmatpush1.msra.mxu0 %v1380
        %4131 = vmatprep.subr.mxu0 0.0
        %4132 = vmatpush1.msra.mxu0 %v1381
        %4133 = vmatprep.subr.mxu0 0.0
        %4134 = vmatpush1.msra.mxu0 %v1382
        %4135 = vmatprep.subr.mxu0 0.0
        %4136 = vmatpush1.msra.mxu0 %v1383
        %4137 = vmatprep.subr.mxu0 0.0
        %4138 = vmatpush1.msra.mxu0 %v1384
        %4139 = vmatprep.subr.mxu0 0.0
        %4140 = vmatpush1.msra.mxu0 %v1385
        %4141 = vmatprep.subr.mxu0 0.0
        %4142 = vmatpush1.msra.mxu0 %v1386
        %4143 = vmatprep.subr.mxu0 0.0
        %4144 = vmatpush1.msra.mxu0 %v1387
        %4145 = vmatprep.subr.mxu0 0.0
        %4146 = vmatpush1.msra.mxu0 %v1388
        %4147 = vmatprep.subr.mxu0 0.0
        %4148 = vmatpush1.msra.mxu0 %v1389
        %4149 = vmatprep.subr.mxu0 0.0
        %4150 = vmatpush1.msra.mxu0 %v1390
        %4151 = vmatprep.subr.mxu0 0.0
        %4152 = vmatpush1.msra.mxu0 %v1391
        %4153 = vmatprep.subr.mxu0 0.0
        %4154 = vmatpush1.msra.mxu0 %v1392
        %4155 = vmatprep.subr.mxu0 0.0
        %4156 = vmatpush1.msra.mxu0 %v1393
        %4157 = vmatprep.subr.mxu0 0.0
        %4158 = vmatpush1.msra.mxu0 %v1394
        %4159 = vmatprep.subr.mxu0 0.0
        %4160 = vmatpush1.msra.mxu0 %v1395
        %4161 = vmatprep.subr.mxu0 0.0
        %4162 = vmatpush1.msra.mxu0 %v1396
        %4163 = vmatprep.subr.mxu0 0.0
        %4164 = vmatpush1.msra.mxu0 %v1397
        %4165 = vmatprep.subr.mxu0 0.0
        %4166 = vmatpush1.msra.mxu0 %v1398
        %4167 = vmatprep.subr.mxu0 0.0
        %4168 = vmatpush1.msra.mxu0 %v1399
        %4169 = vmatprep.subr.mxu0 0.0
        %4170 = vmatpush1.msra.mxu0 %v1400
        %4171 = vmatprep.subr.mxu0 0.0
        %4172 = vmatpush1.msra.mxu0 %v1401
        %4173 = vmatprep.subr.mxu0 0.0
        %4174 = vmatpush1.msra.mxu0 %v1402
        %4175 = vmatprep.subr.mxu0 0.0
        %4176 = vmatpush1.msra.mxu0 %v1403
        %4177 = vmatprep.subr.mxu0 0.0
        %4178 = vmatpush1.msra.mxu0 %v1404
        %4179 = vmatprep.subr.mxu0 0.0
        %4180 = vmatpush1.msra.mxu0 %v1405
        %4181 = vmatprep.subr.mxu0 0.0
        %4182 = vmatpush1.msra.mxu0 %v1406
        %4183 = vmatprep.subr.mxu0 0.0
        %4184 = vmatpush1.msra.mxu0 %v1407
        %4185 = vmatprep.subr.mxu0 0.0
        %4186 = vmatpush1.msra.mxu0 %v1408
        %4187 = vmatprep.mubr.f32.mxu0 %v350
        %4188 = vmatmul.mubr.f32.gmra.mrb[0].mxu0 %v349
        %v4189 = vpop.f32.mrb[0].mxu0
        %v4190 = vadd.f32 %v4120, %v4189
        %v4191 = vpop.f32.mrb[0].mxu0
        %4192 = vdwg.mxu0
        %4193 = vmatprep.subr.mxu0 0.0
        %4194 = vmatpush1.msra.mxu0 %v1409
        %4195 = vmatprep.subr.mxu0 0.0
        %4196 = vmatpush1.msra.mxu0 %v1410
        %4197 = vmatprep.subr.mxu0 0.0
        %4198 = vmatpush1.msra.mxu0 %v1411
        %4199 = vmatprep.subr.mxu0 0.0
        %4200 = vmatpush1.msra.mxu0 %v1412
        %4201 = vmatprep.subr.mxu0 0.0
        %4202 = vmatpush1.msra.mxu0 %v1413
        %4203 = vmatprep.subr.mxu0 0.0
        %4204 = vmatpush1.msra.mxu0 %v1414
        %4205 = vmatprep.subr.mxu0 0.0
        %4206 = vmatpush1.msra.mxu0 %v1415
        %4207 = vmatprep.subr.mxu0 0.0
        %4208 = vmatpush1.msra.mxu0 %v1416
        %4209 = vmatprep.subr.mxu0 0.0
        %4210 = vmatpush1.msra.mxu0 %v1417
        %4211 = vmatprep.subr.mxu0 0.0
        %4212 = vmatpush1.msra.mxu0 %v1418
        %4213 = vmatprep.subr.mxu0 0.0
        %4214 = vmatpush1.msra.mxu0 %v1419
        %4215 = vmatprep.subr.mxu0 0.0
        %4216 = vmatpush1.msra.mxu0 %v1420
        %4217 = vmatprep.subr.mxu0 0.0
        %4218 = vmatpush1.msra.mxu0 %v1421
        %4219 = vmatprep.subr.mxu0 0.0
        %4220 = vmatpush1.msra.mxu0 %v1422
        %4221 = vmatprep.subr.mxu0 0.0
        %4222 = vmatpush1.msra.mxu0 %v1423
        %4223 = vmatprep.subr.mxu0 0.0
        %4224 = vmatpush1.msra.mxu0 %v1424
        %4225 = vmatprep.subr.mxu0 0.0
        %4226 = vmatpush1.msra.mxu0 %v1425
        %4227 = vmatprep.subr.mxu0 0.0
        %4228 = vmatpush1.msra.mxu0 %v1426
        %4229 = vmatprep.subr.mxu0 0.0
        %4230 = vmatpush1.msra.mxu0 %v1427
        %4231 = vmatprep.subr.mxu0 0.0
        %4232 = vmatpush1.msra.mxu0 %v1428
        %4233 = vmatprep.subr.mxu0 0.0
        %4234 = vmatpush1.msra.mxu0 %v1429
        %4235 = vmatprep.subr.mxu0 0.0
        %4236 = vmatpush1.msra.mxu0 %v1430
        %4237 = vmatprep.subr.mxu0 0.0
        %4238 = vmatpush1.msra.mxu0 %v1431
        %4239 = vmatprep.subr.mxu0 0.0
        %4240 = vmatpush1.msra.mxu0 %v1432
        %4241 = vmatprep.subr.mxu0 0.0
        %4242 = vmatpush1.msra.mxu0 %v1433
        %4243 = vmatprep.subr.mxu0 0.0
        %4244 = vmatpush1.msra.mxu0 %v1434
        %4245 = vmatprep.subr.mxu0 0.0
        %4246 = vmatpush1.msra.mxu0 %v1435
        %4247 = vmatprep.subr.mxu0 0.0
        %4248 = vmatpush1.msra.mxu0 %v1436
        %4249 = vmatprep.subr.mxu0 0.0
        %4250 = vmatpush1.msra.mxu0 %v1437
        %4251 = vmatprep.subr.mxu0 0.0
        %4252 = vmatpush1.msra.mxu0 %v1438
        %4253 = vmatprep.subr.mxu0 0.0
        %4254 = vmatpush1.msra.mxu0 %v1439
        %4255 = vmatprep.subr.mxu0 0.0
        %4256 = vmatpush1.msra.mxu0 %v1440
        %4257 = vmatprep.mubr.f32.mxu0 %v352
        %4258 = vmatmul.mubr.f32.gmra.mrb[0].mxu0 %v351
        %v4259 = vpop.f32.mrb[0].mxu0
        %v4260 = vadd.f32 %v4190, %v4259
        %v4261 = vpop.f32.mrb[0].mxu0
        %4262 = vdwg.mxu0
        %4263 = vmatprep.subr.mxu0 0.0
        %4264 = vmatpush1.msra.mxu0 %v1441
        %4265 = vmatprep.subr.mxu0 0.0
        %4266 = vmatpush1.msra.mxu0 %v1442
        %4267 = vmatprep.subr.mxu0 0.0
        %4268 = vmatpush1.msra.mxu0 %v1443
        %4269 = vmatprep.subr.mxu0 0.0
        %4270 = vmatpush1.msra.mxu0 %v1444
        %4271 = vmatprep.subr.mxu0 0.0
        %4272 = vmatpush1.msra.mxu0 %v1445
        %4273 = vmatprep.subr.mxu0 0.0
        %4274 = vmatpush1.msra.mxu0 %v1446
        %4275 = vmatprep.subr.mxu0 0.0
        %4276 = vmatpush1.msra.mxu0 %v1447
        %4277 = vmatprep.subr.mxu0 0.0
        %4278 = vmatpush1.msra.mxu0 %v1448
        %4279 = vmatprep.subr.mxu0 0.0
        %4280 = vmatpush1.msra.mxu0 %v1449
        %4281 = vmatprep.subr.mxu0 0.0
        %4282 = vmatpush1.msra.mxu0 %v1450
        %4283 = vmatprep.subr.mxu0 0.0
        %4284 = vmatpush1.msra.mxu0 %v1451
        %4285 = vmatprep.subr.mxu0 0.0
        %4286 = vmatpush1.msra.mxu0 %v1452
        %4287 = vmatprep.subr.mxu0 0.0
        %4288 = vmatpush1.msra.mxu0 %v1453
        %4289 = vmatprep.subr.mxu0 0.0
        %4290 = vmatpush1.msra.mxu0 %v1454
        %4291 = vmatprep.subr.mxu0 0.0
        %4292 = vmatpush1.msra.mxu0 %v1455
        %4293 = vmatprep.subr.mxu0 0.0
        %4294 = vmatpush1.msra.mxu0 %v1456
        %4295 = vmatprep.subr.mxu0 0.0
        %4296 = vmatpush1.msra.mxu0 %v1457
        %4297 = vmatprep.subr.mxu0 0.0
        %4298 = vmatpush1.msra.mxu0 %v1458
        %4299 = vmatprep.subr.mxu0 0.0
        %4300 = vmatpush1.msra.mxu0 %v1459
        %4301 = vmatprep.subr.mxu0 0.0
        %4302 = vmatpush1.msra.mxu0 %v1460
        %4303 = vmatprep.subr.mxu0 0.0
        %4304 = vmatpush1.msra.mxu0 %v1461
        %4305 = vmatprep.subr.mxu0 0.0
        %4306 = vmatpush1.msra.mxu0 %v1462
        %4307 = vmatprep.subr.mxu0 0.0
        %4308 = vmatpush1.msra.mxu0 %v1463
        %4309 = vmatprep.subr.mxu0 0.0
        %4310 = vmatpush1.msra.mxu0 %v1464
        %4311 = vmatprep.subr.mxu0 0.0
        %4312 = vmatpush1.msra.mxu0 %v1465
        %4313 = vmatprep.subr.mxu0 0.0
        %4314 = vmatpush1.msra.mxu0 %v1466
        %4315 = vmatprep.subr.mxu0 0.0
        %4316 = vmatpush1.msra.mxu0 %v1467
        %4317 = vmatprep.subr.mxu0 0.0
        %4318 = vmatpush1.msra.mxu0 %v1468
        %4319 = vmatprep.subr.mxu0 0.0
        %4320 = vmatpush1.msra.mxu0 %v1469
        %4321 = vmatprep.subr.mxu0 0.0
        %4322 = vmatpush1.msra.mxu0 %v1470
        %4323 = vmatprep.subr.mxu0 0.0
        %4324 = vmatpush1.msra.mxu0 %v1471
        %4325 = vmatprep.subr.mxu0 0.0
        %4326 = vmatpush1.msra.mxu0 %v1472
        %4327 = vmatprep.mubr.f32.mxu0 %v354
        %4328 = vmatmul.mubr.f32.gmra.mrb[0].mxu0 %v353
        %v4329 = vpop.f32.mrb[0].mxu0
        %v4330 = vadd.f32 %v4260, %v4329
        %v4331 = vpop.f32.mrb[0].mxu0
        %4332 = vdwg.mxu0
        %4333 = vmatprep.subr.mxu0 0.0
        %4334 = vmatpush1.msra.mxu0 %v1473
        %4335 = vmatprep.subr.mxu0 0.0
        %4336 = vmatpush1.msra.mxu0 %v1474
        %4337 = vmatprep.subr.mxu0 0.0
        %4338 = vmatpush1.msra.mxu0 %v1475
        %4339 = vmatprep.subr.mxu0 0.0
        %4340 = vmatpush1.msra.mxu0 %v1476
        %4341 = vmatprep.subr.mxu0 0.0
        %4342 = vmatpush1.msra.mxu0 %v1477
        %4343 = vmatprep.subr.mxu0 0.0
        %4344 = vmatpush1.msra.mxu0 %v1478
        %4345 = vmatprep.subr.mxu0 0.0
        %4346 = vmatpush1.msra.mxu0 %v1479
        %4347 = vmatprep.subr.mxu0 0.0
        %4348 = vmatpush1.msra.mxu0 %v1480
        %4349 = vmatprep.subr.mxu0 0.0
        %4350 = vmatpush1.msra.mxu0 %v1481
        %4351 = vmatprep.subr.mxu0 0.0
        %4352 = vmatpush1.msra.mxu0 %v1482
        %4353 = vmatprep.subr.mxu0 0.0
        %4354 = vmatpush1.msra.mxu0 %v1483
        %4355 = vmatprep.subr.mxu0 0.0
        %4356 = vmatpush1.msra.mxu0 %v1484
        %4357 = vmatprep.subr.mxu0 0.0
        %4358 = vmatpush1.msra.mxu0 %v1485
        %4359 = vmatprep.subr.mxu0 0.0
        %4360 = vmatpush1.msra.mxu0 %v1486
        %4361 = vmatprep.subr.mxu0 0.0
        %4362 = vmatpush1.msra.mxu0 %v1487
        %4363 = vmatprep.subr.mxu0 0.0
        %4364 = vmatpush1.msra.mxu0 %v1488
        %4365 = vmatprep.subr.mxu0 0.0
        %4366 = vmatpush1.msra.mxu0 %v1489
        %4367 = vmatprep.subr.mxu0 0.0
        %4368 = vmatpush1.msra.mxu0 %v1490
        %4369 = vmatprep.subr.mxu0 0.0
        %4370 = vmatpush1.msra.mxu0 %v1491
        %4371 = vmatprep.subr.mxu0 0.0
        %4372 = vmatpush1.msra.mxu0 %v1492
        %4373 = vmatprep.subr.mxu0 0.0
        %4374 = vmatpush1.msra.mxu0 %v1493
        %4375 = vmatprep.subr.mxu0 0.0
        %4376 = vmatpush1.msra.mxu0 %v1494
        %4377 = vmatprep.subr.mxu0 0.0
        %4378 = vmatpush1.msra.mxu0 %v1495
        %4379 = vmatprep.subr.mxu0 0.0
        %4380 = vmatpush1.msra.mxu0 %v1496
        %4381 = vmatprep.subr.mxu0 0.0
        %4382 = vmatpush1.msra.mxu0 %v1497
        %4383 = vmatprep.subr.mxu0 0.0
        %4384 = vmatpush1.msra.mxu0 %v1498
        %4385 = vmatprep.subr.mxu0 0.0
        %4386 = vmatpush1.msra.mxu0 %v1499
        %4387 = vmatprep.subr.mxu0 0.0
        %4388 = vmatpush1.msra.mxu0 %v1500
        %4389 = vmatprep.subr.mxu0 0.0
        %4390 = vmatpush1.msra.mxu0 %v1501
        %4391 = vmatprep.subr.mxu0 0.0
        %4392 = vmatpush1.msra.mxu0 %v1502
        %4393 = vmatprep.subr.mxu0 0.0
        %4394 = vmatpush1.msra.mxu0 %v1503
        %4395 = vmatprep.subr.mxu0 0.0
        %4396 = vmatpush1.msra.mxu0 %v1504
        %4397 = vmatprep.mubr.f32.mxu0 %v356
        %4398 = vmatmul.mubr.f32.gmra.mrb[0].mxu0 %v355
        %v4399 = vpop.f32.mrb[0].mxu0
        %v4400 = vadd.f32 %v4330, %v4399
        %v4401 = vpop.f32.mrb[0].mxu0
        %4402 = vdwg.mxu0
        %4403 = vmatprep.subr.mxu0 0.0
        %4404 = vmatpush1.msra.mxu0 %v1505
        %4405 = vmatprep.subr.mxu0 0.0
        %4406 = vmatpush1.msra.mxu0 %v1506
        %4407 = vmatprep.subr.mxu0 0.0
        %4408 = vmatpush1.msra.mxu0 %v1507
        %4409 = vmatprep.subr.mxu0 0.0
        %4410 = vmatpush1.msra.mxu0 %v1508
        %4411 = vmatprep.subr.mxu0 0.0
        %4412 = vmatpush1.msra.mxu0 %v1509
        %4413 = vmatprep.subr.mxu0 0.0
        %4414 = vmatpush1.msra.mxu0 %v1510
        %4415 = vmatprep.subr.mxu0 0.0
        %4416 = vmatpush1.msra.mxu0 %v1511
        %4417 = vmatprep.subr.mxu0 0.0
        %4418 = vmatpush1.msra.mxu0 %v1512
        %4419 = vmatprep.subr.mxu0 0.0
        %4420 = vmatpush1.msra.mxu0 %v1513
        %4421 = vmatprep.subr.mxu0 0.0
        %4422 = vmatpush1.msra.mxu0 %v1514
        %4423 = vmatprep.subr.mxu0 0.0
        %4424 = vmatpush1.msra.mxu0 %v1515
        %4425 = vmatprep.subr.mxu0 0.0
        %4426 = vmatpush1.msra.mxu0 %v1516
        %4427 = vmatprep.subr.mxu0 0.0
        %4428 = vmatpush1.msra.mxu0 %v1517
        %4429 = vmatprep.subr.mxu0 0.0
        %4430 = vmatpush1.msra.mxu0 %v1518
        %4431 = vmatprep.subr.mxu0 0.0
        %4432 = vmatpush1.msra.mxu0 %v1519
        %4433 = vmatprep.subr.mxu0 0.0
        %4434 = vmatpush1.msra.mxu0 %v1520
        %4435 = vmatprep.subr.mxu0 0.0
        %4436 = vmatpush1.msra.mxu0 %v1521
        %4437 = vmatprep.subr.mxu0 0.0
        %4438 = vmatpush1.msra.mxu0 %v1522
        %4439 = vmatprep.subr.mxu0 0.0
        %4440 = vmatpush1.msra.mxu0 %v1523
        %4441 = vmatprep.subr.mxu0 0.0
        %4442 = vmatpush1.msra.mxu0 %v1524
        %4443 = vmatprep.subr.mxu0 0.0
        %4444 = vmatpush1.msra.mxu0 %v1525
        %4445 = vmatprep.subr.mxu0 0.0
        %4446 = vmatpush1.msra.mxu0 %v1526
        %4447 = vmatprep.subr.mxu0 0.0
        %4448 = vmatpush1.msra.mxu0 %v1527
        %4449 = vmatprep.subr.mxu0 0.0
        %4450 = vmatpush1.msra.mxu0 %v1528
        %4451 = vmatprep.subr.mxu0 0.0
        %4452 = vmatpush1.msra.mxu0 %v1529
        %4453 = vmatprep.subr.mxu0 0.0
        %4454 = vmatpush1.msra.mxu0 %v1530
        %4455 = vmatprep.subr.mxu0 0.0
        %4456 = vmatpush1.msra.mxu0 %v1531
        %4457 = vmatprep.subr.mxu0 0.0
        %4458 = vmatpush1.msra.mxu0 %v1532
        %4459 = vmatprep.subr.mxu0 0.0
        %4460 = vmatpush1.msra.mxu0 %v1533
        %4461 = vmatprep.subr.mxu0 0.0
        %4462 = vmatpush1.msra.mxu0 %v1534
        %4463 = vmatprep.subr.mxu0 0.0
        %4464 = vmatpush1.msra.mxu0 %v1535
        %4465 = vmatprep.subr.mxu0 0.0
        %4466 = vmatpush1.msra.mxu0 %v1536
        %4467 = vmatprep.mubr.f32.mxu0 %v358
        %4468 = vmatmul.mubr.f32.gmra.mrb[0].mxu0 %v357
        %v4469 = vpop.f32.mrb[0].mxu0
        %v4470 = vadd.f32 %v4400, %v4469
        %v4471 = vpop.f32.mrb[0].mxu0
        %4472 = vdwg.mxu0
        %4473 = vmatprep.subr.mxu0 0.0
        %4474 = vmatpush1.msra.mxu0 %v1537
        %4475 = vmatprep.subr.mxu0 0.0
        %4476 = vmatpush1.msra.mxu0 %v1538
        %4477 = vmatprep.subr.mxu0 0.0
        %4478 = vmatpush1.msra.mxu0 %v1539
        %4479 = vmatprep.subr.mxu0 0.0
        %4480 = vmatpush1.msra.mxu0 %v1540
        %4481 = vmatprep.subr.mxu0 0.0
        %4482 = vmatpush1.msra.mxu0 %v1541
        %4483 = vmatprep.subr.mxu0 0.0
        %4484 = vmatpush1.msra.mxu0 %v1542
        %4485 = vmatprep.subr.mxu0 0.0
        %4486 = vmatpush1.msra.mxu0 %v1543
        %4487 = vmatprep.subr.mxu0 0.0
        %4488 = vmatpush1.msra.mxu0 %v1544
        %4489 = vmatprep.subr.mxu0 0.0
        %4490 = vmatpush1.msra.mxu0 %v1545
        %4491 = vmatprep.subr.mxu0 0.0
        %4492 = vmatpush1.msra.mxu0 %v1546
        %4493 = vmatprep.subr.mxu0 0.0
        %4494 = vmatpush1.msra.mxu0 %v1547
        %4495 = vmatprep.subr.mxu0 0.0
        %4496 = vmatpush1.msra.mxu0 %v1548
        %4497 = vmatprep.subr.mxu0 0.0
        %4498 = vmatpush1.msra.mxu0 %v1549
        %4499 = vmatprep.subr.mxu0 0.0
        %4500 = vmatpush1.msra.mxu0 %v1550
        %4501 = vmatprep.subr.mxu0 0.0
        %4502 = vmatpush1.msra.mxu0 %v1551
        %4503 = vmatprep.subr.mxu0 0.0
        %4504 = vmatpush1.msra.mxu0 %v1552
        %4505 = vmatprep.subr.mxu0 0.0
        %4506 = vmatpush1.msra.mxu0 %v1553
        %4507 = vmatprep.subr.mxu0 0.0
        %4508 = vmatpush1.msra.mxu0 %v1554
        %4509 = vmatprep.subr.mxu0 0.0
        %4510 = vmatpush1.msra.mxu0 %v1555
        %4511 = vmatprep.subr.mxu0 0.0
        %4512 = vmatpush1.msra.mxu0 %v1556
        %4513 = vmatprep.subr.mxu0 0.0
        %4514 = vmatpush1.msra.mxu0 %v1557
        %4515 = vmatprep.subr.mxu0 0.0
        %4516 = vmatpush1.msra.mxu0 %v1558
        %4517 = vmatprep.subr.mxu0 0.0
        %4518 = vmatpush1.msra.mxu0 %v1559
        %4519 = vmatprep.subr.mxu0 0.0
        %4520 = vmatpush1.msra.mxu0 %v1560
        %4521 = vmatprep.subr.mxu0 0.0
        %4522 = vmatpush1.msra.mxu0 %v1561
        %4523 = vmatprep.subr.mxu0 0.0
        %4524 = vmatpush1.msra.mxu0 %v1562
        %4525 = vmatprep.subr.mxu0 0.0
        %4526 = vmatpush1.msra.mxu0 %v1563
        %4527 = vmatprep.subr.mxu0 0.0
        %4528 = vmatpush1.msra.mxu0 %v1564
        %4529 = vmatprep.subr.mxu0 0.0
        %4530 = vmatpush1.msra.mxu0 %v1565
        %4531 = vmatprep.subr.mxu0 0.0
        %4532 = vmatpush1.msra.mxu0 %v1566
        %4533 = vmatprep.subr.mxu0 0.0
        %4534 = vmatpush1.msra.mxu0 %v1567
        %4535 = vmatprep.subr.mxu0 0.0
        %4536 = vmatpush1.msra.mxu0 %v1568
        %4537 = vmatprep.mubr.f32.mxu0 %v360
        %4538 = vmatmul.mubr.f32.gmra.mrb[0].mxu0 %v359
        %v4539 = vpop.f32.mrb[0].mxu0
        %v4540 = vadd.f32 %v4470, %v4539
        %v4541 = vpop.f32.mrb[0].mxu0
        %4542 = vdwg.mxu0
        %4543 = vmatprep.subr.mxu0 0.0
        %4544 = vmatpush1.msra.mxu0 %v1569
        %4545 = vmatprep.subr.mxu0 0.0
        %4546 = vmatpush1.msra.mxu0 %v1570
        %4547 = vmatprep.subr.mxu0 0.0
        %4548 = vmatpush1.msra.mxu0 %v1571
        %4549 = vmatprep.subr.mxu0 0.0
        %4550 = vmatpush1.msra.mxu0 %v1572
        %4551 = vmatprep.subr.mxu0 0.0
        %4552 = vmatpush1.msra.mxu0 %v1573
        %4553 = vmatprep.subr.mxu0 0.0
        %4554 = vmatpush1.msra.mxu0 %v1574
        %4555 = vmatprep.subr.mxu0 0.0
        %4556 = vmatpush1.msra.mxu0 %v1575
        %4557 = vmatprep.subr.mxu0 0.0
        %4558 = vmatpush1.msra.mxu0 %v1576
        %4559 = vmatprep.subr.mxu0 0.0
        %4560 = vmatpush1.msra.mxu0 %v1577
        %4561 = vmatprep.subr.mxu0 0.0
        %4562 = vmatpush1.msra.mxu0 %v1578
        %4563 = vmatprep.subr.mxu0 0.0
        %4564 = vmatpush1.msra.mxu0 %v1579
        %4565 = vmatprep.subr.mxu0 0.0
        %4566 = vmatpush1.msra.mxu0 %v1580
        %4567 = vmatprep.subr.mxu0 0.0
        %4568 = vmatpush1.msra.mxu0 %v1581
        %4569 = vmatprep.subr.mxu0 0.0
        %4570 = vmatpush1.msra.mxu0 %v1582
        %4571 = vmatprep.subr.mxu0 0.0
        %4572 = vmatpush1.msra.mxu0 %v1583
        %4573 = vmatprep.subr.mxu0 0.0
        %4574 = vmatpush1.msra.mxu0 %v1584
        %4575 = vmatprep.subr.mxu0 0.0
        %4576 = vmatpush1.msra.mxu0 %v1585
        %4577 = vmatprep.subr.mxu0 0.0
        %4578 = vmatpush1.msra.mxu0 %v1586
        %4579 = vmatprep.subr.mxu0 0.0
        %4580 = vmatpush1.msra.mxu0 %v1587
        %4581 = vmatprep.subr.mxu0 0.0
        %4582 = vmatpush1.msra.mxu0 %v1588
        %4583 = vmatprep.subr.mxu0 0.0
        %4584 = vmatpush1.msra.mxu0 %v1589
        %4585 = vmatprep.subr.mxu0 0.0
        %4586 = vmatpush1.msra.mxu0 %v1590
        %4587 = vmatprep.subr.mxu0 0.0
        %4588 = vmatpush1.msra.mxu0 %v1591
        %4589 = vmatprep.subr.mxu0 0.0
        %4590 = vmatpush1.msra.mxu0 %v1592
        %4591 = vmatprep.subr.mxu0 0.0
        %4592 = vmatpush1.msra.mxu0 %v1593
        %4593 = vmatprep.subr.mxu0 0.0
        %4594 = vmatpush1.msra.mxu0 %v1594
        %4595 = vmatprep.subr.mxu0 0.0
        %4596 = vmatpush1.msra.mxu0 %v1595
        %4597 = vmatprep.subr.mxu0 0.0
        %4598 = vmatpush1.msra.mxu0 %v1596
        %4599 = vmatprep.subr.mxu0 0.0
        %4600 = vmatpush1.msra.mxu0 %v1597
        %4601 = vmatprep.subr.mxu0 0.0
        %4602 = vmatpush1.msra.mxu0 %v1598
        %4603 = vmatprep.subr.mxu0 0.0
        %4604 = vmatpush1.msra.mxu0 %v1599
        %4605 = vmatprep.subr.mxu0 0.0
        %4606 = vmatpush1.msra.mxu0 %v1600
        %4607 = vmatprep.mubr.f32.mxu0 %v362
        %4608 = vmatmul.mubr.f32.gmra.mrb[0].mxu0 %v361
        %v4609 = vpop.f32.mrb[0].mxu0
        %v4610 = vadd.f32 %v4540, %v4609
        %v4611 = vpop.f32.mrb[0].mxu0
        %4612 = vdwg.mxu0
        %4613 = vmatprep.subr.mxu0 0.0
        %4614 = vmatpush1.msra.mxu0 %v1601
        %4615 = vmatprep.subr.mxu0 0.0
        %4616 = vmatpush1.msra.mxu0 %v1602
        %4617 = vmatprep.subr.mxu0 0.0
        %4618 = vmatpush1.msra.mxu0 %v1603
        %4619 = vmatprep.subr.mxu0 0.0
        %4620 = vmatpush1.msra.mxu0 %v1604
        %4621 = vmatprep.subr.mxu0 0.0
        %4622 = vmatpush1.msra.mxu0 %v1605
        %4623 = vmatprep.subr.mxu0 0.0
        %4624 = vmatpush1.msra.mxu0 %v1606
        %4625 = vmatprep.subr.mxu0 0.0
        %4626 = vmatpush1.msra.mxu0 %v1607
        %4627 = vmatprep.subr.mxu0 0.0
        %4628 = vmatpush1.msra.mxu0 %v1608
        %4629 = vmatprep.subr.mxu0 0.0
        %4630 = vmatpush1.msra.mxu0 %v1609
        %4631 = vmatprep.subr.mxu0 0.0
        %4632 = vmatpush1.msra.mxu0 %v1610
        %4633 = vmatprep.subr.mxu0 0.0
        %4634 = vmatpush1.msra.mxu0 %v1611
        %4635 = vmatprep.subr.mxu0 0.0
        %4636 = vmatpush1.msra.mxu0 %v1612
        %4637 = vmatprep.subr.mxu0 0.0
        %4638 = vmatpush1.msra.mxu0 %v1613
        %4639 = vmatprep.subr.mxu0 0.0
        %4640 = vmatpush1.msra.mxu0 %v1614
        %4641 = vmatprep.subr.mxu0 0.0
        %4642 = vmatpush1.msra.mxu0 %v1615
        %4643 = vmatprep.subr.mxu0 0.0
        %4644 = vmatpush1.msra.mxu0 %v1616
        %4645 = vmatprep.subr.mxu0 0.0
        %4646 = vmatpush1.msra.mxu0 %v1617
        %4647 = vmatprep.subr.mxu0 0.0
        %4648 = vmatpush1.msra.mxu0 %v1618
        %4649 = vmatprep.subr.mxu0 0.0
        %4650 = vmatpush1.msra.mxu0 %v1619
        %4651 = vmatprep.subr.mxu0 0.0
        %4652 = vmatpush1.msra.mxu0 %v1620
        %4653 = vmatprep.subr.mxu0 0.0
        %4654 = vmatpush1.msra.mxu0 %v1621
        %4655 = vmatprep.subr.mxu0 0.0
        %4656 = vmatpush1.msra.mxu0 %v1622
        %4657 = vmatprep.subr.mxu0 0.0
        %4658 = vmatpush1.msra.mxu0 %v1623
        %4659 = vmatprep.subr.mxu0 0.0
        %4660 = vmatpush1.msra.mxu0 %v1624
        %4661 = vmatprep.subr.mxu0 0.0
        %4662 = vmatpush1.msra.mxu0 %v1625
        %4663 = vmatprep.subr.mxu0 0.0
        %4664 = vmatpush1.msra.mxu0 %v1626
        %4665 = vmatprep.subr.mxu0 0.0
        %4666 = vmatpush1.msra.mxu0 %v1627
        %4667 = vmatprep.subr.mxu0 0.0
        %4668 = vmatpush1.msra.mxu0 %v1628
        %4669 = vmatprep.subr.mxu0 0.0
        %4670 = vmatpush1.msra.mxu0 %v1629
        %4671 = vmatprep.subr.mxu0 0.0
        %4672 = vmatpush1.msra.mxu0 %v1630
        %4673 = vmatprep.subr.mxu0 0.0
        %4674 = vmatpush1.msra.mxu0 %v1631
        %4675 = vmatprep.subr.mxu0 0.0
        %4676 = vmatpush1.msra.mxu0 %v1632
        %4677 = vmatprep.mubr.f32.mxu0 %v364
        %4678 = vmatmul.mubr.f32.gmra.mrb[0].mxu0 %v363
        %v4679 = vpop.f32.mrb[0].mxu0
        %v4680 = vadd.f32 %v4610, %v4679
        %v4681 = vpop.f32.mrb[0].mxu0
        %4682 = vdwg.mxu0
        %4683 = vmatprep.subr.mxu0 0.0
        %4684 = vmatpush1.msra.mxu0 %v1633
        %4685 = vmatprep.subr.mxu0 0.0
        %4686 = vmatpush1.msra.mxu0 %v1634
        %4687 = vmatprep.subr.mxu0 0.0
        %4688 = vmatpush1.msra.mxu0 %v1635
        %4689 = vmatprep.subr.mxu0 0.0
        %4690 = vmatpush1.msra.mxu0 %v1636
        %4691 = vmatprep.subr.mxu0 0.0
        %4692 = vmatpush1.msra.mxu0 %v1637
        %4693 = vmatprep.subr.mxu0 0.0
        %4694 = vmatpush1.msra.mxu0 %v1638
        %4695 = vmatprep.subr.mxu0 0.0
        %4696 = vmatpush1.msra.mxu0 %v1639
        %4697 = vmatprep.subr.mxu0 0.0
        %4698 = vmatpush1.msra.mxu0 %v1640
        %4699 = vmatprep.subr.mxu0 0.0
        %4700 = vmatpush1.msra.mxu0 %v1641
        %4701 = vmatprep.subr.mxu0 0.0
        %4702 = vmatpush1.msra.mxu0 %v1642
        %4703 = vmatprep.subr.mxu0 0.0
        %4704 = vmatpush1.msra.mxu0 %v1643
        %4705 = vmatprep.subr.mxu0 0.0
        %4706 = vmatpush1.msra.mxu0 %v1644
        %4707 = vmatprep.subr.mxu0 0.0
        %4708 = vmatpush1.msra.mxu0 %v1645
        %4709 = vmatprep.subr.mxu0 0.0
        %4710 = vmatpush1.msra.mxu0 %v1646
        %4711 = vmatprep.subr.mxu0 0.0
        %4712 = vmatpush1.msra.mxu0 %v1647
        %4713 = vmatprep.subr.mxu0 0.0
        %4714 = vmatpush1.msra.mxu0 %v1648
        %4715 = vmatprep.subr.mxu0 0.0
        %4716 = vmatpush1.msra.mxu0 %v1649
        %4717 = vmatprep.subr.mxu0 0.0
        %4718 = vmatpush1.msra.mxu0 %v1650
        %4719 = vmatprep.subr.mxu0 0.0
        %4720 = vmatpush1.msra.mxu0 %v1651
        %4721 = vmatprep.subr.mxu0 0.0
        %4722 = vmatpush1.msra.mxu0 %v1652
        %4723 = vmatprep.subr.mxu0 0.0
        %4724 = vmatpush1.msra.mxu0 %v1653
        %4725 = vmatprep.subr.mxu0 0.0
        %4726 = vmatpush1.msra.mxu0 %v1654
        %4727 = vmatprep.subr.mxu0 0.0
        %4728 = vmatpush1.msra.mxu0 %v1655
        %4729 = vmatprep.subr.mxu0 0.0
        %4730 = vmatpush1.msra.mxu0 %v1656
        %4731 = vmatprep.subr.mxu0 0.0
        %4732 = vmatpush1.msra.mxu0 %v1657
        %4733 = vmatprep.subr.mxu0 0.0
        %4734 = vmatpush1.msra.mxu0 %v1658
        %4735 = vmatprep.subr.mxu0 0.0
        %4736 = vmatpush1.msra.mxu0 %v1659
        %4737 = vmatprep.subr.mxu0 0.0
        %4738 = vmatpush1.msra.mxu0 %v1660
        %4739 = vmatprep.subr.mxu0 0.0
        %4740 = vmatpush1.msra.mxu0 %v1661
        %4741 = vmatprep.subr.mxu0 0.0
        %4742 = vmatpush1.msra.mxu0 %v1662
        %4743 = vmatprep.subr.mxu0 0.0
        %4744 = vmatpush1.msra.mxu0 %v1663
        %4745 = vmatprep.subr.mxu0 0.0
        %4746 = vmatpush1.msra.mxu0 %v1664
        %4747 = vmatprep.mubr.f32.mxu0 %v366
        %4748 = vmatmul.mubr.f32.gmra.mrb[0].mxu0 %v365
        %v4749 = vpop.f32.mrb[0].mxu0
        %v4750 = vadd.f32 %v4680, %v4749
        %v4751 = vpop.f32.mrb[0].mxu0
        %4752 = vdwg.mxu0
        %4753 = vmatprep.subr.mxu0 0.0
        %4754 = vmatpush1.msra.mxu0 %v1665
        %4755 = vmatprep.subr.mxu0 0.0
        %4756 = vmatpush1.msra.mxu0 %v1666
        %4757 = vmatprep.subr.mxu0 0.0
        %4758 = vmatpush1.msra.mxu0 %v1667
        %4759 = vmatprep.subr.mxu0 0.0
        %4760 = vmatpush1.msra.mxu0 %v1668
        %4761 = vmatprep.subr.mxu0 0.0
        %4762 = vmatpush1.msra.mxu0 %v1669
        %4763 = vmatprep.subr.mxu0 0.0
        %4764 = vmatpush1.msra.mxu0 %v1670
        %4765 = vmatprep.subr.mxu0 0.0
        %4766 = vmatpush1.msra.mxu0 %v1671
        %4767 = vmatprep.subr.mxu0 0.0
        %4768 = vmatpush1.msra.mxu0 %v1672
        %4769 = vmatprep.subr.mxu0 0.0
        %4770 = vmatpush1.msra.mxu0 %v1673
        %4771 = vmatprep.subr.mxu0 0.0
        %4772 = vmatpush1.msra.mxu0 %v1674
        %4773 = vmatprep.subr.mxu0 0.0
        %4774 = vmatpush1.msra.mxu0 %v1675
        %4775 = vmatprep.subr.mxu0 0.0
        %4776 = vmatpush1.msra.mxu0 %v1676
        %4777 = vmatprep.subr.mxu0 0.0
        %4778 = vmatpush1.msra.mxu0 %v1677
        %4779 = vmatprep.subr.mxu0 0.0
        %4780 = vmatpush1.msra.mxu0 %v1678
        %4781 = vmatprep.subr.mxu0 0.0
        %4782 = vmatpush1.msra.mxu0 %v1679
        %4783 = vmatprep.subr.mxu0 0.0
        %4784 = vmatpush1.msra.mxu0 %v1680
        %4785 = vmatprep.subr.mxu0 0.0
        %4786 = vmatpush1.msra.mxu0 %v1681
        %4787 = vmatprep.subr.mxu0 0.0
        %4788 = vmatpush1.msra.mxu0 %v1682
        %4789 = vmatprep.subr.mxu0 0.0
        %4790 = vmatpush1.msra.mxu0 %v1683
        %4791 = vmatprep.subr.mxu0 0.0
        %4792 = vmatpush1.msra.mxu0 %v1684
        %4793 = vmatprep.subr.mxu0 0.0
        %4794 = vmatpush1.msra.mxu0 %v1685
        %4795 = vmatprep.subr.mxu0 0.0
        %4796 = vmatpush1.msra.mxu0 %v1686
        %4797 = vmatprep.subr.mxu0 0.0
        %4798 = vmatpush1.msra.mxu0 %v1687
        %4799 = vmatprep.subr.mxu0 0.0
        %4800 = vmatpush1.msra.mxu0 %v1688
        %4801 = vmatprep.subr.mxu0 0.0
        %4802 = vmatpush1.msra.mxu0 %v1689
        %4803 = vmatprep.subr.mxu0 0.0
        %4804 = vmatpush1.msra.mxu0 %v1690
        %4805 = vmatprep.subr.mxu0 0.0
        %4806 = vmatpush1.msra.mxu0 %v1691
        %4807 = vmatprep.subr.mxu0 0.0
        %4808 = vmatpush1.msra.mxu0 %v1692
        %4809 = vmatprep.subr.mxu0 0.0
        %4810 = vmatpush1.msra.mxu0 %v1693
        %4811 = vmatprep.subr.mxu0 0.0
        %4812 = vmatpush1.msra.mxu0 %v1694
        %4813 = vmatprep.subr.mxu0 0.0
        %4814 = vmatpush1.msra.mxu0 %v1695
        %4815 = vmatprep.subr.mxu0 0.0
        %4816 = vmatpush1.msra.mxu0 %v1696
        %4817 = vmatprep.mubr.f32.mxu0 %v368
        %4818 = vmatmul.mubr.f32.gmra.mrb[0].mxu0 %v367
        %v4819 = vpop.f32.mrb[0].mxu0
        %v4820 = vadd.f32 %v4750, %v4819
        %v4821 = vpop.f32.mrb[0].mxu0
        %4822 = vdwg.mxu0
        %4823 = vmatprep.subr.mxu0 0.0
        %4824 = vmatpush1.msra.mxu0 %v1697
        %4825 = vmatprep.subr.mxu0 0.0
        %4826 = vmatpush1.msra.mxu0 %v1698
        %4827 = vmatprep.subr.mxu0 0.0
        %4828 = vmatpush1.msra.mxu0 %v1699
        %4829 = vmatprep.subr.mxu0 0.0
        %4830 = vmatpush1.msra.mxu0 %v1700
        %4831 = vmatprep.subr.mxu0 0.0
        %4832 = vmatpush1.msra.mxu0 %v1701
        %4833 = vmatprep.subr.mxu0 0.0
        %4834 = vmatpush1.msra.mxu0 %v1702
        %4835 = vmatprep.subr.mxu0 0.0
        %4836 = vmatpush1.msra.mxu0 %v1703
        %4837 = vmatprep.subr.mxu0 0.0
        %4838 = vmatpush1.msra.mxu0 %v1704
        %4839 = vmatprep.subr.mxu0 0.0
        %4840 = vmatpush1.msra.mxu0 %v1705
        %4841 = vmatprep.subr.mxu0 0.0
        %4842 = vmatpush1.msra.mxu0 %v1706
        %4843 = vmatprep.subr.mxu0 0.0
        %4844 = vmatpush1.msra.mxu0 %v1707
        %4845 = vmatprep.subr.mxu0 0.0
        %4846 = vmatpush1.msra.mxu0 %v1708
        %4847 = vmatprep.subr.mxu0 0.0
        %4848 = vmatpush1.msra.mxu0 %v1709
        %4849 = vmatprep.subr.mxu0 0.0
        %4850 = vmatpush1.msra.mxu0 %v1710
        %4851 = vmatprep.subr.mxu0 0.0
        %4852 = vmatpush1.msra.mxu0 %v1711
        %4853 = vmatprep.subr.mxu0 0.0
        %4854 = vmatpush1.msra.mxu0 %v1712
        %4855 = vmatprep.subr.mxu0 0.0
        %4856 = vmatpush1.msra.mxu0 %v1713
        %4857 = vmatprep.subr.mxu0 0.0
        %4858 = vmatpush1.msra.mxu0 %v1714
        %4859 = vmatprep.subr.mxu0 0.0
        %4860 = vmatpush1.msra.mxu0 %v1715
        %4861 = vmatprep.subr.mxu0 0.0
        %4862 = vmatpush1.msra.mxu0 %v1716
        %4863 = vmatprep.subr.mxu0 0.0
        %4864 = vmatpush1.msra.mxu0 %v1717
        %4865 = vmatprep.subr.mxu0 0.0
        %4866 = vmatpush1.msra.mxu0 %v1718
        %4867 = vmatprep.subr.mxu0 0.0
        %4868 = vmatpush1.msra.mxu0 %v1719
        %4869 = vmatprep.subr.mxu0 0.0
        %4870 = vmatpush1.msra.mxu0 %v1720
        %4871 = vmatprep.subr.mxu0 0.0
        %4872 = vmatpush1.msra.mxu0 %v1721
        %4873 = vmatprep.subr.mxu0 0.0
        %4874 = vmatpush1.msra.mxu0 %v1722
        %4875 = vmatprep.subr.mxu0 0.0
        %4876 = vmatpush1.msra.mxu0 %v1723
        %4877 = vmatprep.subr.mxu0 0.0
        %4878 = vmatpush1.msra.mxu0 %v1724
        %4879 = vmatprep.subr.mxu0 0.0
        %4880 = vmatpush1.msra.mxu0 %v1725
        %4881 = vmatprep.subr.mxu0 0.0
        %4882 = vmatpush1.msra.mxu0 %v1726
        %4883 = vmatprep.subr.mxu0 0.0
        %4884 = vmatpush1.msra.mxu0 %v1727
        %4885 = vmatprep.subr.mxu0 0.0
        %4886 = vmatpush1.msra.mxu0 %v1728
        %4887 = vmatprep.mubr.f32.mxu0 %v370
        %4888 = vmatmul.mubr.f32.gmra.mrb[0].mxu0 %v369
        %v4889 = vpop.f32.mrb[0].mxu0
        %v4890 = vadd.f32 %v4820, %v4889
        %v4891 = vpop.f32.mrb[0].mxu0
        %4892 = vdwg.mxu0
        %4893 = vmatprep.subr.mxu0 0.0
        %4894 = vmatpush1.msra.mxu0 %v1729
        %4895 = vmatprep.subr.mxu0 0.0
        %4896 = vmatpush1.msra.mxu0 %v1730
        %4897 = vmatprep.subr.mxu0 0.0
        %4898 = vmatpush1.msra.mxu0 %v1731
        %4899 = vmatprep.subr.mxu0 0.0
        %4900 = vmatpush1.msra.mxu0 %v1732
        %4901 = vmatprep.subr.mxu0 0.0
        %4902 = vmatpush1.msra.mxu0 %v1733
        %4903 = vmatprep.subr.mxu0 0.0
        %4904 = vmatpush1.msra.mxu0 %v1734
        %4905 = vmatprep.subr.mxu0 0.0
        %4906 = vmatpush1.msra.mxu0 %v1735
        %4907 = vmatprep.subr.mxu0 0.0
        %4908 = vmatpush1.msra.mxu0 %v1736
        %4909 = vmatprep.subr.mxu0 0.0
        %4910 = vmatpush1.msra.mxu0 %v1737
        %4911 = vmatprep.subr.mxu0 0.0
        %4912 = vmatpush1.msra.mxu0 %v1738
        %4913 = vmatprep.subr.mxu0 0.0
        %4914 = vmatpush1.msra.mxu0 %v1739
        %4915 = vmatprep.subr.mxu0 0.0
        %4916 = vmatpush1.msra.mxu0 %v1740
        %4917 = vmatprep.subr.mxu0 0.0
        %4918 = vmatpush1.msra.mxu0 %v1741
        %4919 = vmatprep.subr.mxu0 0.0
        %4920 = vmatpush1.msra.mxu0 %v1742
        %4921 = vmatprep.subr.mxu0 0.0
        %4922 = vmatpush1.msra.mxu0 %v1743
        %4923 = vmatprep.subr.mxu0 0.0
        %4924 = vmatpush1.msra.mxu0 %v1744
        %4925 = vmatprep.subr.mxu0 0.0
        %4926 = vmatpush1.msra.mxu0 %v1745
        %4927 = vmatprep.subr.mxu0 0.0
        %4928 = vmatpush1.msra.mxu0 %v1746
        %4929 = vmatprep.subr.mxu0 0.0
        %4930 = vmatpush1.msra.mxu0 %v1747
        %4931 = vmatprep.subr.mxu0 0.0
        %4932 = vmatpush1.msra.mxu0 %v1748
        %4933 = vmatprep.subr.mxu0 0.0
        %4934 = vmatpush1.msra.mxu0 %v1749
        %4935 = vmatprep.subr.mxu0 0.0
        %4936 = vmatpush1.msra.mxu0 %v1750
        %4937 = vmatprep.subr.mxu0 0.0
        %4938 = vmatpush1.msra.mxu0 %v1751
        %4939 = vmatprep.subr.mxu0 0.0
        %4940 = vmatpush1.msra.mxu0 %v1752
        %4941 = vmatprep.subr.mxu0 0.0
        %4942 = vmatpush1.msra.mxu0 %v1753
        %4943 = vmatprep.subr.mxu0 0.0
        %4944 = vmatpush1.msra.mxu0 %v1754
        %4945 = vmatprep.subr.mxu0 0.0
        %4946 = vmatpush1.msra.mxu0 %v1755
        %4947 = vmatprep.subr.mxu0 0.0
        %4948 = vmatpush1.msra.mxu0 %v1756
        %4949 = vmatprep.subr.mxu0 0.0
        %4950 = vmatpush1.msra.mxu0 %v1757
        %4951 = vmatprep.subr.mxu0 0.0
        %4952 = vmatpush1.msra.mxu0 %v1758
        %4953 = vmatprep.subr.mxu0 0.0
        %4954 = vmatpush1.msra.mxu0 %v1759
        %4955 = vmatprep.subr.mxu0 0.0
        %4956 = vmatpush1.msra.mxu0 %v1760
        %4957 = vmatprep.mubr.f32.mxu0 %v372
        %4958 = vmatmul.mubr.f32.gmra.mrb[0].mxu0 %v371
        %v4959 = vpop.f32.mrb[0].mxu0
        %v4960 = vadd.f32 %v4890, %v4959
        %v4961 = vpop.f32.mrb[0].mxu0
        %4962 = vdwg.mxu0
        %4963 = vmatprep.subr.mxu0 0.0
        %4964 = vmatpush1.msra.mxu0 %v1761
        %4965 = vmatprep.subr.mxu0 0.0
        %4966 = vmatpush1.msra.mxu0 %v1762
        %4967 = vmatprep.subr.mxu0 0.0
        %4968 = vmatpush1.msra.mxu0 %v1763
        %4969 = vmatprep.subr.mxu0 0.0
        %4970 = vmatpush1.msra.mxu0 %v1764
        %4971 = vmatprep.subr.mxu0 0.0
        %4972 = vmatpush1.msra.mxu0 %v1765
        %4973 = vmatprep.subr.mxu0 0.0
        %4974 = vmatpush1.msra.mxu0 %v1766
        %4975 = vmatprep.subr.mxu0 0.0
        %4976 = vmatpush1.msra.mxu0 %v1767
        %4977 = vmatprep.subr.mxu0 0.0
        %4978 = vmatpush1.msra.mxu0 %v1768
        %4979 = vmatprep.subr.mxu0 0.0
        %4980 = vmatpush1.msra.mxu0 %v1769
        %4981 = vmatprep.subr.mxu0 0.0
        %4982 = vmatpush1.msra.mxu0 %v1770
        %4983 = vmatprep.subr.mxu0 0.0
        %4984 = vmatpush1.msra.mxu0 %v1771
        %4985 = vmatprep.subr.mxu0 0.0
        %4986 = vmatpush1.msra.mxu0 %v1772
        %4987 = vmatprep.subr.mxu0 0.0
        %4988 = vmatpush1.msra.mxu0 %v1773
        %4989 = vmatprep.subr.mxu0 0.0
        %4990 = vmatpush1.msra.mxu0 %v1774
        %4991 = vmatprep.subr.mxu0 0.0
        %4992 = vmatpush1.msra.mxu0 %v1775
        %4993 = vmatprep.subr.mxu0 0.0
        %4994 = vmatpush1.msra.mxu0 %v1776
        %4995 = vmatprep.subr.mxu0 0.0
        %4996 = vmatpush1.msra.mxu0 %v1777
        %4997 = vmatprep.subr.mxu0 0.0
        %4998 = vmatpush1.msra.mxu0 %v1778
        %4999 = vmatprep.subr.mxu0 0.0
        %5000 = vmatpush1.msra.mxu0 %v1779
        %5001 = vmatprep.subr.mxu0 0.0
        %5002 = vmatpush1.msra.mxu0 %v1780
        %5003 = vmatprep.subr.mxu0 0.0
        %5004 = vmatpush1.msra.mxu0 %v1781
        %5005 = vmatprep.subr.mxu0 0.0
        %5006 = vmatpush1.msra.mxu0 %v1782
        %5007 = vmatprep.subr.mxu0 0.0
        %5008 = vmatpush1.msra.mxu0 %v1783
        %5009 = vmatprep.subr.mxu0 0.0
        %5010 = vmatpush1.msra.mxu0 %v1784
        %5011 = vmatprep.subr.mxu0 0.0
        %5012 = vmatpush1.msra.mxu0 %v1785
        %5013 = vmatprep.subr.mxu0 0.0
        %5014 = vmatpush1.msra.mxu0 %v1786
        %5015 = vmatprep.subr.mxu0 0.0
        %5016 = vmatpush1.msra.mxu0 %v1787
        %5017 = vmatprep.subr.mxu0 0.0
        %5018 = vmatpush1.msra.mxu0 %v1788
        %5019 = vmatprep.subr.mxu0 0.0
        %5020 = vmatpush1.msra.mxu0 %v1789
        %5021 = vmatprep.subr.mxu0 0.0
        %5022 = vmatpush1.msra.mxu0 %v1790
        %5023 = vmatprep.subr.mxu0 0.0
        %5024 = vmatpush1.msra.mxu0 %v1791
        %5025 = vmatprep.subr.mxu0 0.0
        %5026 = vmatpush1.msra.mxu0 %v1792
        %5027 = vmatprep.mubr.f32.mxu0 %v374
        %5028 = vmatmul.mubr.f32.gmra.mrb[0].mxu0 %v373
        %v5029 = vpop.f32.mrb[0].mxu0
        %v5030 = vadd.f32 %v4960, %v5029
        %v5031 = vpop.f32.mrb[0].mxu0
        %5032 = vdwg.mxu0
        %5033 = vmatprep.subr.mxu0 0.0
        %5034 = vmatpush1.msra.mxu0 %v1793
        %5035 = vmatprep.subr.mxu0 0.0
        %5036 = vmatpush1.msra.mxu0 %v1794
        %5037 = vmatprep.subr.mxu0 0.0
        %5038 = vmatpush1.msra.mxu0 %v1795
        %5039 = vmatprep.subr.mxu0 0.0
        %5040 = vmatpush1.msra.mxu0 %v1796
        %5041 = vmatprep.subr.mxu0 0.0
        %5042 = vmatpush1.msra.mxu0 %v1797
        %5043 = vmatprep.subr.mxu0 0.0
        %5044 = vmatpush1.msra.mxu0 %v1798
        %5045 = vmatprep.subr.mxu0 0.0
        %5046 = vmatpush1.msra.mxu0 %v1799
        %5047 = vmatprep.subr.mxu0 0.0
        %5048 = vmatpush1.msra.mxu0 %v1800
        %5049 = vmatprep.subr.mxu0 0.0
        %5050 = vmatpush1.msra.mxu0 %v1801
        %5051 = vmatprep.subr.mxu0 0.0
        %5052 = vmatpush1.msra.mxu0 %v1802
        %5053 = vmatprep.subr.mxu0 0.0
        %5054 = vmatpush1.msra.mxu0 %v1803
        %5055 = vmatprep.subr.mxu0 0.0
        %5056 = vmatpush1.msra.mxu0 %v1804
        %5057 = vmatprep.subr.mxu0 0.0
        %5058 = vmatpush1.msra.mxu0 %v1805
        %5059 = vmatprep.subr.mxu0 0.0
        %5060 = vmatpush1.msra.mxu0 %v1806
        %5061 = vmatprep.subr.mxu0 0.0
        %5062 = vmatpush1.msra.mxu0 %v1807
        %5063 = vmatprep.subr.mxu0 0.0
        %5064 = vmatpush1.msra.mxu0 %v1808
        %5065 = vmatprep.subr.mxu0 0.0
        %5066 = vmatpush1.msra.mxu0 %v1809
        %5067 = vmatprep.subr.mxu0 0.0
        %5068 = vmatpush1.msra.mxu0 %v1810
        %5069 = vmatprep.subr.mxu0 0.0
        %5070 = vmatpush1.msra.mxu0 %v1811
        %5071 = vmatprep.subr.mxu0 0.0
        %5072 = vmatpush1.msra.mxu0 %v1812
        %5073 = vmatprep.subr.mxu0 0.0
        %5074 = vmatpush1.msra.mxu0 %v1813
        %5075 = vmatprep.subr.mxu0 0.0
        %5076 = vmatpush1.msra.mxu0 %v1814
        %5077 = vmatprep.subr.mxu0 0.0
        %5078 = vmatpush1.msra.mxu0 %v1815
        %5079 = vmatprep.subr.mxu0 0.0
        %5080 = vmatpush1.msra.mxu0 %v1816
        %5081 = vmatprep.subr.mxu0 0.0
        %5082 = vmatpush1.msra.mxu0 %v1817
        %5083 = vmatprep.subr.mxu0 0.0
        %5084 = vmatpush1.msra.mxu0 %v1818
        %5085 = vmatprep.subr.mxu0 0.0
        %5086 = vmatpush1.msra.mxu0 %v1819
        %5087 = vmatprep.subr.mxu0 0.0
        %5088 = vmatpush1.msra.mxu0 %v1820
        %5089 = vmatprep.subr.mxu0 0.0
        %5090 = vmatpush1.msra.mxu0 %v1821
        %5091 = vmatprep.subr.mxu0 0.0
        %5092 = vmatpush1.msra.mxu0 %v1822
        %5093 = vmatprep.subr.mxu0 0.0
        %5094 = vmatpush1.msra.mxu0 %v1823
        %5095 = vmatprep.subr.mxu0 0.0
        %5096 = vmatpush1.msra.mxu0 %v1824
        %5097 = vmatprep.mubr.f32.mxu0 %v376
        %5098 = vmatmul.mubr.f32.gmra.mrb[0].mxu0 %v375
        %v5099 = vpop.f32.mrb[0].mxu0
        %v5100 = vadd.f32 %v5030, %v5099
        %v5101 = vpop.f32.mrb[0].mxu0
        %5102 = vdwg.mxu0
        %5103 = vmatprep.subr.mxu0 0.0
        %5104 = vmatpush1.msra.mxu0 %v1825
        %5105 = vmatprep.subr.mxu0 0.0
        %5106 = vmatpush1.msra.mxu0 %v1826
        %5107 = vmatprep.subr.mxu0 0.0
        %5108 = vmatpush1.msra.mxu0 %v1827
        %5109 = vmatprep.subr.mxu0 0.0
        %5110 = vmatpush1.msra.mxu0 %v1828
        %5111 = vmatprep.subr.mxu0 0.0
        %5112 = vmatpush1.msra.mxu0 %v1829
        %5113 = vmatprep.subr.mxu0 0.0
        %5114 = vmatpush1.msra.mxu0 %v1830
        %5115 = vmatprep.subr.mxu0 0.0
        %5116 = vmatpush1.msra.mxu0 %v1831
        %5117 = vmatprep.subr.mxu0 0.0
        %5118 = vmatpush1.msra.mxu0 %v1832
        %5119 = vmatprep.subr.mxu0 0.0
        %5120 = vmatpush1.msra.mxu0 %v1833
        %5121 = vmatprep.subr.mxu0 0.0
        %5122 = vmatpush1.msra.mxu0 %v1834
        %5123 = vmatprep.subr.mxu0 0.0
        %5124 = vmatpush1.msra.mxu0 %v1835
        %5125 = vmatprep.subr.mxu0 0.0
        %5126 = vmatpush1.msra.mxu0 %v1836
        %5127 = vmatprep.subr.mxu0 0.0
        %5128 = vmatpush1.msra.mxu0 %v1837
        %5129 = vmatprep.subr.mxu0 0.0
        %5130 = vmatpush1.msra.mxu0 %v1838
        %5131 = vmatprep.subr.mxu0 0.0
        %5132 = vmatpush1.msra.mxu0 %v1839
        %5133 = vmatprep.subr.mxu0 0.0
        %5134 = vmatpush1.msra.mxu0 %v1840
        %5135 = vmatprep.subr.mxu0 0.0
        %5136 = vmatpush1.msra.mxu0 %v1841
        %5137 = vmatprep.subr.mxu0 0.0
        %5138 = vmatpush1.msra.mxu0 %v1842
        %5139 = vmatprep.subr.mxu0 0.0
        %5140 = vmatpush1.msra.mxu0 %v1843
        %5141 = vmatprep.subr.mxu0 0.0
        %5142 = vmatpush1.msra.mxu0 %v1844
        %5143 = vmatprep.subr.mxu0 0.0
        %5144 = vmatpush1.msra.mxu0 %v1845
        %5145 = vmatprep.subr.mxu0 0.0
        %5146 = vmatpush1.msra.mxu0 %v1846
        %5147 = vmatprep.subr.mxu0 0.0
        %5148 = vmatpush1.msra.mxu0 %v1847
        %5149 = vmatprep.subr.mxu0 0.0
        %5150 = vmatpush1.msra.mxu0 %v1848
        %5151 = vmatprep.subr.mxu0 0.0
        %5152 = vmatpush1.msra.mxu0 %v1849
        %5153 = vmatprep.subr.mxu0 0.0
        %5154 = vmatpush1.msra.mxu0 %v1850
        %5155 = vmatprep.subr.mxu0 0.0
        %5156 = vmatpush1.msra.mxu0 %v1851
        %5157 = vmatprep.subr.mxu0 0.0
        %5158 = vmatpush1.msra.mxu0 %v1852
        %5159 = vmatprep.subr.mxu0 0.0
        %5160 = vmatpush1.msra.mxu0 %v1853
        %5161 = vmatprep.subr.mxu0 0.0
        %5162 = vmatpush1.msra.mxu0 %v1854
        %5163 = vmatprep.subr.mxu0 0.0
        %5164 = vmatpush1.msra.mxu0 %v1855
        %5165 = vmatprep.subr.mxu0 0.0
        %5166 = vmatpush1.msra.mxu0 %v1856
        %5167 = vmatprep.mubr.f32.mxu0 %v378
        %5168 = vmatmul.mubr.f32.gmra.mrb[0].mxu0 %v377
        %v5169 = vpop.f32.mrb[0].mxu0
        %v5170 = vadd.f32 %v5100, %v5169
        %v5171 = vpop.f32.mrb[0].mxu0
        %5172 = vdwg.mxu0
        %5173 = vmatprep.subr.mxu0 0.0
        %5174 = vmatpush1.msra.mxu0 %v1857
        %5175 = vmatprep.subr.mxu0 0.0
        %5176 = vmatpush1.msra.mxu0 %v1858
        %5177 = vmatprep.subr.mxu0 0.0
        %5178 = vmatpush1.msra.mxu0 %v1859
        %5179 = vmatprep.subr.mxu0 0.0
        %5180 = vmatpush1.msra.mxu0 %v1860
        %5181 = vmatprep.subr.mxu0 0.0
        %5182 = vmatpush1.msra.mxu0 %v1861
        %5183 = vmatprep.subr.mxu0 0.0
        %5184 = vmatpush1.msra.mxu0 %v1862
        %5185 = vmatprep.subr.mxu0 0.0
        %5186 = vmatpush1.msra.mxu0 %v1863
        %5187 = vmatprep.subr.mxu0 0.0
        %5188 = vmatpush1.msra.mxu0 %v1864
        %5189 = vmatprep.subr.mxu0 0.0
        %5190 = vmatpush1.msra.mxu0 %v1865
        %5191 = vmatprep.subr.mxu0 0.0
        %5192 = vmatpush1.msra.mxu0 %v1866
        %5193 = vmatprep.subr.mxu0 0.0
        %5194 = vmatpush1.msra.mxu0 %v1867
        %5195 = vmatprep.subr.mxu0 0.0
        %5196 = vmatpush1.msra.mxu0 %v1868
        %5197 = vmatprep.subr.mxu0 0.0
        %5198 = vmatpush1.msra.mxu0 %v1869
        %5199 = vmatprep.subr.mxu0 0.0
        %5200 = vmatpush1.msra.mxu0 %v1870
        %5201 = vmatprep.subr.mxu0 0.0
        %5202 = vmatpush1.msra.mxu0 %v1871
        %5203 = vmatprep.subr.mxu0 0.0
        %5204 = vmatpush1.msra.mxu0 %v1872
        %5205 = vmatprep.subr.mxu0 0.0
        %5206 = vmatpush1.msra.mxu0 %v1873
        %5207 = vmatprep.subr.mxu0 0.0
        %5208 = vmatpush1.msra.mxu0 %v1874
        %5209 = vmatprep.subr.mxu0 0.0
        %5210 = vmatpush1.msra.mxu0 %v1875
        %5211 = vmatprep.subr.mxu0 0.0
        %5212 = vmatpush1.msra.mxu0 %v1876
        %5213 = vmatprep.subr.mxu0 0.0
        %5214 = vmatpush1.msra.mxu0 %v1877
        %5215 = vmatprep.subr.mxu0 0.0
        %5216 = vmatpush1.msra.mxu0 %v1878
        %5217 = vmatprep.subr.mxu0 0.0
        %5218 = vmatpush1.msra.mxu0 %v1879
        %5219 = vmatprep.subr.mxu0 0.0
        %5220 = vmatpush1.msra.mxu0 %v1880
        %5221 = vmatprep.subr.mxu0 0.0
        %5222 = vmatpush1.msra.mxu0 %v1881
        %5223 = vmatprep.subr.mxu0 0.0
        %5224 = vmatpush1.msra.mxu0 %v1882
        %5225 = vmatprep.subr.mxu0 0.0
        %5226 = vmatpush1.msra.mxu0 %v1883
        %5227 = vmatprep.subr.mxu0 0.0
        %5228 = vmatpush1.msra.mxu0 %v1884
        %5229 = vmatprep.subr.mxu0 0.0
        %5230 = vmatpush1.msra.mxu0 %v1885
        %5231 = vmatprep.subr.mxu0 0.0
        %5232 = vmatpush1.msra.mxu0 %v1886
        %5233 = vmatprep.subr.mxu0 0.0
        %5234 = vmatpush1.msra.mxu0 %v1887
        %5235 = vmatprep.subr.mxu0 0.0
        %5236 = vmatpush1.msra.mxu0 %v1888
        %5237 = vmatprep.mubr.f32.mxu0 %v380
        %5238 = vmatmul.mubr.f32.gmra.mrb[0].mxu0 %v379
        %v5239 = vpop.f32.mrb[0].mxu0
        %v5240 = vadd.f32 %v5170, %v5239
        %v5241 = vpop.f32.mrb[0].mxu0
        %5242 = vdwg.mxu0
        %5243 = vmatprep.subr.mxu0 0.0
        %5244 = vmatpush1.msra.mxu0 %v1889
        %5245 = vmatprep.subr.mxu0 0.0
        %5246 = vmatpush1.msra.mxu0 %v1890
        %5247 = vmatprep.subr.mxu0 0.0
        %5248 = vmatpush1.msra.mxu0 %v1891
        %5249 = vmatprep.subr.mxu0 0.0
        %5250 = vmatpush1.msra.mxu0 %v1892
        %5251 = vmatprep.subr.mxu0 0.0
        %5252 = vmatpush1.msra.mxu0 %v1893
        %5253 = vmatprep.subr.mxu0 0.0
        %5254 = vmatpush1.msra.mxu0 %v1894
        %5255 = vmatprep.subr.mxu0 0.0
        %5256 = vmatpush1.msra.mxu0 %v1895
        %5257 = vmatprep.subr.mxu0 0.0
        %5258 = vmatpush1.msra.mxu0 %v1896
        %5259 = vmatprep.subr.mxu0 0.0
        %5260 = vmatpush1.msra.mxu0 %v1897
        %5261 = vmatprep.subr.mxu0 0.0
        %5262 = vmatpush1.msra.mxu0 %v1898
        %5263 = vmatprep.subr.mxu0 0.0
        %5264 = vmatpush1.msra.mxu0 %v1899
        %5265 = vmatprep.subr.mxu0 0.0
        %5266 = vmatpush1.msra.mxu0 %v1900
        %5267 = vmatprep.subr.mxu0 0.0
        %5268 = vmatpush1.msra.mxu0 %v1901
        %5269 = vmatprep.subr.mxu0 0.0
        %5270 = vmatpush1.msra.mxu0 %v1902
        %5271 = vmatprep.subr.mxu0 0.0
        %5272 = vmatpush1.msra.mxu0 %v1903
        %5273 = vmatprep.subr.mxu0 0.0
        %5274 = vmatpush1.msra.mxu0 %v1904
        %5275 = vmatprep.subr.mxu0 0.0
        %5276 = vmatpush1.msra.mxu0 %v1905
        %5277 = vmatprep.subr.mxu0 0.0
        %5278 = vmatpush1.msra.mxu0 %v1906
        %5279 = vmatprep.subr.mxu0 0.0
        %5280 = vmatpush1.msra.mxu0 %v1907
        %5281 = vmatprep.subr.mxu0 0.0
        %5282 = vmatpush1.msra.mxu0 %v1908
        %5283 = vmatprep.subr.mxu0 0.0
        %5284 = vmatpush1.msra.mxu0 %v1909
        %5285 = vmatprep.subr.mxu0 0.0
        %5286 = vmatpush1.msra.mxu0 %v1910
        %5287 = vmatprep.subr.mxu0 0.0
        %5288 = vmatpush1.msra.mxu0 %v1911
        %5289 = vmatprep.subr.mxu0 0.0
        %5290 = vmatpush1.msra.mxu0 %v1912
        %5291 = vmatprep.subr.mxu0 0.0
        %5292 = vmatpush1.msra.mxu0 %v1913
        %5293 = vmatprep.subr.mxu0 0.0
        %5294 = vmatpush1.msra.mxu0 %v1914
        %5295 = vmatprep.subr.mxu0 0.0
        %5296 = vmatpush1.msra.mxu0 %v1915
        %5297 = vmatprep.subr.mxu0 0.0
        %5298 = vmatpush1.msra.mxu0 %v1916
        %5299 = vmatprep.subr.mxu0 0.0
        %5300 = vmatpush1.msra.mxu0 %v1917
        %5301 = vmatprep.subr.mxu0 0.0
        %5302 = vmatpush1.msra.mxu0 %v1918
        %5303 = vmatprep.subr.mxu0 0.0
        %5304 = vmatpush1.msra.mxu0 %v1919
        %5305 = vmatprep.subr.mxu0 0.0
        %5306 = vmatpush1.msra.mxu0 %v1920
        %5307 = vmatprep.mubr.f32.mxu0 %v382
        %5308 = vmatmul.mubr.f32.gmra.mrb[0].mxu0 %v381
        %v5309 = vpop.f32.mrb[0].mxu0
        %v5310 = vadd.f32 %v5240, %v5309
        %v5311 = vpop.f32.mrb[0].mxu0
        %5312 = vdwg.mxu0
        %5313 = vmatprep.subr.mxu0 0.0
        %5314 = vmatpush1.msra.mxu0 %v1921
        %5315 = vmatprep.subr.mxu0 0.0
        %5316 = vmatpush1.msra.mxu0 %v1922
        %5317 = vmatprep.subr.mxu0 0.0
        %5318 = vmatpush1.msra.mxu0 %v1923
        %5319 = vmatprep.subr.mxu0 0.0
        %5320 = vmatpush1.msra.mxu0 %v1924
        %5321 = vmatprep.subr.mxu0 0.0
        %5322 = vmatpush1.msra.mxu0 %v1925
        %5323 = vmatprep.subr.mxu0 0.0
        %5324 = vmatpush1.msra.mxu0 %v1926
        %5325 = vmatprep.subr.mxu0 0.0
        %5326 = vmatpush1.msra.mxu0 %v1927
        %5327 = vmatprep.subr.mxu0 0.0
        %5328 = vmatpush1.msra.mxu0 %v1928
        %5329 = vmatprep.subr.mxu0 0.0
        %5330 = vmatpush1.msra.mxu0 %v1929
        %5331 = vmatprep.subr.mxu0 0.0
        %5332 = vmatpush1.msra.mxu0 %v1930
        %5333 = vmatprep.subr.mxu0 0.0
        %5334 = vmatpush1.msra.mxu0 %v1931
        %5335 = vmatprep.subr.mxu0 0.0
        %5336 = vmatpush1.msra.mxu0 %v1932
        %5337 = vmatprep.subr.mxu0 0.0
        %5338 = vmatpush1.msra.mxu0 %v1933
        %5339 = vmatprep.subr.mxu0 0.0
        %5340 = vmatpush1.msra.mxu0 %v1934
        %5341 = vmatprep.subr.mxu0 0.0
        %5342 = vmatpush1.msra.mxu0 %v1935
        %5343 = vmatprep.subr.mxu0 0.0
        %5344 = vmatpush1.msra.mxu0 %v1936
        %5345 = vmatprep.subr.mxu0 0.0
        %5346 = vmatpush1.msra.mxu0 %v1937
        %5347 = vmatprep.subr.mxu0 0.0
        %5348 = vmatpush1.msra.mxu0 %v1938
        %5349 = vmatprep.subr.mxu0 0.0
        %5350 = vmatpush1.msra.mxu0 %v1939
        %5351 = vmatprep.subr.mxu0 0.0
        %5352 = vmatpush1.msra.mxu0 %v1940
        %5353 = vmatprep.subr.mxu0 0.0
        %5354 = vmatpush1.msra.mxu0 %v1941
        %5355 = vmatprep.subr.mxu0 0.0
        %5356 = vmatpush1.msra.mxu0 %v1942
        %5357 = vmatprep.subr.mxu0 0.0
        %5358 = vmatpush1.msra.mxu0 %v1943
        %5359 = vmatprep.subr.mxu0 0.0
        %5360 = vmatpush1.msra.mxu0 %v1944
        %5361 = vmatprep.subr.mxu0 0.0
        %5362 = vmatpush1.msra.mxu0 %v1945
        %5363 = vmatprep.subr.mxu0 0.0
        %5364 = vmatpush1.msra.mxu0 %v1946
        %5365 = vmatprep.subr.mxu0 0.0
        %5366 = vmatpush1.msra.mxu0 %v1947
        %5367 = vmatprep.subr.mxu0 0.0
        %5368 = vmatpush1.msra.mxu0 %v1948
        %5369 = vmatprep.subr.mxu0 0.0
        %5370 = vmatpush1.msra.mxu0 %v1949
        %5371 = vmatprep.subr.mxu0 0.0
        %5372 = vmatpush1.msra.mxu0 %v1950
        %5373 = vmatprep.subr.mxu0 0.0
        %5374 = vmatpush1.msra.mxu0 %v1951
        %5375 = vmatprep.subr.mxu0 0.0
        %5376 = vmatpush1.msra.mxu0 %v1952
        %5377 = vmatprep.mubr.f32.mxu0 %v384
        %5378 = vmatmul.mubr.f32.gmra.mrb[0].mxu0 %v383
        %v5379 = vpop.f32.mrb[0].mxu0
        %v5380 = vadd.f32 %v5310, %v5379
        %v5381 = vpop.f32.mrb[0].mxu0
        %5382 = vdwg.mxu0
        %v5383 = vadd.f32 %v286, %v5380
        %vm5384 = vcmask 523264
        %5385 = vst.msk [vmem:[#allocation2] sm:$0xff] %vm5384, %v5383
        %p5386 = scmp.eq.s32.totalorder %s23, 1
        // Predicated region
        $region41: #{tpu_custom_call.1} parent=35 // pred_check
          %p5387 = pneg %p5386
        $region42: #{tpu_custom_call.1} parent=35 // pred_check_branch
          %5389 = sbr.rel (%p5387) target = $region44
        $region43: #{tpu_custom_call.1} parent=35 // pred_region
          %v5390 = vld [vmem:[#allocation2] sm:$0xff]
          %v5391 = vld [vmem:[%s274] sm:$0x1]
          %v5393 = vlaneseq
          %v5394 = vshrl.u32 %v5393, 7
          %v5395 = vsub.s32 0, %v5394
          %v5396 = vrot.slane %v5391, %v5395
          %v5398 = vadd.f32 %v5390, %v5396
          %v5399 = vtanh.pop %v5398
          %v5400 = vld [vmem:[%s279] sm:$0xff]
          %v5401 = vld [vmem:[%s279 + $0x8] sm:$0xff]
          %v5402 = vld [vmem:[%s279 + $0x10] sm:$0xff]
          %v5403 = vld [vmem:[%s279 + $0x18] sm:$0xff]
          %v5404 = vld [vmem:[%s279 + $0x20] sm:$0xff]
          %v5405 = vld [vmem:[%s279 + $0x28] sm:$0xff]
          %v5406 = vld [vmem:[%s279 + $0x30] sm:$0xff]
          %v5407 = vld [vmem:[%s279 + $0x38] sm:$0xff]
          %v5409 = vsel %vm5384, %v5399, 0
          %5411 = vmatprep.subr.mxu0 0.0
          %5412 = vmatpush1.msra.mxu0 %v5400
          %5413 = vmatprep.subr.mxu0 0.0
          %5414 = vmatpush1.msra.mxu0 %v5401
          %5415 = vmatprep.subr.mxu0 0.0
          %5416 = vmatpush1.msra.mxu0 %v5402
          %5417 = vmatprep.subr.mxu0 0.0
          %5418 = vmatpush1.msra.mxu0 %v5403
          %5419 = vmatprep.subr.mxu0 0.0
          %5420 = vmatpush1.msra.mxu0 %v5404
          %5421 = vmatprep.subr.mxu0 0.0
          %5422 = vmatpush1.msra.mxu0 %v5405
          %5423 = vmatprep.subr.mxu0 0.0
          %5424 = vmatpush1.msra.mxu0 %v5406
          %5425 = vmatprep.subr.mxu0 0.0
          %5426 = vmatpush1.msra.mxu0 %v5407
          %5427 = vmatprep.subr.mxu0 0.0
          %5428 = vmatpush1.msra.mxu0 0.0
          %5429 = vmatprep.subr.mxu0 0.0
          %5430 = vmatpush1.msra.mxu0 0.0
          %5431 = vmatprep.subr.mxu0 0.0
          %5432 = vmatpush1.msra.mxu0 0.0
          %5433 = vmatprep.subr.mxu0 0.0
          %5434 = vmatpush1.msra.mxu0 0.0
          %5435 = vmatprep.subr.mxu0 0.0
          %5436 = vmatpush1.msra.mxu0 0.0
          %5437 = vmatprep.subr.mxu0 0.0
          %5438 = vmatpush1.msra.mxu0 0.0
          %5439 = vmatprep.subr.mxu0 0.0
          %5440 = vmatpush1.msra.mxu0 0.0
          %5441 = vmatprep.subr.mxu0 0.0
          %5442 = vmatpush1.msra.mxu0 0.0
          %5443 = vmatprep.subr.mxu0 0.0
          %5444 = vmatpush1.msra.mxu0 0.0
          %5445 = vmatprep.subr.mxu0 0.0
          %5446 = vmatpush1.msra.mxu0 0.0
          %5447 = vmatprep.subr.mxu0 0.0
          %5448 = vmatpush1.msra.mxu0 0.0
          %5449 = vmatprep.subr.mxu0 0.0
          %5450 = vmatpush1.msra.mxu0 0.0
          %5451 = vmatprep.subr.mxu0 0.0
          %5452 = vmatpush1.msra.mxu0 0.0
          %5453 = vmatprep.subr.mxu0 0.0
          %5454 = vmatpush1.msra.mxu0 0.0
          %5455 = vmatprep.subr.mxu0 0.0
          %5456 = vmatpush1.msra.mxu0 0.0
          %5457 = vmatprep.subr.mxu0 0.0
          %5458 = vmatpush1.msra.mxu0 0.0
          %5459 = vmatprep.subr.mxu0 0.0
          %5460 = vmatpush1.msra.mxu0 0.0
          %5461 = vmatprep.subr.mxu0 0.0
          %5462 = vmatpush1.msra.mxu0 0.0
          %5463 = vmatprep.subr.mxu0 0.0
          %5464 = vmatpush1.msra.mxu0 0.0
          %5465 = vmatprep.subr.mxu0 0.0
          %5466 = vmatpush1.msra.mxu0 0.0
          %5467 = vmatprep.subr.mxu0 0.0
          %5468 = vmatpush1.msra.mxu0 0.0
          %5469 = vmatprep.subr.mxu0 0.0
          %5470 = vmatpush1.msra.mxu0 0.0
          %5471 = vmatprep.subr.mxu0 0.0
          %5472 = vmatpush1.msra.mxu0 0.0
          %5473 = vmatprep.subr.mxu0 0.0
          %5474 = vmatpush1.msra.mxu0 0.0
          %5475 = vmatprep.mubr.f32.mxu0 0.0
          %5476 = vmatmul.mubr.f32.gmra.mrb[0].mxu0 %v5409
          %v5477 = vpop.f32.mrb[0].mxu0
          %v5478 = vadd.f32 0.0, %v5477
          %v5479 = vpop.f32.mrb[0].mxu0
          %5480 = vdwg.mxu0
          %vm5481 = vcmask 130048
          %5482 = vst.msk [vmem:[%s255] sm:$0xff] %vm5481, %v5478
        $region44: #{tpu_custom_call.1} parent=35 // pred_fallthru
          _
        %s5483 = sand.u32 %s144, 1
        %s5484 = scalar_lea.sflag [#allocation4], %s5483
        %s5485 = sand.u32 %s144, 1
        %s5486 = smul.addr %s5485, 8
        %s5487 = scalar_lea.vmem [#allocation3], %s5486
        // Predicated region
        $region45: #{tpu_custom_call.1} parent=35 // pred_check
          %p5488 = pneg %p154
        $region46: #{tpu_custom_call.1} parent=35 // pred_check_branch
          %5490 = sbr.rel (%p5488) target = $region48
        $region47: #{tpu_custom_call.1} parent=35 // pred_region
          %s5492 = ssub.s32 128, 128
          %5493 = vsyncadd %s5484, %s5492
          %s5494 = smul.addr %s22, 128
          %s5495 = scalar_lea.hbm %s4, %s5494
          %s5497 = sshll.u32 %s5487, 4
          %s5498 = int_to_ptr.vmem [resolvable:$true] %s5497
          %5500 = dma.vmem_to_hbm [thread:$0]  %s5498, 128, %s5495, %s5484
        $region48: #{tpu_custom_call.1} parent=35 // pred_fallthru
          _
      $region36: #{tpu_custom_call.1} parent=5 // pred_fallthru
        _
      %p5501 = scmp.le.s32.totalorder 2, %s13
      // Predicated region
      $region49: #{tpu_custom_call.1} parent=5 // pred_check
        %p5502 = pneg %p5501
      $region50: #{tpu_custom_call.1} parent=5 // pred_check_branch
        %5504 = sbr.rel (%p5502) target = $region52
      $region51: #{tpu_custom_call.1} parent=5 // pred_region
        %s5505 = ssub.s32 %s13, 2
        // Predicated region
        $region53: #{tpu_custom_call.1} parent=51 // pred_check
          %p5506 = pneg %p160
        $region54: #{tpu_custom_call.1} parent=51 // pred_check_branch
          %5508 = sbr.rel (%p5506) target = $region56
        $region55: #{tpu_custom_call.1} parent=51 // pred_region
          %s5509 = sand.u32 %s145, 1
          %s5510 = scalar_lea.sflag [#allocation4], %s5509
          %s5511 = sand.u32 %s145, 1
          %s5512 = smul.addr %s5511, 8
          %s5513 = scalar_lea.vmem [#allocation3], %s5512
          %5514 = dma.done %s5510, 128
        $region56: #{tpu_custom_call.1} parent=51 // pred_fallthru
          _
      $region52: #{tpu_custom_call.1} parent=5 // pred_fallthru
        _
    $region6: #{tpu_custom_call.1} parent=1 // loop_footer
      %s17 = sadd.s32 1, %s13
    $region7: #{tpu_custom_call.1} parent=1 // loop_footer_branch
      %12 = sbr.rel target = $region3
    $region8: #{tpu_custom_call.1} parent=1 // loop_exit
      _
    %5515 = vsyncpa [#allocation4], 1
    %s5516 = scalar_lea.sflag [#allocation4], 1
    %5517 = vsyncpa %s5516, 1

</llo_original>
